<compile_context>
chip_gen: v7x
topology: tpu7x:2x2x1
jax: 0.10.0
libtpu: 0.0.40
codegen_flags: <defaults>
</compile_context>

<pallas_src>
import jax
import jax.numpy as jnp
from jax.experimental import pallas as pl
from jax.experimental.pallas import tpu as pltpu  # noqa: F401  (TPU backend assumed)

# ---------------- model config (small synthetic shapes) ----------------
VOCAB = 100
HIDDEN = 64
NUM_HEADS = 2
HEAD_DIM = HIDDEN // NUM_HEADS
INTERMEDIATE = 128
NUM_LAYERS = 2
NUM_LABELS = 18
LN_EPS = 1e-5


# ---------------- pallas_call plumbing (single grid point, whole arrays in VMEM) ----------------
def _full_spec(shape):
  return pl.BlockSpec(shape, lambda: (0,) * len(shape))


def _pcall(kernel, inputs, out_shapes):
  in_specs = [_full_spec(x.shape) for x in inputs]
  out_specs = tuple(_full_spec(s.shape) for s in out_shapes)
  return pl.pallas_call(
      kernel, out_shape=tuple(out_shapes), in_specs=in_specs, out_specs=out_specs
  )(*inputs)


# ---------------- in-kernel helpers ----------------
def _ln(v, g, b):
  mu = jnp.mean(v, axis=-1, keepdims=True)
  var = jnp.mean((v - mu) ** 2, axis=-1, keepdims=True)
  return (v - mu) * jax.lax.rsqrt(var + LN_EPS) * g + b


# TODO(synk): PyTorch nn.GELU uses exact erf-GELU; the tanh approximation is used here to stay on
# primitives with guaranteed Mosaic lowering (exp/tanh). Synthetic weights make this immaterial.
def _gelu(x):
  return jax.nn.gelu(x, approximate=True)


# ---------------- the single fused kernel ----------------
def fused_model_kernel(emb_ref, mask_ref, labels_ref, score_ref,
                       eg_ref, eb_ref,
                       ln1g_ref, ln1b_ref, wqkv_ref, bqkv_ref, wo_ref, bo_ref,
                       ln2g_ref, ln2b_ref, w1_ref, b1_ref, w2_ref, b2_ref,
                       wd_ref, bd_ref, ng_ref, nb_ref, wc_ref, bc_ref, wr_ref, br_ref,
                       loss_ref, logits_ref, reg_ref):
  f32 = jnp.float32
  bf16 = jnp.bfloat16
  B, L, H = emb_ref.shape
  hd = H // NUM_HEADS
  scale = float(hd) ** -0.5

  # ---- embedding LayerNorm (fused; no separate kernel / HBM round trip) ----
  x = _ln(emb_ref[...], eg_ref[...], eb_ref[...])                    # (B, L, H) f32

  # ---- additive attention bias, broadcast hoisted ONCE (kept in f32) ----
  bias = (1.0 - mask_ref[...]) * -1e9                                # (B, L)
  bias_b1l = bias[:, None, :]                                        # (B, 1, L)

  # ---- encoder layers (statically unrolled; weights indexed on leading layer axis) ----
  for l in range(NUM_LAYERS):
    # --- self-attention (pre-norm), fused QKV matmul ---
    h = _ln(x, ln1g_ref[l], ln1b_ref[l]).reshape(B * L, H)
    qkv = jnp.dot(h.astype(bf16), wqkv_ref[l],
                  preferred_element_type=f32) + bqkv_ref[l]          # (B*L, 3H) f32

    attn = jnp.zeros((B * L, H), f32)
    for hix in range(NUM_HEADS):                                     # static unroll, no concat
      q = qkv[:, hix * hd:(hix + 1) * hd].reshape(B, L, hd)
      k = qkv[:, H + hix * hd:H + (hix + 1) * hd].reshape(B, L, hd)
      v = qkv[:, 2 * H + hix * hd:2 * H + (hix + 1) * hd].reshape(B, L, hd)

      s = jnp.einsum('bqd,bkd->bqk', q.astype(bf16), k.astype(bf16),
                     preferred_element_type=f32) * scale             # (B, L, L) f32
      s = s + bias_b1l
      s = s - jnp.max(s, axis=-1, keepdims=True)
      p = jnp.exp(s)
      p = p * pl.reciprocal(jnp.sum(p, axis=-1, keepdims=True), approx=True)

      ctx = jnp.einsum('bqk,bkd->bqd', p.astype(bf16), v.astype(bf16),
                       preferred_element_type=f32)                   # (B, L, hd)
      # project this head through its (hd, H) block of W_o and accumulate (no concatenate)
      attn = attn + jnp.dot(ctx.reshape(B * L, hd).astype(bf16), wo_ref[l, hix],
                            preferred_element_type=f32)
    attn = attn + bo_ref[l]
    x = x + attn.reshape(B, L, H)

    # --- MLP (pre-norm, GELU) ---
    h2 = _ln(x, ln2g_ref[l], ln2b_ref[l]).reshape(B * L, H)
    m = jnp.dot(h2.astype(bf16), w1_ref[l], preferred_element_type=f32) + b1_ref[l]
    m = _gelu(m)
    m = jnp.dot(m.astype(bf16), w2_ref[l], preferred_element_type=f32) + b2_ref[l]
    x = x + m.reshape(B, L, H)

  # ---- classification head (CLS pooling -> dense -> GELU -> LN -> classifier) ----
  pooled = x[:, 0, :]                                                # (B, H)
  hh = jnp.dot(pooled.astype(bf16), wd_ref[...], preferred_element_type=f32) + bd_ref[...]
  hh = _gelu(hh)
  hh = _ln(hh, ng_ref[...], nb_ref[...])
  logits = jnp.dot(hh.astype(bf16), wc_ref[...], preferred_element_type=f32) + bc_ref[...]
  reg = jnp.dot(logits.astype(bf16), wr_ref[...], preferred_element_type=f32) + br_ref[...]
  logits_ref[...] = logits                                           # (B, NUM_LABELS)
  reg_ref[...] = reg                                                 # (B, 1)

  # ---- loss = 0.5 * CrossEntropy + 0.5 * MSE (all f32, one-hot built in-kernel) ----
  zmax = jnp.max(logits, axis=-1, keepdims=True)
  z = logits - zmax
  lse = jnp.log(jnp.sum(jnp.exp(z), axis=-1, keepdims=True))
  logp = z - lse
  onehot = (jax.lax.broadcasted_iota(jnp.int32, (B, NUM_LABELS), 1)
            == labels_ref[...]).astype(f32)
  ce = -jnp.sum(onehot * logp) * (1.0 / B)
  diff = reg - score_ref[...]
  mse = jnp.sum(diff * diff) * (1.0 / B)
  loss_ref[...] = (0.5 * ce + 0.5 * mse).reshape(1, 1)


# ---------------- parameters (synthetic stand-in; matmul weights stored in bf16) ----------------
def init_params(key):
  f32, bf16 = jnp.float32, jnp.bfloat16

  def nrm(k, shape, dtype=f32):
    return (jax.random.normal(k, shape, dtype=f32) * 0.02).astype(dtype)

  ks = iter(jax.random.split(key, 16))
  return {
      'emb': nrm(next(ks), (VOCAB, HIDDEN)),
      'emb_ln_g': jnp.ones((1, HIDDEN), f32),
      'emb_ln_b': jnp.zeros((1, HIDDEN), f32),
      # stacked per-layer encoder weights (leading layer axis)
      'ln1_g': jnp.ones((NUM_LAYERS, 1, HIDDEN), f32),
      'ln1_b': jnp.zeros((NUM_LAYERS, 1, HIDDEN), f32),
      'wqkv': nrm(next(ks), (NUM_LAYERS, HIDDEN, 3 * HIDDEN), bf16),     # fused Q/K/V
      'bqkv': jnp.zeros((NUM_LAYERS, 1, 3 * HIDDEN), f32),
      'wo': nrm(next(ks), (NUM_LAYERS, NUM_HEADS, HEAD_DIM, HIDDEN), bf16),
      'bo': jnp.zeros((NUM_LAYERS, 1, HIDDEN), f32),
      'ln2_g': jnp.ones((NUM_LAYERS, 1, HIDDEN), f32),
      'ln2_b': jnp.zeros((NUM_LAYERS, 1, HIDDEN), f32),
      'w1': nrm(next(ks), (NUM_LAYERS, HIDDEN, INTERMEDIATE), bf16),
      'b1': jnp.zeros((NUM_LAYERS, 1, INTERMEDIATE), f32),
      'w2': nrm(next(ks), (NUM_LAYERS, INTERMEDIATE, HIDDEN), bf16),
      'b2': jnp.zeros((NUM_LAYERS, 1, HIDDEN), f32),
      # classification / regression heads
      'head_dense_w': nrm(next(ks), (HIDDEN, HIDDEN), bf16),
      'head_dense_b': jnp.zeros((1, HIDDEN), f32),
      'head_norm_g': jnp.ones((1, HIDDEN), f32),
      'head_norm_b': jnp.zeros((1, HIDDEN), f32),
      'cls_w': nrm(next(ks), (HIDDEN, NUM_LABELS), bf16),
      'cls_b': jnp.zeros((1, NUM_LABELS), f32),
      'reg_w': nrm(next(ks), (NUM_LABELS, 1), bf16),                    # regression_head = Linear(18, 1)
      'reg_b': jnp.zeros((1, 1), f32),
  }


# ---------------- forward (mirrors CustomModel.forward) ----------------
def custom_model_forward(params, input_ids, attention_mask, labels=None, score=None):
  B, L = input_ids.shape
  f32 = jnp.float32

  # glue: data-dependent embedding gather (everything downstream runs in the fused kernel)
  # TODO(synk): HF from_pretrained weight loading, tokenization and gradient_checkpointing_enable
  # have no Pallas equivalent; encoder weights are deterministic synthetic stand-ins.
  emb = params['emb'][input_ids].astype(f32)                          # (B, L, H)
  mask_f = attention_mask.astype(f32)                                 # (B, L)

  has_loss = labels is not None and score is not None
  lab = (labels if has_loss else jnp.zeros((B,), jnp.int32)).reshape(B, 1).astype(jnp.int32)
  sc = (score if has_loss else jnp.zeros((B,), f32)).reshape(B, 1).astype(f32)

  inputs = [
      emb, mask_f, lab, sc,
      params['emb_ln_g'], params['emb_ln_b'],
      params['ln1_g'], params['ln1_b'], params['wqkv'], params['bqkv'],
      params['wo'], params['bo'], params['ln2_g'], params['ln2_b'],
      params['w1'], params['b1'], params['w2'], params['b2'],
      params['head_dense_w'], params['head_dense_b'],
      params['head_norm_g'], params['head_norm_b'],
      params['cls_w'], params['cls_b'], params['reg_w'], params['reg_b'],
  ]
  out_shapes = (jax.ShapeDtypeStruct((1, 1), f32),
                jax.ShapeDtypeStruct((B, NUM_LABELS), f32),
                jax.ShapeDtypeStruct((B, 1), f32))

  loss11, logits, regression_output = _pcall(fused_model_kernel, inputs, out_shapes)

  if has_loss:
    return loss11[0, 0], logits, regression_output
  return logits, regression_output


if __name__ == "__main__":
  key = jax.random.PRNGKey(0)
  k_ids, k_lab, k_sc, k_par = jax.random.split(key, 4)

  B, L = 2, 8
  input_ids = jax.random.randint(k_ids, (B, L), 0, VOCAB, dtype=jnp.int32)
  attention_mask = jnp.ones((B, L), jnp.int32).at[1, L - 1].set(0)   # one padded position
  labels = jax.random.randint(k_lab, (B,), 0, NUM_LABELS, dtype=jnp.int32)
  score = jax.random.uniform(k_sc, (B,), dtype=jnp.float32)

  params = init_params(k_par)

  loss, logits, reg = custom_model_forward(params, input_ids, attention_mask, labels, score)
  jax.block_until_ready((loss, logits, reg))

  assert logits.shape == (B, NUM_LABELS) and reg.shape == (B, 1) and loss.shape == ()
  assert jnp.isfinite(loss)
  print("KERNEL_OK")
</pallas_src>

<mosaic_0001>
module attributes {stable_mosaic.version = 11 : i64} {
  func.func @fused_model_kernel(%arg0: memref<2x8x64xf32, #tpu.memory_space<vmem>>, %arg1: memref<2x8xf32, #tpu.memory_space<vmem>>, %arg2: memref<2x1xi32, #tpu.memory_space<vmem>>, %arg3: memref<2x1xf32, #tpu.memory_space<vmem>>, %arg4: memref<1x64xf32, #tpu.memory_space<vmem>>, %arg5: memref<1x64xf32, #tpu.memory_space<vmem>>, %arg6: memref<2x1x64xf32, #tpu.memory_space<vmem>>, %arg7: memref<2x1x64xf32, #tpu.memory_space<vmem>>, %arg8: memref<2x64x192xbf16, #tpu.memory_space<vmem>>, %arg9: memref<2x1x192xf32, #tpu.memory_space<vmem>>, %arg10: memref<2x2x32x64xbf16, #tpu.memory_space<vmem>>, %arg11: memref<2x1x64xf32, #tpu.memory_space<vmem>>, %arg12: memref<2x1x64xf32, #tpu.memory_space<vmem>>, %arg13: memref<2x1x64xf32, #tpu.memory_space<vmem>>, %arg14: memref<2x64x128xbf16, #tpu.memory_space<vmem>>, %arg15: memref<2x1x128xf32, #tpu.memory_space<vmem>>, %arg16: memref<2x128x64xbf16, #tpu.memory_space<vmem>>, %arg17: memref<2x1x64xf32, #tpu.memory_space<vmem>>, %arg18: memref<64x64xbf16, #tpu.memory_space<vmem>>, %arg19: memref<1x64xf32, #tpu.memory_space<vmem>>, %arg20: memref<1x64xf32, #tpu.memory_space<vmem>>, %arg21: memref<1x64xf32, #tpu.memory_space<vmem>>, %arg22: memref<64x18xbf16, #tpu.memory_space<vmem>>, %arg23: memref<1x18xf32, #tpu.memory_space<vmem>>, %arg24: memref<18x1xbf16, #tpu.memory_space<vmem>>, %arg25: memref<1x1xf32, #tpu.memory_space<vmem>>, %arg26: memref<1x1xf32, #tpu.memory_space<vmem>>, %arg27: memref<2x18xf32, #tpu.memory_space<vmem>>, %arg28: memref<2x1xf32, #tpu.memory_space<vmem>>) attributes {dimension_semantics = [], scalar_prefetch = 0 : i64, scratch_operands = 0 : i64, tpu.core_type = #tpu.core_type<tc>} {
    %c0 = arith.constant 0 : index
    %c0_0 = arith.constant 0 : index
    %c0_1 = arith.constant 0 : index
    %0 = vector.load %arg0[%c0, %c0_0, %c0_1] : memref<2x8x64xf32, #tpu.memory_space<vmem>>, vector<2x8x64xf32>
    %c0_2 = arith.constant 0 : index
    %c0_3 = arith.constant 0 : index
    %1 = vector.load %arg4[%c0_2, %c0_3] : memref<1x64xf32, #tpu.memory_space<vmem>>, vector<1x64xf32>
    %c0_4 = arith.constant 0 : index
    %c0_5 = arith.constant 0 : index
    %2 = vector.load %arg5[%c0_4, %c0_5] : memref<1x64xf32, #tpu.memory_space<vmem>>, vector<1x64xf32>
    %cst = arith.constant dense<0.000000e+00> : vector<2x8xf32>
    %3 = vector.multi_reduction <add>, %0, %cst [2] : vector<2x8x64xf32> to vector<2x8xf32>
    %4 = vector.shape_cast %3 : vector<2x8xf32> to vector<2x8x1xf32>
    %cst_6 = arith.constant 6.400000e+01 : f32
    %5 = vector.broadcast %cst_6 : f32 to vector<2x8x1xf32>
    %6 = arith.divf %4, %5 : vector<2x8x1xf32>
    %7 = vector.broadcast %6 : vector<2x8x1xf32> to vector<2x8x64xf32>
    %8 = arith.subf %0, %7 : vector<2x8x64xf32>
    %9 = arith.mulf %8, %8 : vector<2x8x64xf32>
    %cst_7 = arith.constant dense<0.000000e+00> : vector<2x8xf32>
    %10 = vector.multi_reduction <add>, %9, %cst_7 [2] : vector<2x8x64xf32> to vector<2x8xf32>
    %11 = vector.shape_cast %10 : vector<2x8xf32> to vector<2x8x1xf32>
    %cst_8 = arith.constant 6.400000e+01 : f32
    %12 = vector.broadcast %cst_8 : f32 to vector<2x8x1xf32>
    %13 = arith.divf %11, %12 : vector<2x8x1xf32>
    %14 = vector.broadcast %6 : vector<2x8x1xf32> to vector<2x8x64xf32>
    %15 = arith.subf %0, %14 : vector<2x8x64xf32>
    %cst_9 = arith.constant 9.99999974E-6 : f32
    %16 = vector.broadcast %cst_9 : f32 to vector<2x8x1xf32>
    %17 = arith.addf %13, %16 : vector<2x8x1xf32>
    %18 = math.rsqrt %17 : vector<2x8x1xf32>
    %19 = vector.broadcast %18 : vector<2x8x1xf32> to vector<2x8x64xf32>
    %20 = arith.mulf %15, %19 : vector<2x8x64xf32>
    %21 = vector.shape_cast %1 : vector<1x64xf32> to vector<1x1x64xf32>
    %22 = vector.broadcast %21 : vector<1x1x64xf32> to vector<2x8x64xf32>
    %23 = arith.mulf %20, %22 : vector<2x8x64xf32>
    %24 = vector.shape_cast %2 : vector<1x64xf32> to vector<1x1x64xf32>
    %25 = vector.broadcast %24 : vector<1x1x64xf32> to vector<2x8x64xf32>
    %26 = arith.addf %23, %25 : vector<2x8x64xf32>
    %c0_10 = arith.constant 0 : index
    %c0_11 = arith.constant 0 : index
    %27 = vector.load %arg1[%c0_10, %c0_11] : memref<2x8xf32, #tpu.memory_space<vmem>>, vector<2x8xf32>
    %cst_12 = arith.constant 1.000000e+00 : f32
    %28 = vector.broadcast %cst_12 : f32 to vector<2x8xf32>
    %29 = arith.subf %28, %27 : vector<2x8xf32>
    %cst_13 = arith.constant -1.000000e+09 : f32
    %30 = vector.broadcast %cst_13 : f32 to vector<2x8xf32>
    %31 = arith.mulf %29, %30 : vector<2x8xf32>
    %32 = vector.shape_cast %31 : vector<2x8xf32> to vector<2x1x8xf32>
    %c0_14 = arith.constant 0 : index
    %c0_15 = arith.constant 0 : index
    %c0_16 = arith.constant 0 : index
    %33 = vector.load %arg6[%c0_14, %c0_15, %c0_16] : memref<2x1x64xf32, #tpu.memory_space<vmem>>, vector<1x1x64xf32>
    %34 = vector.shape_cast %33 : vector<1x1x64xf32> to vector<1x64xf32>
    %c0_17 = arith.constant 0 : index
    %c0_18 = arith.constant 0 : index
    %c0_19 = arith.constant 0 : index
    %35 = vector.load %arg7[%c0_17, %c0_18, %c0_19] : memref<2x1x64xf32, #tpu.memory_space<vmem>>, vector<1x1x64xf32>
    %36 = vector.shape_cast %35 : vector<1x1x64xf32> to vector<1x64xf32>
    %cst_20 = arith.constant dense<0.000000e+00> : vector<2x8xf32>
    %37 = vector.multi_reduction <add>, %26, %cst_20 [2] : vector<2x8x64xf32> to vector<2x8xf32>
    %38 = vector.shape_cast %37 : vector<2x8xf32> to vector<2x8x1xf32>
    %cst_21 = arith.constant 6.400000e+01 : f32
    %39 = vector.broadcast %cst_21 : f32 to vector<2x8x1xf32>
    %40 = arith.divf %38, %39 : vector<2x8x1xf32>
    %41 = vector.broadcast %40 : vector<2x8x1xf32> to vector<2x8x64xf32>
    %42 = arith.subf %26, %41 : vector<2x8x64xf32>
    %43 = arith.mulf %42, %42 : vector<2x8x64xf32>
    %cst_22 = arith.constant dense<0.000000e+00> : vector<2x8xf32>
    %44 = vector.multi_reduction <add>, %43, %cst_22 [2] : vector<2x8x64xf32> to vector<2x8xf32>
    %45 = vector.shape_cast %44 : vector<2x8xf32> to vector<2x8x1xf32>
    %cst_23 = arith.constant 6.400000e+01 : f32
    %46 = vector.broadcast %cst_23 : f32 to vector<2x8x1xf32>
    %47 = arith.divf %45, %46 : vector<2x8x1xf32>
    %48 = vector.broadcast %40 : vector<2x8x1xf32> to vector<2x8x64xf32>
    %49 = arith.subf %26, %48 : vector<2x8x64xf32>
    %cst_24 = arith.constant 9.99999974E-6 : f32
    %50 = vector.broadcast %cst_24 : f32 to vector<2x8x1xf32>
    %51 = arith.addf %47, %50 : vector<2x8x1xf32>
    %52 = math.rsqrt %51 : vector<2x8x1xf32>
    %53 = vector.broadcast %52 : vector<2x8x1xf32> to vector<2x8x64xf32>
    %54 = arith.mulf %49, %53 : vector<2x8x64xf32>
    %55 = vector.shape_cast %34 : vector<1x64xf32> to vector<1x1x64xf32>
    %56 = vector.broadcast %55 : vector<1x1x64xf32> to vector<2x8x64xf32>
    %57 = arith.mulf %54, %56 : vector<2x8x64xf32>
    %58 = vector.shape_cast %36 : vector<1x64xf32> to vector<1x1x64xf32>
    %59 = vector.broadcast %58 : vector<1x1x64xf32> to vector<2x8x64xf32>
    %60 = arith.addf %57, %59 : vector<2x8x64xf32>
    %61 = vector.shape_cast %60 : vector<2x8x64xf32> to vector<16x64xf32>
    %62 = arith.truncf %61 : vector<16x64xf32> to vector<16x64xbf16>
    %c0_25 = arith.constant 0 : index
    %c0_26 = arith.constant 0 : index
    %c0_27 = arith.constant 0 : index
    %63 = vector.load %arg8[%c0_25, %c0_26, %c0_27] : memref<2x64x192xbf16, #tpu.memory_space<vmem>>, vector<1x64x192xbf16>
    %64 = vector.shape_cast %63 : vector<1x64x192xbf16> to vector<64x192xbf16>
    %cst_28 = arith.constant dense<0.000000e+00> : vector<16x192xf32>
    %65 = tpu.matmul %62, %64, %cst_28 {dimension_numbers = #tpu.dot_dimension_numbers<[1], [0], [0], [1], [0, 0, 1, 1], [], []>} : vector<16x64xbf16>, vector<64x192xbf16>, vector<16x192xf32> -> vector<16x192xf32>
    %c0_29 = arith.constant 0 : index
    %c0_30 = arith.constant 0 : index
    %c0_31 = arith.constant 0 : index
    %66 = vector.load %arg9[%c0_29, %c0_30, %c0_31] : memref<2x1x192xf32, #tpu.memory_space<vmem>>, vector<1x1x192xf32>
    %67 = vector.shape_cast %66 : vector<1x1x192xf32> to vector<1x192xf32>
    %68 = vector.broadcast %67 : vector<1x192xf32> to vector<16x192xf32>
    %69 = arith.addf %65, %68 : vector<16x192xf32>
    %cst_32 = arith.constant 0.000000e+00 : f32
    %70 = vector.broadcast %cst_32 : f32 to vector<16x64xf32>
    %71 = vector.extract_strided_slice %69 {offsets = [0, 0], sizes = [16, 32], strides = [1, 1]} : vector<16x192xf32> to vector<16x32xf32>
    %72 = vector.shape_cast %71 : vector<16x32xf32> to vector<2x8x32xf32>
    %73 = vector.extract_strided_slice %69 {offsets = [0, 64], sizes = [16, 32], strides = [1, 1]} : vector<16x192xf32> to vector<16x32xf32>
    %74 = vector.shape_cast %73 : vector<16x32xf32> to vector<2x8x32xf32>
    %75 = vector.extract_strided_slice %69 {offsets = [0, 128], sizes = [16, 32], strides = [1, 1]} : vector<16x192xf32> to vector<16x32xf32>
    %76 = vector.shape_cast %75 : vector<16x32xf32> to vector<2x8x32xf32>
    %77 = arith.truncf %72 : vector<2x8x32xf32> to vector<2x8x32xbf16>
    %78 = arith.truncf %74 : vector<2x8x32xf32> to vector<2x8x32xbf16>
    "tpu.trace_start"() <{level = 10 : i32, message = "bqd,bkd->bqk"}> : () -> ()
    %cst_33 = arith.constant dense<0.000000e+00> : vector<2x8x8xf32>
    %79 = tpu.matmul %77, %78, %cst_33 {dimension_numbers = #tpu.dot_dimension_numbers<[2], [2], [1], [1], [0, 0, 0, 1, 1, 1], [0], [0]>} : vector<2x8x32xbf16>, vector<2x8x32xbf16>, vector<2x8x8xf32> -> vector<2x8x8xf32>
    "tpu.trace_stop"() : () -> ()
    %cst_34 = arith.constant 0.176776692 : f32
    %80 = vector.broadcast %cst_34 : f32 to vector<2x8x8xf32>
    %81 = arith.mulf %79, %80 : vector<2x8x8xf32>
    %82 = vector.broadcast %32 : vector<2x1x8xf32> to vector<2x8x8xf32>
    %83 = arith.addf %81, %82 : vector<2x8x8xf32>
    %cst_35 = arith.constant dense<0xFF800000> : vector<2x8xf32>
    %84 = vector.multi_reduction <maximumf>, %83, %cst_35 [2] : vector<2x8x8xf32> to vector<2x8xf32>
    %85 = vector.shape_cast %84 : vector<2x8xf32> to vector<2x8x1xf32>
    %86 = vector.broadcast %85 : vector<2x8x1xf32> to vector<2x8x8xf32>
    %87 = arith.subf %83, %86 : vector<2x8x8xf32>
    %88 = math.exp %87 : vector<2x8x8xf32>
    %cst_36 = arith.constant dense<0.000000e+00> : vector<2x8xf32>
    %89 = vector.multi_reduction <add>, %88, %cst_36 [2] : vector<2x8x8xf32> to vector<2x8xf32>
    %90 = vector.shape_cast %89 : vector<2x8xf32> to vector<2x8x1xf32>
    %91 = tpu.reciprocal %90 {approx = true} : vector<2x8x1xf32> -> vector<2x8x1xf32>
    %92 = vector.broadcast %91 : vector<2x8x1xf32> to vector<2x8x8xf32>
    %93 = arith.mulf %88, %92 : vector<2x8x8xf32>
    %94 = arith.truncf %93 : vector<2x8x8xf32> to vector<2x8x8xbf16>
    %95 = arith.truncf %76 : vector<2x8x32xf32> to vector<2x8x32xbf16>
    "tpu.trace_start"() <{level = 10 : i32, message = "bqk,bkd->bqd"}> : () -> ()
    %cst_37 = arith.constant dense<0.000000e+00> : vector<2x8x32xf32>
    %96 = tpu.matmul %94, %95, %cst_37 {dimension_numbers = #tpu.dot_dimension_numbers<[2], [1], [1], [2], [0, 0, 0, 1, 1, 2], [0], [0]>} : vector<2x8x8xbf16>, vector<2x8x32xbf16>, vector<2x8x32xf32> -> vector<2x8x32xf32>
    "tpu.trace_stop"() : () -> ()
    %97 = vector.shape_cast %96 : vector<2x8x32xf32> to vector<16x32xf32>
    %98 = arith.truncf %97 : vector<16x32xf32> to vector<16x32xbf16>
    %c0_38 = arith.constant 0 : index
    %c0_39 = arith.constant 0 : index
    %c0_40 = arith.constant 0 : index
    %c0_41 = arith.constant 0 : index
    %99 = vector.load %arg10[%c0_38, %c0_39, %c0_40, %c0_41] : memref<2x2x32x64xbf16, #tpu.memory_space<vmem>>, vector<1x1x32x64xbf16>
    %100 = vector.shape_cast %99 : vector<1x1x32x64xbf16> to vector<32x64xbf16>
    %cst_42 = arith.constant dense<0.000000e+00> : vector<16x64xf32>
    %101 = tpu.matmul %98, %100, %cst_42 {dimension_numbers = #tpu.dot_dimension_numbers<[1], [0], [0], [1], [0, 0, 1, 1], [], []>} : vector<16x32xbf16>, vector<32x64xbf16>, vector<16x64xf32> -> vector<16x64xf32>
    %102 = arith.addf %70, %101 : vector<16x64xf32>
    %103 = vector.extract_strided_slice %69 {offsets = [0, 32], sizes = [16, 32], strides = [1, 1]} : vector<16x192xf32> to vector<16x32xf32>
    %104 = vector.shape_cast %103 : vector<16x32xf32> to vector<2x8x32xf32>
    %105 = vector.extract_strided_slice %69 {offsets = [0, 96], sizes = [16, 32], strides = [1, 1]} : vector<16x192xf32> to vector<16x32xf32>
    %106 = vector.shape_cast %105 : vector<16x32xf32> to vector<2x8x32xf32>
    %107 = vector.extract_strided_slice %69 {offsets = [0, 160], sizes = [16, 32], strides = [1, 1]} : vector<16x192xf32> to vector<16x32xf32>
    %108 = vector.shape_cast %107 : vector<16x32xf32> to vector<2x8x32xf32>
    %109 = arith.truncf %104 : vector<2x8x32xf32> to vector<2x8x32xbf16>
    %110 = arith.truncf %106 : vector<2x8x32xf32> to vector<2x8x32xbf16>
    "tpu.trace_start"() <{level = 10 : i32, message = "bqd,bkd->bqk"}> : () -> ()
    %cst_43 = arith.constant dense<0.000000e+00> : vector<2x8x8xf32>
    %111 = tpu.matmul %109, %110, %cst_43 {dimension_numbers = #tpu.dot_dimension_numbers<[2], [2], [1], [1], [0, 0, 0, 1, 1, 1], [0], [0]>} : vector<2x8x32xbf16>, vector<2x8x32xbf16>, vector<2x8x8xf32> -> vector<2x8x8xf32>
    "tpu.trace_stop"() : () -> ()
    %cst_44 = arith.constant 0.176776692 : f32
    %112 = vector.broadcast %cst_44 : f32 to vector<2x8x8xf32>
    %113 = arith.mulf %111, %112 : vector<2x8x8xf32>
    %114 = vector.broadcast %32 : vector<2x1x8xf32> to vector<2x8x8xf32>
    %115 = arith.addf %113, %114 : vector<2x8x8xf32>
    %cst_45 = arith.constant dense<0xFF800000> : vector<2x8xf32>
    %116 = vector.multi_reduction <maximumf>, %115, %cst_45 [2] : vector<2x8x8xf32> to vector<2x8xf32>
    %117 = vector.shape_cast %116 : vector<2x8xf32> to vector<2x8x1xf32>
    %118 = vector.broadcast %117 : vector<2x8x1xf32> to vector<2x8x8xf32>
    %119 = arith.subf %115, %118 : vector<2x8x8xf32>
    %120 = math.exp %119 : vector<2x8x8xf32>
    %cst_46 = arith.constant dense<0.000000e+00> : vector<2x8xf32>
    %121 = vector.multi_reduction <add>, %120, %cst_46 [2] : vector<2x8x8xf32> to vector<2x8xf32>
    %122 = vector.shape_cast %121 : vector<2x8xf32> to vector<2x8x1xf32>
    %123 = tpu.reciprocal %122 {approx = true} : vector<2x8x1xf32> -> vector<2x8x1xf32>
    %124 = vector.broadcast %123 : vector<2x8x1xf32> to vector<2x8x8xf32>
    %125 = arith.mulf %120, %124 : vector<2x8x8xf32>
    %126 = arith.truncf %125 : vector<2x8x8xf32> to vector<2x8x8xbf16>
    %127 = arith.truncf %108 : vector<2x8x32xf32> to vector<2x8x32xbf16>
    "tpu.trace_start"() <{level = 10 : i32, message = "bqk,bkd->bqd"}> : () -> ()
    %cst_47 = arith.constant dense<0.000000e+00> : vector<2x8x32xf32>
    %128 = tpu.matmul %126, %127, %cst_47 {dimension_numbers = #tpu.dot_dimension_numbers<[2], [1], [1], [2], [0, 0, 0, 1, 1, 2], [0], [0]>} : vector<2x8x8xbf16>, vector<2x8x32xbf16>, vector<2x8x32xf32> -> vector<2x8x32xf32>
    "tpu.trace_stop"() : () -> ()
    %129 = vector.shape_cast %128 : vector<2x8x32xf32> to vector<16x32xf32>
    %130 = arith.truncf %129 : vector<16x32xf32> to vector<16x32xbf16>
    %c0_48 = arith.constant 0 : index
    %c1 = arith.constant 1 : index
    %c0_49 = arith.constant 0 : index
    %c0_50 = arith.constant 0 : index
    %131 = vector.load %arg10[%c0_48, %c1, %c0_49, %c0_50] : memref<2x2x32x64xbf16, #tpu.memory_space<vmem>>, vector<1x1x32x64xbf16>
    %132 = vector.shape_cast %131 : vector<1x1x32x64xbf16> to vector<32x64xbf16>
    %cst_51 = arith.constant dense<0.000000e+00> : vector<16x64xf32>
    %133 = tpu.matmul %130, %132, %cst_51 {dimension_numbers = #tpu.dot_dimension_numbers<[1], [0], [0], [1], [0, 0, 1, 1], [], []>} : vector<16x32xbf16>, vector<32x64xbf16>, vector<16x64xf32> -> vector<16x64xf32>
    %134 = arith.addf %102, %133 : vector<16x64xf32>
    %c0_52 = arith.constant 0 : index
    %c0_53 = arith.constant 0 : index
    %c0_54 = arith.constant 0 : index
    %135 = vector.load %arg11[%c0_52, %c0_53, %c0_54] : memref<2x1x64xf32, #tpu.memory_space<vmem>>, vector<1x1x64xf32>
    %136 = vector.shape_cast %135 : vector<1x1x64xf32> to vector<1x64xf32>
    %137 = vector.broadcast %136 : vector<1x64xf32> to vector<16x64xf32>
    %138 = arith.addf %134, %137 : vector<16x64xf32>
    %139 = vector.shape_cast %138 : vector<16x64xf32> to vector<2x8x64xf32>
    %140 = arith.addf %26, %139 : vector<2x8x64xf32>
    %c0_55 = arith.constant 0 : index
    %c0_56 = arith.constant 0 : index
    %c0_57 = arith.constant 0 : index
    %141 = vector.load %arg12[%c0_55, %c0_56, %c0_57] : memref<2x1x64xf32, #tpu.memory_space<vmem>>, vector<1x1x64xf32>
    %142 = vector.shape_cast %141 : vector<1x1x64xf32> to vector<1x64xf32>
    %c0_58 = arith.constant 0 : index
    %c0_59 = arith.constant 0 : index
    %c0_60 = arith.constant 0 : index
    %143 = vector.load %arg13[%c0_58, %c0_59, %c0_60] : memref<2x1x64xf32, #tpu.memory_space<vmem>>, vector<1x1x64xf32>
    %144 = vector.shape_cast %143 : vector<1x1x64xf32> to vector<1x64xf32>
    %cst_61 = arith.constant dense<0.000000e+00> : vector<2x8xf32>
    %145 = vector.multi_reduction <add>, %140, %cst_61 [2] : vector<2x8x64xf32> to vector<2x8xf32>
    %146 = vector.shape_cast %145 : vector<2x8xf32> to vector<2x8x1xf32>
    %cst_62 = arith.constant 6.400000e+01 : f32
    %147 = vector.broadcast %cst_62 : f32 to vector<2x8x1xf32>
    %148 = arith.divf %146, %147 : vector<2x8x1xf32>
    %149 = vector.broadcast %148 : vector<2x8x1xf32> to vector<2x8x64xf32>
    %150 = arith.subf %140, %149 : vector<2x8x64xf32>
    %151 = arith.mulf %150, %150 : vector<2x8x64xf32>
    %cst_63 = arith.constant dense<0.000000e+00> : vector<2x8xf32>
    %152 = vector.multi_reduction <add>, %151, %cst_63 [2] : vector<2x8x64xf32> to vector<2x8xf32>
    %153 = vector.shape_cast %152 : vector<2x8xf32> to vector<2x8x1xf32>
    %cst_64 = arith.constant 6.400000e+01 : f32
    %154 = vector.broadcast %cst_64 : f32 to vector<2x8x1xf32>
    %155 = arith.divf %153, %154 : vector<2x8x1xf32>
    %156 = vector.broadcast %148 : vector<2x8x1xf32> to vector<2x8x64xf32>
    %157 = arith.subf %140, %156 : vector<2x8x64xf32>
    %cst_65 = arith.constant 9.99999974E-6 : f32
    %158 = vector.broadcast %cst_65 : f32 to vector<2x8x1xf32>
    %159 = arith.addf %155, %158 : vector<2x8x1xf32>
    %160 = math.rsqrt %159 : vector<2x8x1xf32>
    %161 = vector.broadcast %160 : vector<2x8x1xf32> to vector<2x8x64xf32>
    %162 = arith.mulf %157, %161 : vector<2x8x64xf32>
    %163 = vector.shape_cast %142 : vector<1x64xf32> to vector<1x1x64xf32>
    %164 = vector.broadcast %163 : vector<1x1x64xf32> to vector<2x8x64xf32>
    %165 = arith.mulf %162, %164 : vector<2x8x64xf32>
    %166 = vector.shape_cast %144 : vector<1x64xf32> to vector<1x1x64xf32>
    %167 = vector.broadcast %166 : vector<1x1x64xf32> to vector<2x8x64xf32>
    %168 = arith.addf %165, %167 : vector<2x8x64xf32>
    %169 = vector.shape_cast %168 : vector<2x8x64xf32> to vector<16x64xf32>
    %170 = arith.truncf %169 : vector<16x64xf32> to vector<16x64xbf16>
    %c0_66 = arith.constant 0 : index
    %c0_67 = arith.constant 0 : index
    %c0_68 = arith.constant 0 : index
    %171 = vector.load %arg14[%c0_66, %c0_67, %c0_68] : memref<2x64x128xbf16, #tpu.memory_space<vmem>>, vector<1x64x128xbf16>
    %172 = vector.shape_cast %171 : vector<1x64x128xbf16> to vector<64x128xbf16>
    %cst_69 = arith.constant dense<0.000000e+00> : vector<16x128xf32>
    %173 = tpu.matmul %170, %172, %cst_69 {dimension_numbers = #tpu.dot_dimension_numbers<[1], [0], [0], [1], [0, 0, 1, 1], [], []>} : vector<16x64xbf16>, vector<64x128xbf16>, vector<16x128xf32> -> vector<16x128xf32>
    %c0_70 = arith.constant 0 : index
    %c0_71 = arith.constant 0 : index
    %c0_72 = arith.constant 0 : index
    %174 = vector.load %arg15[%c0_70, %c0_71, %c0_72] : memref<2x1x128xf32, #tpu.memory_space<vmem>>, vector<1x1x128xf32>
    %175 = vector.shape_cast %174 : vector<1x1x128xf32> to vector<1x128xf32>
    %176 = vector.broadcast %175 : vector<1x128xf32> to vector<16x128xf32>
    %177 = arith.addf %173, %176 : vector<16x128xf32>
    %178 = arith.mulf %177, %177 : vector<16x128xf32>
    %179 = arith.mulf %177, %178 : vector<16x128xf32>
    %cst_73 = arith.constant 4.471500e-02 : f32
    %180 = vector.broadcast %cst_73 : f32 to vector<16x128xf32>
    %181 = arith.mulf %180, %179 : vector<16x128xf32>
    %182 = arith.addf %177, %181 : vector<16x128xf32>
    %cst_74 = arith.constant 0.797884583 : f32
    %183 = vector.broadcast %cst_74 : f32 to vector<16x128xf32>
    %184 = arith.mulf %183, %182 : vector<16x128xf32>
    %185 = math.tanh %184 : vector<16x128xf32>
    %cst_75 = arith.constant 1.000000e+00 : f32
    %186 = vector.broadcast %cst_75 : f32 to vector<16x128xf32>
    %187 = arith.addf %186, %185 : vector<16x128xf32>
    %cst_76 = arith.constant 5.000000e-01 : f32
    %188 = vector.broadcast %cst_76 : f32 to vector<16x128xf32>
    %189 = arith.mulf %188, %187 : vector<16x128xf32>
    %190 = arith.mulf %177, %189 : vector<16x128xf32>
    %191 = arith.truncf %190 : vector<16x128xf32> to vector<16x128xbf16>
    %c0_77 = arith.constant 0 : index
    %c0_78 = arith.constant 0 : index
    %c0_79 = arith.constant 0 : index
    %192 = vector.load %arg16[%c0_77, %c0_78, %c0_79] : memref<2x128x64xbf16, #tpu.memory_space<vmem>>, vector<1x128x64xbf16>
    %193 = vector.shape_cast %192 : vector<1x128x64xbf16> to vector<128x64xbf16>
    %cst_80 = arith.constant dense<0.000000e+00> : vector<16x64xf32>
    %194 = tpu.matmul %191, %193, %cst_80 {dimension_numbers = #tpu.dot_dimension_numbers<[1], [0], [0], [1], [0, 0, 1, 1], [], []>} : vector<16x128xbf16>, vector<128x64xbf16>, vector<16x64xf32> -> vector<16x64xf32>
    %c0_81 = arith.constant 0 : index
    %c0_82 = arith.constant 0 : index
    %c0_83 = arith.constant 0 : index
    %195 = vector.load %arg17[%c0_81, %c0_82, %c0_83] : memref<2x1x64xf32, #tpu.memory_space<vmem>>, vector<1x1x64xf32>
    %196 = vector.shape_cast %195 : vector<1x1x64xf32> to vector<1x64xf32>
    %197 = vector.broadcast %196 : vector<1x64xf32> to vector<16x64xf32>
    %198 = arith.addf %194, %197 : vector<16x64xf32>
    %199 = vector.shape_cast %198 : vector<16x64xf32> to vector<2x8x64xf32>
    %200 = arith.addf %140, %199 : vector<2x8x64xf32>
    %c1_84 = arith.constant 1 : index
    %c0_85 = arith.constant 0 : index
    %c0_86 = arith.constant 0 : index
    %201 = vector.load %arg6[%c1_84, %c0_85, %c0_86] : memref<2x1x64xf32, #tpu.memory_space<vmem>>, vector<1x1x64xf32>
    %202 = vector.shape_cast %201 : vector<1x1x64xf32> to vector<1x64xf32>
    %c1_87 = arith.constant 1 : index
    %c0_88 = arith.constant 0 : index
    %c0_89 = arith.constant 0 : index
    %203 = vector.load %arg7[%c1_87, %c0_88, %c0_89] : memref<2x1x64xf32, #tpu.memory_space<vmem>>, vector<1x1x64xf32>
    %204 = vector.shape_cast %203 : vector<1x1x64xf32> to vector<1x64xf32>
    %cst_90 = arith.constant dense<0.000000e+00> : vector<2x8xf32>
    %205 = vector.multi_reduction <add>, %200, %cst_90 [2] : vector<2x8x64xf32> to vector<2x8xf32>
    %206 = vector.shape_cast %205 : vector<2x8xf32> to vector<2x8x1xf32>
    %cst_91 = arith.constant 6.400000e+01 : f32
    %207 = vector.broadcast %cst_91 : f32 to vector<2x8x1xf32>
    %208 = arith.divf %206, %207 : vector<2x8x1xf32>
    %209 = vector.broadcast %208 : vector<2x8x1xf32> to vector<2x8x64xf32>
    %210 = arith.subf %200, %209 : vector<2x8x64xf32>
    %211 = arith.mulf %210, %210 : vector<2x8x64xf32>
    %cst_92 = arith.constant dense<0.000000e+00> : vector<2x8xf32>
    %212 = vector.multi_reduction <add>, %211, %cst_92 [2] : vector<2x8x64xf32> to vector<2x8xf32>
    %213 = vector.shape_cast %212 : vector<2x8xf32> to vector<2x8x1xf32>
    %cst_93 = arith.constant 6.400000e+01 : f32
    %214 = vector.broadcast %cst_93 : f32 to vector<2x8x1xf32>
    %215 = arith.divf %213, %214 : vector<2x8x1xf32>
    %216 = vector.broadcast %208 : vector<2x8x1xf32> to vector<2x8x64xf32>
    %217 = arith.subf %200, %216 : vector<2x8x64xf32>
    %cst_94 = arith.constant 9.99999974E-6 : f32
    %218 = vector.broadcast %cst_94 : f32 to vector<2x8x1xf32>
    %219 = arith.addf %215, %218 : vector<2x8x1xf32>
    %220 = math.rsqrt %219 : vector<2x8x1xf32>
    %221 = vector.broadcast %220 : vector<2x8x1xf32> to vector<2x8x64xf32>
    %222 = arith.mulf %217, %221 : vector<2x8x64xf32>
    %223 = vector.shape_cast %202 : vector<1x64xf32> to vector<1x1x64xf32>
    %224 = vector.broadcast %223 : vector<1x1x64xf32> to vector<2x8x64xf32>
    %225 = arith.mulf %222, %224 : vector<2x8x64xf32>
    %226 = vector.shape_cast %204 : vector<1x64xf32> to vector<1x1x64xf32>
    %227 = vector.broadcast %226 : vector<1x1x64xf32> to vector<2x8x64xf32>
    %228 = arith.addf %225, %227 : vector<2x8x64xf32>
    %229 = vector.shape_cast %228 : vector<2x8x64xf32> to vector<16x64xf32>
    %230 = arith.truncf %229 : vector<16x64xf32> to vector<16x64xbf16>
    %c1_95 = arith.constant 1 : index
    %c0_96 = arith.constant 0 : index
    %c0_97 = arith.constant 0 : index
    %231 = vector.load %arg8[%c1_95, %c0_96, %c0_97] : memref<2x64x192xbf16, #tpu.memory_space<vmem>>, vector<1x64x192xbf16>
    %232 = vector.shape_cast %231 : vector<1x64x192xbf16> to vector<64x192xbf16>
    %cst_98 = arith.constant dense<0.000000e+00> : vector<16x192xf32>
    %233 = tpu.matmul %230, %232, %cst_98 {dimension_numbers = #tpu.dot_dimension_numbers<[1], [0], [0], [1], [0, 0, 1, 1], [], []>} : vector<16x64xbf16>, vector<64x192xbf16>, vector<16x192xf32> -> vector<16x192xf32>
    %c1_99 = arith.constant 1 : index
    %c0_100 = arith.constant 0 : index
    %c0_101 = arith.constant 0 : index
    %234 = vector.load %arg9[%c1_99, %c0_100, %c0_101] : memref<2x1x192xf32, #tpu.memory_space<vmem>>, vector<1x1x192xf32>
    %235 = vector.shape_cast %234 : vector<1x1x192xf32> to vector<1x192xf32>
    %236 = vector.broadcast %235 : vector<1x192xf32> to vector<16x192xf32>
    %237 = arith.addf %233, %236 : vector<16x192xf32>
    %cst_102 = arith.constant 0.000000e+00 : f32
    %238 = vector.broadcast %cst_102 : f32 to vector<16x64xf32>
    %239 = vector.extract_strided_slice %237 {offsets = [0, 0], sizes = [16, 32], strides = [1, 1]} : vector<16x192xf32> to vector<16x32xf32>
    %240 = vector.shape_cast %239 : vector<16x32xf32> to vector<2x8x32xf32>
    %241 = vector.extract_strided_slice %237 {offsets = [0, 64], sizes = [16, 32], strides = [1, 1]} : vector<16x192xf32> to vector<16x32xf32>
    %242 = vector.shape_cast %241 : vector<16x32xf32> to vector<2x8x32xf32>
    %243 = vector.extract_strided_slice %237 {offsets = [0, 128], sizes = [16, 32], strides = [1, 1]} : vector<16x192xf32> to vector<16x32xf32>
    %244 = vector.shape_cast %243 : vector<16x32xf32> to vector<2x8x32xf32>
    %245 = arith.truncf %240 : vector<2x8x32xf32> to vector<2x8x32xbf16>
    %246 = arith.truncf %242 : vector<2x8x32xf32> to vector<2x8x32xbf16>
    "tpu.trace_start"() <{level = 10 : i32, message = "bqd,bkd->bqk"}> : () -> ()
    %cst_103 = arith.constant dense<0.000000e+00> : vector<2x8x8xf32>
    %247 = tpu.matmul %245, %246, %cst_103 {dimension_numbers = #tpu.dot_dimension_numbers<[2], [2], [1], [1], [0, 0, 0, 1, 1, 1], [0], [0]>} : vector<2x8x32xbf16>, vector<2x8x32xbf16>, vector<2x8x8xf32> -> vector<2x8x8xf32>
    "tpu.trace_stop"() : () -> ()
    %cst_104 = arith.constant 0.176776692 : f32
    %248 = vector.broadcast %cst_104 : f32 to vector<2x8x8xf32>
    %249 = arith.mulf %247, %248 : vector<2x8x8xf32>
    %250 = vector.broadcast %32 : vector<2x1x8xf32> to vector<2x8x8xf32>
    %251 = arith.addf %249, %250 : vector<2x8x8xf32>
    %cst_105 = arith.constant dense<0xFF800000> : vector<2x8xf32>
    %252 = vector.multi_reduction <maximumf>, %251, %cst_105 [2] : vector<2x8x8xf32> to vector<2x8xf32>
    %253 = vector.shape_cast %252 : vector<2x8xf32> to vector<2x8x1xf32>
    %254 = vector.broadcast %253 : vector<2x8x1xf32> to vector<2x8x8xf32>
    %255 = arith.subf %251, %254 : vector<2x8x8xf32>
    %256 = math.exp %255 : vector<2x8x8xf32>
    %cst_106 = arith.constant dense<0.000000e+00> : vector<2x8xf32>
    %257 = vector.multi_reduction <add>, %256, %cst_106 [2] : vector<2x8x8xf32> to vector<2x8xf32>
    %258 = vector.shape_cast %257 : vector<2x8xf32> to vector<2x8x1xf32>
    %259 = tpu.reciprocal %258 {approx = true} : vector<2x8x1xf32> -> vector<2x8x1xf32>
    %260 = vector.broadcast %259 : vector<2x8x1xf32> to vector<2x8x8xf32>
    %261 = arith.mulf %256, %260 : vector<2x8x8xf32>
    %262 = arith.truncf %261 : vector<2x8x8xf32> to vector<2x8x8xbf16>
    %263 = arith.truncf %244 : vector<2x8x32xf32> to vector<2x8x32xbf16>
    "tpu.trace_start"() <{level = 10 : i32, message = "bqk,bkd->bqd"}> : () -> ()
    %cst_107 = arith.constant dense<0.000000e+00> : vector<2x8x32xf32>
    %264 = tpu.matmul %262, %263, %cst_107 {dimension_numbers = #tpu.dot_dimension_numbers<[2], [1], [1], [2], [0, 0, 0, 1, 1, 2], [0], [0]>} : vector<2x8x8xbf16>, vector<2x8x32xbf16>, vector<2x8x32xf32> -> vector<2x8x32xf32>
    "tpu.trace_stop"() : () -> ()
    %265 = vector.shape_cast %264 : vector<2x8x32xf32> to vector<16x32xf32>
    %266 = arith.truncf %265 : vector<16x32xf32> to vector<16x32xbf16>
    %c1_108 = arith.constant 1 : index
    %c0_109 = arith.constant 0 : index
    %c0_110 = arith.constant 0 : index
    %c0_111 = arith.constant 0 : index
    %267 = vector.load %arg10[%c1_108, %c0_109, %c0_110, %c0_111] : memref<2x2x32x64xbf16, #tpu.memory_space<vmem>>, vector<1x1x32x64xbf16>
    %268 = vector.shape_cast %267 : vector<1x1x32x64xbf16> to vector<32x64xbf16>
    %cst_112 = arith.constant dense<0.000000e+00> : vector<16x64xf32>
    %269 = tpu.matmul %266, %268, %cst_112 {dimension_numbers = #tpu.dot_dimension_numbers<[1], [0], [0], [1], [0, 0, 1, 1], [], []>} : vector<16x32xbf16>, vector<32x64xbf16>, vector<16x64xf32> -> vector<16x64xf32>
    %270 = arith.addf %238, %269 : vector<16x64xf32>
    %271 = vector.extract_strided_slice %237 {offsets = [0, 32], sizes = [16, 32], strides = [1, 1]} : vector<16x192xf32> to vector<16x32xf32>
    %272 = vector.shape_cast %271 : vector<16x32xf32> to vector<2x8x32xf32>
    %273 = vector.extract_strided_slice %237 {offsets = [0, 96], sizes = [16, 32], strides = [1, 1]} : vector<16x192xf32> to vector<16x32xf32>
    %274 = vector.shape_cast %273 : vector<16x32xf32> to vector<2x8x32xf32>
    %275 = vector.extract_strided_slice %237 {offsets = [0, 160], sizes = [16, 32], strides = [1, 1]} : vector<16x192xf32> to vector<16x32xf32>
    %276 = vector.shape_cast %275 : vector<16x32xf32> to vector<2x8x32xf32>
    %277 = arith.truncf %272 : vector<2x8x32xf32> to vector<2x8x32xbf16>
    %278 = arith.truncf %274 : vector<2x8x32xf32> to vector<2x8x32xbf16>
    "tpu.trace_start"() <{level = 10 : i32, message = "bqd,bkd->bqk"}> : () -> ()
    %cst_113 = arith.constant dense<0.000000e+00> : vector<2x8x8xf32>
    %279 = tpu.matmul %277, %278, %cst_113 {dimension_numbers = #tpu.dot_dimension_numbers<[2], [2], [1], [1], [0, 0, 0, 1, 1, 1], [0], [0]>} : vector<2x8x32xbf16>, vector<2x8x32xbf16>, vector<2x8x8xf32> -> vector<2x8x8xf32>
    "tpu.trace_stop"() : () -> ()
    %cst_114 = arith.constant 0.176776692 : f32
    %280 = vector.broadcast %cst_114 : f32 to vector<2x8x8xf32>
    %281 = arith.mulf %279, %280 : vector<2x8x8xf32>
    %282 = vector.broadcast %32 : vector<2x1x8xf32> to vector<2x8x8xf32>
    %283 = arith.addf %281, %282 : vector<2x8x8xf32>
    %cst_115 = arith.constant dense<0xFF800000> : vector<2x8xf32>
    %284 = vector.multi_reduction <maximumf>, %283, %cst_115 [2] : vector<2x8x8xf32> to vector<2x8xf32>
    %285 = vector.shape_cast %284 : vector<2x8xf32> to vector<2x8x1xf32>
    %286 = vector.broadcast %285 : vector<2x8x1xf32> to vector<2x8x8xf32>
    %287 = arith.subf %283, %286 : vector<2x8x8xf32>
    %288 = math.exp %287 : vector<2x8x8xf32>
    %cst_116 = arith.constant dense<0.000000e+00> : vector<2x8xf32>
    %289 = vector.multi_reduction <add>, %288, %cst_116 [2] : vector<2x8x8xf32> to vector<2x8xf32>
    %290 = vector.shape_cast %289 : vector<2x8xf32> to vector<2x8x1xf32>
    %291 = tpu.reciprocal %290 {approx = true} : vector<2x8x1xf32> -> vector<2x8x1xf32>
    %292 = vector.broadcast %291 : vector<2x8x1xf32> to vector<2x8x8xf32>
    %293 = arith.mulf %288, %292 : vector<2x8x8xf32>
    %294 = arith.truncf %293 : vector<2x8x8xf32> to vector<2x8x8xbf16>
    %295 = arith.truncf %276 : vector<2x8x32xf32> to vector<2x8x32xbf16>
    "tpu.trace_start"() <{level = 10 : i32, message = "bqk,bkd->bqd"}> : () -> ()
    %cst_117 = arith.constant dense<0.000000e+00> : vector<2x8x32xf32>
    %296 = tpu.matmul %294, %295, %cst_117 {dimension_numbers = #tpu.dot_dimension_numbers<[2], [1], [1], [2], [0, 0, 0, 1, 1, 2], [0], [0]>} : vector<2x8x8xbf16>, vector<2x8x32xbf16>, vector<2x8x32xf32> -> vector<2x8x32xf32>
    "tpu.trace_stop"() : () -> ()
    %297 = vector.shape_cast %296 : vector<2x8x32xf32> to vector<16x32xf32>
    %298 = arith.truncf %297 : vector<16x32xf32> to vector<16x32xbf16>
    %c1_118 = arith.constant 1 : index
    %c1_119 = arith.constant 1 : index
    %c0_120 = arith.constant 0 : index
    %c0_121 = arith.constant 0 : index
    %299 = vector.load %arg10[%c1_118, %c1_119, %c0_120, %c0_121] : memref<2x2x32x64xbf16, #tpu.memory_space<vmem>>, vector<1x1x32x64xbf16>
    %300 = vector.shape_cast %299 : vector<1x1x32x64xbf16> to vector<32x64xbf16>
    %cst_122 = arith.constant dense<0.000000e+00> : vector<16x64xf32>
    %301 = tpu.matmul %298, %300, %cst_122 {dimension_numbers = #tpu.dot_dimension_numbers<[1], [0], [0], [1], [0, 0, 1, 1], [], []>} : vector<16x32xbf16>, vector<32x64xbf16>, vector<16x64xf32> -> vector<16x64xf32>
    %302 = arith.addf %270, %301 : vector<16x64xf32>
    %c1_123 = arith.constant 1 : index
    %c0_124 = arith.constant 0 : index
    %c0_125 = arith.constant 0 : index
    %303 = vector.load %arg11[%c1_123, %c0_124, %c0_125] : memref<2x1x64xf32, #tpu.memory_space<vmem>>, vector<1x1x64xf32>
    %304 = vector.shape_cast %303 : vector<1x1x64xf32> to vector<1x64xf32>
    %305 = vector.broadcast %304 : vector<1x64xf32> to vector<16x64xf32>
    %306 = arith.addf %302, %305 : vector<16x64xf32>
    %307 = vector.shape_cast %306 : vector<16x64xf32> to vector<2x8x64xf32>
    %308 = arith.addf %200, %307 : vector<2x8x64xf32>
    %c1_126 = arith.constant 1 : index
    %c0_127 = arith.constant 0 : index
    %c0_128 = arith.constant 0 : index
    %309 = vector.load %arg12[%c1_126, %c0_127, %c0_128] : memref<2x1x64xf32, #tpu.memory_space<vmem>>, vector<1x1x64xf32>
    %310 = vector.shape_cast %309 : vector<1x1x64xf32> to vector<1x64xf32>
    %c1_129 = arith.constant 1 : index
    %c0_130 = arith.constant 0 : index
    %c0_131 = arith.constant 0 : index
    %311 = vector.load %arg13[%c1_129, %c0_130, %c0_131] : memref<2x1x64xf32, #tpu.memory_space<vmem>>, vector<1x1x64xf32>
    %312 = vector.shape_cast %311 : vector<1x1x64xf32> to vector<1x64xf32>
    %cst_132 = arith.constant dense<0.000000e+00> : vector<2x8xf32>
    %313 = vector.multi_reduction <add>, %308, %cst_132 [2] : vector<2x8x64xf32> to vector<2x8xf32>
    %314 = vector.shape_cast %313 : vector<2x8xf32> to vector<2x8x1xf32>
    %cst_133 = arith.constant 6.400000e+01 : f32
    %315 = vector.broadcast %cst_133 : f32 to vector<2x8x1xf32>
    %316 = arith.divf %314, %315 : vector<2x8x1xf32>
    %317 = vector.broadcast %316 : vector<2x8x1xf32> to vector<2x8x64xf32>
    %318 = arith.subf %308, %317 : vector<2x8x64xf32>
    %319 = arith.mulf %318, %318 : vector<2x8x64xf32>
    %cst_134 = arith.constant dense<0.000000e+00> : vector<2x8xf32>
    %320 = vector.multi_reduction <add>, %319, %cst_134 [2] : vector<2x8x64xf32> to vector<2x8xf32>
    %321 = vector.shape_cast %320 : vector<2x8xf32> to vector<2x8x1xf32>
    %cst_135 = arith.constant 6.400000e+01 : f32
    %322 = vector.broadcast %cst_135 : f32 to vector<2x8x1xf32>
    %323 = arith.divf %321, %322 : vector<2x8x1xf32>
    %324 = vector.broadcast %316 : vector<2x8x1xf32> to vector<2x8x64xf32>
    %325 = arith.subf %308, %324 : vector<2x8x64xf32>
    %cst_136 = arith.constant 9.99999974E-6 : f32
    %326 = vector.broadcast %cst_136 : f32 to vector<2x8x1xf32>
    %327 = arith.addf %323, %326 : vector<2x8x1xf32>
    %328 = math.rsqrt %327 : vector<2x8x1xf32>
    %329 = vector.broadcast %328 : vector<2x8x1xf32> to vector<2x8x64xf32>
    %330 = arith.mulf %325, %329 : vector<2x8x64xf32>
    %331 = vector.shape_cast %310 : vector<1x64xf32> to vector<1x1x64xf32>
    %332 = vector.broadcast %331 : vector<1x1x64xf32> to vector<2x8x64xf32>
    %333 = arith.mulf %330, %332 : vector<2x8x64xf32>
    %334 = vector.shape_cast %312 : vector<1x64xf32> to vector<1x1x64xf32>
    %335 = vector.broadcast %334 : vector<1x1x64xf32> to vector<2x8x64xf32>
    %336 = arith.addf %333, %335 : vector<2x8x64xf32>
    %337 = vector.shape_cast %336 : vector<2x8x64xf32> to vector<16x64xf32>
    %338 = arith.truncf %337 : vector<16x64xf32> to vector<16x64xbf16>
    %c1_137 = arith.constant 1 : index
    %c0_138 = arith.constant 0 : index
    %c0_139 = arith.constant 0 : index
    %339 = vector.load %arg14[%c1_137, %c0_138, %c0_139] : memref<2x64x128xbf16, #tpu.memory_space<vmem>>, vector<1x64x128xbf16>
    %340 = vector.shape_cast %339 : vector<1x64x128xbf16> to vector<64x128xbf16>
    %cst_140 = arith.constant dense<0.000000e+00> : vector<16x128xf32>
    %341 = tpu.matmul %338, %340, %cst_140 {dimension_numbers = #tpu.dot_dimension_numbers<[1], [0], [0], [1], [0, 0, 1, 1], [], []>} : vector<16x64xbf16>, vector<64x128xbf16>, vector<16x128xf32> -> vector<16x128xf32>
    %c1_141 = arith.constant 1 : index
    %c0_142 = arith.constant 0 : index
    %c0_143 = arith.constant 0 : index
    %342 = vector.load %arg15[%c1_141, %c0_142, %c0_143] : memref<2x1x128xf32, #tpu.memory_space<vmem>>, vector<1x1x128xf32>
    %343 = vector.shape_cast %342 : vector<1x1x128xf32> to vector<1x128xf32>
    %344 = vector.broadcast %343 : vector<1x128xf32> to vector<16x128xf32>
    %345 = arith.addf %341, %344 : vector<16x128xf32>
    %346 = arith.mulf %345, %345 : vector<16x128xf32>
    %347 = arith.mulf %345, %346 : vector<16x128xf32>
    %cst_144 = arith.constant 4.471500e-02 : f32
    %348 = vector.broadcast %cst_144 : f32 to vector<16x128xf32>
    %349 = arith.mulf %348, %347 : vector<16x128xf32>
    %350 = arith.addf %345, %349 : vector<16x128xf32>
    %cst_145 = arith.constant 0.797884583 : f32
    %351 = vector.broadcast %cst_145 : f32 to vector<16x128xf32>
    %352 = arith.mulf %351, %350 : vector<16x128xf32>
    %353 = math.tanh %352 : vector<16x128xf32>
    %cst_146 = arith.constant 1.000000e+00 : f32
    %354 = vector.broadcast %cst_146 : f32 to vector<16x128xf32>
    %355 = arith.addf %354, %353 : vector<16x128xf32>
    %cst_147 = arith.constant 5.000000e-01 : f32
    %356 = vector.broadcast %cst_147 : f32 to vector<16x128xf32>
    %357 = arith.mulf %356, %355 : vector<16x128xf32>
    %358 = arith.mulf %345, %357 : vector<16x128xf32>
    %359 = arith.truncf %358 : vector<16x128xf32> to vector<16x128xbf16>
    %c1_148 = arith.constant 1 : index
    %c0_149 = arith.constant 0 : index
    %c0_150 = arith.constant 0 : index
    %360 = vector.load %arg16[%c1_148, %c0_149, %c0_150] : memref<2x128x64xbf16, #tpu.memory_space<vmem>>, vector<1x128x64xbf16>
    %361 = vector.shape_cast %360 : vector<1x128x64xbf16> to vector<128x64xbf16>
    %cst_151 = arith.constant dense<0.000000e+00> : vector<16x64xf32>
    %362 = tpu.matmul %359, %361, %cst_151 {dimension_numbers = #tpu.dot_dimension_numbers<[1], [0], [0], [1], [0, 0, 1, 1], [], []>} : vector<16x128xbf16>, vector<128x64xbf16>, vector<16x64xf32> -> vector<16x64xf32>
    %c1_152 = arith.constant 1 : index
    %c0_153 = arith.constant 0 : index
    %c0_154 = arith.constant 0 : index
    %363 = vector.load %arg17[%c1_152, %c0_153, %c0_154] : memref<2x1x64xf32, #tpu.memory_space<vmem>>, vector<1x1x64xf32>
    %364 = vector.shape_cast %363 : vector<1x1x64xf32> to vector<1x64xf32>
    %365 = vector.broadcast %364 : vector<1x64xf32> to vector<16x64xf32>
    %366 = arith.addf %362, %365 : vector<16x64xf32>
    %367 = vector.shape_cast %366 : vector<16x64xf32> to vector<2x8x64xf32>
    %368 = arith.addf %308, %367 : vector<2x8x64xf32>
    %369 = vector.extract_strided_slice %368 {offsets = [0, 0, 0], sizes = [2, 1, 64], strides = [1, 1, 1]} : vector<2x8x64xf32> to vector<2x1x64xf32>
    %370 = vector.shape_cast %369 : vector<2x1x64xf32> to vector<2x64xf32>
    %371 = arith.truncf %370 : vector<2x64xf32> to vector<2x64xbf16>
    %c0_155 = arith.constant 0 : index
    %c0_156 = arith.constant 0 : index
    %372 = vector.load %arg18[%c0_155, %c0_156] : memref<64x64xbf16, #tpu.memory_space<vmem>>, vector<64x64xbf16>
    %cst_157 = arith.constant dense<0.000000e+00> : vector<2x64xf32>
    %373 = tpu.matmul %371, %372, %cst_157 {dimension_numbers = #tpu.dot_dimension_numbers<[1], [0], [0], [1], [0, 0, 1, 1], [], []>} : vector<2x64xbf16>, vector<64x64xbf16>, vector<2x64xf32> -> vector<2x64xf32>
    %c0_158 = arith.constant 0 : index
    %c0_159 = arith.constant 0 : index
    %374 = vector.load %arg19[%c0_158, %c0_159] : memref<1x64xf32, #tpu.memory_space<vmem>>, vector<1x64xf32>
    %375 = vector.broadcast %374 : vector<1x64xf32> to vector<2x64xf32>
    %376 = arith.addf %373, %375 : vector<2x64xf32>
    %377 = arith.mulf %376, %376 : vector<2x64xf32>
    %378 = arith.mulf %376, %377 : vector<2x64xf32>
    %cst_160 = arith.constant 4.471500e-02 : f32
    %379 = vector.broadcast %cst_160 : f32 to vector<2x64xf32>
    %380 = arith.mulf %379, %378 : vector<2x64xf32>
    %381 = arith.addf %376, %380 : vector<2x64xf32>
    %cst_161 = arith.constant 0.797884583 : f32
    %382 = vector.broadcast %cst_161 : f32 to vector<2x64xf32>
    %383 = arith.mulf %382, %381 : vector<2x64xf32>
    %384 = math.tanh %383 : vector<2x64xf32>
    %cst_162 = arith.constant 1.000000e+00 : f32
    %385 = vector.broadcast %cst_162 : f32 to vector<2x64xf32>
    %386 = arith.addf %385, %384 : vector<2x64xf32>
    %cst_163 = arith.constant 5.000000e-01 : f32
    %387 = vector.broadcast %cst_163 : f32 to vector<2x64xf32>
    %388 = arith.mulf %387, %386 : vector<2x64xf32>
    %389 = arith.mulf %376, %388 : vector<2x64xf32>
    %c0_164 = arith.constant 0 : index
    %c0_165 = arith.constant 0 : index
    %390 = vector.load %arg20[%c0_164, %c0_165] : memref<1x64xf32, #tpu.memory_space<vmem>>, vector<1x64xf32>
    %c0_166 = arith.constant 0 : index
    %c0_167 = arith.constant 0 : index
    %391 = vector.load %arg21[%c0_166, %c0_167] : memref<1x64xf32, #tpu.memory_space<vmem>>, vector<1x64xf32>
    %cst_168 = arith.constant dense<0.000000e+00> : vector<2xf32>
    %392 = vector.multi_reduction <add>, %389, %cst_168 [1] : vector<2x64xf32> to vector<2xf32>
    %393 = vector.shape_cast %392 : vector<2xf32> to vector<2x1xf32>
    %cst_169 = arith.constant 6.400000e+01 : f32
    %394 = vector.broadcast %cst_169 : f32 to vector<2x1xf32>
    %395 = arith.divf %393, %394 : vector<2x1xf32>
    %396 = vector.broadcast %395 : vector<2x1xf32> to vector<2x64xf32>
    %397 = arith.subf %389, %396 : vector<2x64xf32>
    %398 = arith.mulf %397, %397 : vector<2x64xf32>
    %cst_170 = arith.constant dense<0.000000e+00> : vector<2xf32>
    %399 = vector.multi_reduction <add>, %398, %cst_170 [1] : vector<2x64xf32> to vector<2xf32>
    %400 = vector.shape_cast %399 : vector<2xf32> to vector<2x1xf32>
    %cst_171 = arith.constant 6.400000e+01 : f32
    %401 = vector.broadcast %cst_171 : f32 to vector<2x1xf32>
    %402 = arith.divf %400, %401 : vector<2x1xf32>
    %403 = vector.broadcast %395 : vector<2x1xf32> to vector<2x64xf32>
    %404 = arith.subf %389, %403 : vector<2x64xf32>
    %cst_172 = arith.constant 9.99999974E-6 : f32
    %405 = vector.broadcast %cst_172 : f32 to vector<2x1xf32>
    %406 = arith.addf %402, %405 : vector<2x1xf32>
    %407 = math.rsqrt %406 : vector<2x1xf32>
    %408 = vector.broadcast %407 : vector<2x1xf32> to vector<2x64xf32>
    %409 = arith.mulf %404, %408 : vector<2x64xf32>
    %410 = vector.broadcast %390 : vector<1x64xf32> to vector<2x64xf32>
    %411 = arith.mulf %409, %410 : vector<2x64xf32>
    %412 = vector.broadcast %391 : vector<1x64xf32> to vector<2x64xf32>
    %413 = arith.addf %411, %412 : vector<2x64xf32>
    %414 = arith.truncf %413 : vector<2x64xf32> to vector<2x64xbf16>
    %c0_173 = arith.constant 0 : index
    %c0_174 = arith.constant 0 : index
    %415 = vector.load %arg22[%c0_173, %c0_174] : memref<64x18xbf16, #tpu.memory_space<vmem>>, vector<64x18xbf16>
    %cst_175 = arith.constant dense<0.000000e+00> : vector<2x18xf32>
    %416 = tpu.matmul %414, %415, %cst_175 {dimension_numbers = #tpu.dot_dimension_numbers<[1], [0], [0], [1], [0, 0, 1, 1], [], []>} : vector<2x64xbf16>, vector<64x18xbf16>, vector<2x18xf32> -> vector<2x18xf32>
    %c0_176 = arith.constant 0 : index
    %c0_177 = arith.constant 0 : index
    %417 = vector.load %arg23[%c0_176, %c0_177] : memref<1x18xf32, #tpu.memory_space<vmem>>, vector<1x18xf32>
    %418 = vector.broadcast %417 : vector<1x18xf32> to vector<2x18xf32>
    %419 = arith.addf %416, %418 : vector<2x18xf32>
    %420 = arith.truncf %419 : vector<2x18xf32> to vector<2x18xbf16>
    %c0_178 = arith.constant 0 : index
    %c0_179 = arith.constant 0 : index
    %421 = vector.load %arg24[%c0_178, %c0_179] : memref<18x1xbf16, #tpu.memory_space<vmem>>, vector<18x1xbf16>
    %cst_180 = arith.constant dense<0.000000e+00> : vector<2x1xf32>
    %422 = tpu.matmul %420, %421, %cst_180 {dimension_numbers = #tpu.dot_dimension_numbers<[1], [0], [0], [1], [0, 0, 1, 1], [], []>} : vector<2x18xbf16>, vector<18x1xbf16>, vector<2x1xf32> -> vector<2x1xf32>
    %c0_181 = arith.constant 0 : index
    %c0_182 = arith.constant 0 : index
    %423 = vector.load %arg25[%c0_181, %c0_182] : memref<1x1xf32, #tpu.memory_space<vmem>>, vector<1x1xf32>
    %424 = vector.broadcast %423 : vector<1x1xf32> to vector<2x1xf32>
    %425 = arith.addf %422, %424 : vector<2x1xf32>
    %c0_183 = arith.constant 0 : index
    %c0_184 = arith.constant 0 : index
    %426 = vector.load %arg27[%c0_183, %c0_184] : memref<2x18xf32, #tpu.memory_space<vmem>>, vector<2x18xf32>
    tpu.vector_store %arg27[%c0_183, %c0_184], %419 {strides = array<i32>} : memref<2x18xf32, #tpu.memory_space<vmem>>, vector<2x18xf32>,
    %c0_185 = arith.constant 0 : index
    %c0_186 = arith.constant 0 : index
    %427 = vector.load %arg28[%c0_185, %c0_186] : memref<2x1xf32, #tpu.memory_space<vmem>>, vector<2x1xf32>
    tpu.vector_store %arg28[%c0_185, %c0_186], %425 {strides = array<i32>} : memref<2x1xf32, #tpu.memory_space<vmem>>, vector<2x1xf32>,
    %cst_187 = arith.constant dense<0xFF800000> : vector<2xf32>
    %428 = vector.multi_reduction <maximumf>, %419, %cst_187 [1] : vector<2x18xf32> to vector<2xf32>
    %429 = vector.shape_cast %428 : vector<2xf32> to vector<2x1xf32>
    %430 = vector.broadcast %429 : vector<2x1xf32> to vector<2x18xf32>
    %431 = arith.subf %419, %430 : vector<2x18xf32>
    %432 = math.exp %431 : vector<2x18xf32>
    %cst_188 = arith.constant dense<0.000000e+00> : vector<2xf32>
    %433 = vector.multi_reduction <add>, %432, %cst_188 [1] : vector<2x18xf32> to vector<2xf32>
    %434 = vector.shape_cast %433 : vector<2xf32> to vector<2x1xf32>
    %435 = math.log %434 : vector<2x1xf32>
    %436 = vector.broadcast %435 : vector<2x1xf32> to vector<2x18xf32>
    %437 = arith.subf %431, %436 : vector<2x18xf32>
    %438 = tpu.iota {dimensions = array<i32: 1>} : vector<2x18xi32>
    %c0_189 = arith.constant 0 : index
    %c0_190 = arith.constant 0 : index
    %439 = vector.load %arg2[%c0_189, %c0_190] : memref<2x1xi32, #tpu.memory_space<vmem>>, vector<2x1xi32>
    %440 = vector.broadcast %439 : vector<2x1xi32> to vector<2x18xi32>
    %441 = arith.cmpi eq, %438, %440 : vector<2x18xi32>
    %442 = arith.extui %441 : vector<2x18xi1> to vector<2x18xi32>
    %443 = arith.sitofp %442 : vector<2x18xi32> to vector<2x18xf32>
    %444 = arith.mulf %443, %437 : vector<2x18xf32>
    %445 = vector.shape_cast %444 : vector<2x18xf32> to vector<1x2x18xf32>
    %cst_191 = arith.constant dense<0.000000e+00> : vector<1xf32>
    %446 = vector.multi_reduction <add>, %445, %cst_191 [1, 2] : vector<1x2x18xf32> to vector<1xf32>
    %447 = vector.shape_cast %446 : vector<1xf32> to vector<1x1x1xf32>
    %448 = vector.extract %447[0, 0, 0] : f32 from vector<1x1x1xf32>
    %cst_192 = arith.constant 0.000000e+00 : f32
    %449 = arith.subf %cst_192, %448 : f32
    %cst_193 = arith.constant 5.000000e-01 : f32
    %450 = arith.mulf %449, %cst_193 : f32
    %c0_194 = arith.constant 0 : index
    %c0_195 = arith.constant 0 : index
    %451 = vector.load %arg3[%c0_194, %c0_195] : memref<2x1xf32, #tpu.memory_space<vmem>>, vector<2x1xf32>
    %452 = arith.subf %425, %451 : vector<2x1xf32>
    %453 = arith.mulf %452, %452 : vector<2x1xf32>
    %454 = vector.shape_cast %453 : vector<2x1xf32> to vector<1x2x1xf32>
    %cst_196 = arith.constant dense<0.000000e+00> : vector<1xf32>
    %455 = vector.multi_reduction <add>, %454, %cst_196 [1, 2] : vector<1x2x1xf32> to vector<1xf32>
    %456 = vector.shape_cast %455 : vector<1xf32> to vector<1x1x1xf32>
    %457 = vector.extract %456[0, 0, 0] : f32 from vector<1x1x1xf32>
    %cst_197 = arith.constant 5.000000e-01 : f32
    %458 = arith.mulf %457, %cst_197 : f32
    %cst_198 = arith.constant 5.000000e-01 : f32
    %459 = arith.mulf %cst_198, %450 : f32
    %cst_199 = arith.constant 5.000000e-01 : f32
    %460 = arith.mulf %cst_199, %458 : f32
    %461 = arith.addf %459, %460 : f32
    %462 = vector.broadcast %461 : f32 to vector<1x1xf32>
    %c0_200 = arith.constant 0 : index
    %c0_201 = arith.constant 0 : index
    %463 = vector.load %arg26[%c0_200, %c0_201] : memref<1x1xf32, #tpu.memory_space<vmem>>, vector<1x1xf32>
    tpu.vector_store %arg26[%c0_200, %c0_201], %462 {strides = array<i32>} : memref<1x1xf32, #tpu.memory_space<vmem>>, vector<1x1xf32>,
    return
  }
}

</mosaic_0001>

<llo_original>
// kernel: tpu_custom_call.1
$region0: #{tpu_custom_call.1}
  #allocation0 [shape = 'u32[]', space=smem, size = 0x4, offset = 0x4, fixed_abs, tag = 'smem constant byte address 0x4 - core index']
  #allocation1 [shape = 'u32[144,128]{1,0:T(1,128)}', space=vmem, size = 0x12000, scoped, tag = 'internal scratch']
  #allocation2 [shape = 'f32[1,1]{1,0:T(1,128)S(1)}', space=vmem, size = 0x200, scoped, tag = 'scoped memory for tpu_custom_call.1']
  %s0 = inlined_call_operand.hbm [shape: f32[2,8,64], index: 0, kind: input, shape index: {}]
  %s1 = inlined_call_operand.hbm [shape: f32[2,8], index: 1, kind: input, shape index: {}]
  %s2 = inlined_call_operand.vmem [shape: s32[2,1], index: 2, kind: input, shape index: {}]
  %s3 = inlined_call_operand.vmem [shape: f32[2,1], index: 3, kind: input, shape index: {}]
  %s4 = inlined_call_operand.hbm [shape: f32[1,64], index: 4, kind: input, shape index: {}]
  %s5 = inlined_call_operand.hbm [shape: f32[1,64], index: 5, kind: input, shape index: {}]
  %s6 = inlined_call_operand.hbm [shape: f32[2,1,64], index: 6, kind: input, shape index: {}]
  %s7 = inlined_call_operand.hbm [shape: f32[2,1,64], index: 7, kind: input, shape index: {}]
  %s8 = inlined_call_operand.vmem [shape: bf16[2,64,192], index: 8, kind: input, shape index: {}]
  %s9 = inlined_call_operand.hbm [shape: f32[2,1,192], index: 9, kind: input, shape index: {}]
  %s10 = inlined_call_operand.vmem [shape: bf16[2,2,32,64], index: 10, kind: input, shape index: {}]
  %s11 = inlined_call_operand.hbm [shape: f32[2,1,64], index: 11, kind: input, shape index: {}]
  %s12 = inlined_call_operand.hbm [shape: f32[2,1,64], index: 12, kind: input, shape index: {}]
  %s13 = inlined_call_operand.hbm [shape: f32[2,1,64], index: 13, kind: input, shape index: {}]
  %s14 = inlined_call_operand.vmem [shape: bf16[2,64,128], index: 14, kind: input, shape index: {}]
  %s15 = inlined_call_operand.hbm [shape: f32[2,1,128], index: 15, kind: input, shape index: {}]
  %s16 = inlined_call_operand.vmem [shape: bf16[2,128,64], index: 16, kind: input, shape index: {}]
  %s17 = inlined_call_operand.hbm [shape: f32[2,1,64], index: 17, kind: input, shape index: {}]
  %s18 = inlined_call_operand.hbm [shape: bf16[64,64], index: 18, kind: input, shape index: {}]
  %s19 = inlined_call_operand.hbm [shape: f32[1,64], index: 19, kind: input, shape index: {}]
  %s20 = inlined_call_operand.vmem [shape: f32[1,64], index: 20, kind: input, shape index: {}]
  %s21 = inlined_call_operand.vmem [shape: f32[1,64], index: 21, kind: input, shape index: {}]
  %s22 = inlined_call_operand.vmem [shape: bf16[64,18], index: 22, kind: input, shape index: {}]
  %s23 = inlined_call_operand.vmem [shape: f32[1,18], index: 23, kind: input, shape index: {}]
  %s24 = inlined_call_operand.vmem [shape: bf16[18,1], index: 24, kind: input, shape index: {}]
  %s25 = inlined_call_operand.<no memory space> [shape: f32[1,1], index: 25, kind: input, shape index: {}]
  %s26 = inlined_call_operand.hbm [shape: f32[1,1], index: 26, kind: output, shape index: {0}]
  %s27 = inlined_call_operand.hbm [shape: f32[2,18], index: 27, kind: output, shape index: {1}]
  %s28 = inlined_call_operand.vmem [shape: f32[2,1], index: 28, kind: output, shape index: {2}]
  %29 = xla_tuple %s26, %s27, %s28
  %s30 = sld [smem:[#allocation0]]
  $region186: #{tpu_custom_call.1} parent=0
    _
  %s32 = ssub.s32 1, %s30
  %s33 = scalar_select 0, %s32, %s30
  %v34 = vstv %s25
  %35 = vst [vmem:[#allocation2] sm:$0x1] %v34
  $region1: #{tpu_custom_call.1} parent=0
    #allocation3 [shape = 'u8[8192]{0}', space=vmem, size = 0x2000, scoped, tag = 'input window, operand 0, single buffered']
    #allocation4 [shape = 's32[1]{0}', space=sflag, size = 0x4, scoped, tag = 'scoped memory for tpu_custom_call.1']
    #allocation5 [shape = 's32[1]{0}', space=sflag, size = 0x4, scoped, tag = 'scoped memory for tpu_custom_call.1']
    #allocation6 [shape = 'u8[1024]{0}', space=vmem, size = 0x400, scoped, tag = 'input window, operand 1, single buffered']
    #allocation7 [shape = 's32[1]{0}', space=sflag, size = 0x4, scoped, tag = 'scoped memory for tpu_custom_call.1']
    #allocation8 [shape = 'u8[512]{0}', space=vmem, size = 0x400, scoped, tag = 'input window, operand 4, single buffered']
    #allocation9 [shape = 'u8[512]{0}', space=vmem, size = 0x400, scoped, tag = 'input window, operand 5, single buffered']
    #allocation10 [shape = 's32[1]{0}', space=sflag, size = 0x4, scoped, tag = 'scoped memory for tpu_custom_call.1']
    #allocation11 [shape = 'u8[1024]{0}', space=vmem, size = 0x400, scoped, tag = 'input window, operand 6, single buffered']
    #allocation12 [shape = 'u8[1024]{0}', space=vmem, size = 0x400, scoped, tag = 'input window, operand 7, single buffered']
    #allocation13 [shape = 's32[1]{0}', space=sflag, size = 0x4, scoped, tag = 'scoped memory for tpu_custom_call.1']
    #allocation14 [shape = 'u8[2048]{0}', space=vmem, size = 0x800, scoped, tag = 'input window, operand 9, single buffered']
    #allocation15 [shape = 'u8[1024]{0}', space=vmem, size = 0x400, scoped, tag = 'input window, operand 11, single buffered']
    #allocation16 [shape = 's32[1]{0}', space=sflag, size = 0x4, scoped, tag = 'scoped memory for tpu_custom_call.1']
    #allocation17 [shape = 'u8[1024]{0}', space=vmem, size = 0x400, scoped, tag = 'input window, operand 12, single buffered']
    #allocation18 [shape = 'u8[1024]{0}', space=vmem, size = 0x400, scoped, tag = 'input window, operand 13, single buffered']
    #allocation19 [shape = 's32[1]{0}', space=sflag, size = 0x4, scoped, tag = 'scoped memory for tpu_custom_call.1']
    #allocation20 [shape = 'u8[1024]{0}', space=vmem, size = 0x400, scoped, tag = 'input window, operand 15, single buffered']
    #allocation21 [shape = 'u8[1024]{0}', space=vmem, size = 0x400, scoped, tag = 'input window, operand 17, single buffered']
    #allocation22 [shape = 's32[1]{0}', space=sflag, size = 0x4, scoped, tag = 'scoped memory for tpu_custom_call.1']
    #allocation23 [shape = 'u8[16384]{0}', space=vmem, size = 0x4000, scoped, tag = 'input window, operand 18, single buffered']
    #allocation24 [shape = 'u8[512]{0}', space=vmem, size = 0x400, scoped, tag = 'input window, operand 19, single buffered']
    #allocation25 [shape = 's32[1]{0}', space=sflag, size = 0x4, scoped, tag = 'scoped memory for tpu_custom_call.1']
    #allocation26 [shape = 'u8[512]{0}', space=vmem, size = 0x400, scoped, tag = 'output window, operand 0, single buffered']
    #allocation27 [shape = 'u8[1024]{0}', space=vmem, size = 0x400, scoped, tag = 'output window, operand 1, single buffered']
    #allocation28 [shape = 's32[1]{0}', space=sflag, size = 0x4, scoped, tag = 'scoped memory for tpu_custom_call.1']
    %36 = vsyncpa [#allocation4], 0
    %37 = vsyncpa [#allocation7], 0
    %38 = vsyncpa [#allocation10], 0
    %39 = vsyncpa [#allocation13], 0
    %40 = vsyncpa [#allocation16], 0
    %41 = vsyncpa [#allocation19], 0
    %42 = vsyncpa [#allocation22], 0
    %43 = vsyncpa [#allocation25], 0
    %44 = vsyncpa [#allocation5], 0
    %45 = vsyncpa [#allocation28], 0
    // Predicated region
    $region2: #{tpu_custom_call.1} parent=1 // pred_check
      _
    $region3: #{tpu_custom_call.1} parent=1 // pred_check_branch
      %47 = sbr.rel (0) target = $region5
    $region4: #{tpu_custom_call.1} parent=1 // pred_region
      %s49 = ssub.s32 256, 256
      %50 = vsyncadd [#allocation4], %s49
      %s51 = sshll.u32 [#allocation3], 4
      %s52 = int_to_ptr.vmem [resolvable:$true] %s51
      %57 = dma.hbm_to_vmem [thread:$0]  %s0, 256, %s52, [#allocation4], 128, 128, 8
    $region5: #{tpu_custom_call.1} parent=1 // pred_fallthru
      _
    // Predicated region
    $region6: #{tpu_custom_call.1} parent=1 // pred_check
      _
    $region7: #{tpu_custom_call.1} parent=1 // pred_check_branch
      %59 = sbr.rel (0) target = $region9
    $region8: #{tpu_custom_call.1} parent=1 // pred_region
      %s61 = ssub.s32 32, 32
      %62 = vsyncadd [#allocation7], %s61
      %s64 = sshll.u32 [#allocation6], 4
      %s65 = int_to_ptr.vmem [resolvable:$true] %s64
      %67 = dma.hbm_to_vmem [thread:$0]  %s1, 32, %s65, [#allocation7]
    $region9: #{tpu_custom_call.1} parent=1 // pred_fallthru
      _
    // Predicated region
    $region10: #{tpu_custom_call.1} parent=1 // pred_check
      _
    $region11: #{tpu_custom_call.1} parent=1 // pred_check_branch
      %69 = sbr.rel (0) target = $region13
    $region12: #{tpu_custom_call.1} parent=1 // pred_region
      _
    $region13: #{tpu_custom_call.1} parent=1 // pred_fallthru
      _
    // Predicated region
    $region14: #{tpu_custom_call.1} parent=1 // pred_check
      _
    $region15: #{tpu_custom_call.1} parent=1 // pred_check_branch
      %71 = sbr.rel (0) target = $region17
    $region16: #{tpu_custom_call.1} parent=1 // pred_region
      _
    $region17: #{tpu_custom_call.1} parent=1 // pred_fallthru
      _
    // Predicated region
    $region18: #{tpu_custom_call.1} parent=1 // pred_check
      _
    $region19: #{tpu_custom_call.1} parent=1 // pred_check_branch
      %73 = sbr.rel (0) target = $region21
    $region20: #{tpu_custom_call.1} parent=1 // pred_region
      %s75 = ssub.s32 16, 16
      %76 = vsyncadd [#allocation7], %s75
      %s78 = sshll.u32 [#allocation8], 4
      %s79 = int_to_ptr.vmem [resolvable:$true] %s78
      %81 = dma.hbm_to_vmem [thread:$0]  %s4, 16, %s79, [#allocation7]
    $region21: #{tpu_custom_call.1} parent=1 // pred_fallthru
      _
    // Predicated region
    $region22: #{tpu_custom_call.1} parent=1 // pred_check
      _
    $region23: #{tpu_custom_call.1} parent=1 // pred_check_branch
      %83 = sbr.rel (0) target = $region25
    $region24: #{tpu_custom_call.1} parent=1 // pred_region
      %s85 = ssub.s32 16, 16
      %86 = vsyncadd [#allocation10], %s85
      %s88 = sshll.u32 [#allocation9], 4
      %s89 = int_to_ptr.vmem [resolvable:$true] %s88
      %91 = dma.hbm_to_vmem [thread:$0]  %s5, 16, %s89, [#allocation10]
    $region25: #{tpu_custom_call.1} parent=1 // pred_fallthru
      _
    // Predicated region
    $region26: #{tpu_custom_call.1} parent=1 // pred_check
      _
    $region27: #{tpu_custom_call.1} parent=1 // pred_check_branch
      %93 = sbr.rel (0) target = $region29
    $region28: #{tpu_custom_call.1} parent=1 // pred_region
      %s95 = ssub.s32 32, 32
      %96 = vsyncadd [#allocation10], %s95
      %s97 = sshll.u32 [#allocation11], 4
      %s98 = int_to_ptr.vmem [resolvable:$true] %s97
      %103 = dma.hbm_to_vmem [thread:$0]  %s6, 32, %s98, [#allocation10], 16, 16, 1
    $region29: #{tpu_custom_call.1} parent=1 // pred_fallthru
      _
    // Predicated region
    $region30: #{tpu_custom_call.1} parent=1 // pred_check
      _
    $region31: #{tpu_custom_call.1} parent=1 // pred_check_branch
      %105 = sbr.rel (0) target = $region33
    $region32: #{tpu_custom_call.1} parent=1 // pred_region
      %s107 = ssub.s32 32, 32
      %108 = vsyncadd [#allocation13], %s107
      %s109 = sshll.u32 [#allocation12], 4
      %s110 = int_to_ptr.vmem [resolvable:$true] %s109
      %115 = dma.hbm_to_vmem [thread:$0]  %s7, 32, %s110, [#allocation13], 16, 16, 1
    $region33: #{tpu_custom_call.1} parent=1 // pred_fallthru
      _
    // Predicated region
    $region34: #{tpu_custom_call.1} parent=1 // pred_check
      _
    $region35: #{tpu_custom_call.1} parent=1 // pred_check_branch
      %117 = sbr.rel (0) target = $region37
    $region36: #{tpu_custom_call.1} parent=1 // pred_region
      _
    $region37: #{tpu_custom_call.1} parent=1 // pred_fallthru
      _
    // Predicated region
    $region38: #{tpu_custom_call.1} parent=1 // pred_check
      _
    $region39: #{tpu_custom_call.1} parent=1 // pred_check_branch
      %119 = sbr.rel (0) target = $region41
    $region40: #{tpu_custom_call.1} parent=1 // pred_region
      %s121 = ssub.s32 64, 64
      %122 = vsyncadd [#allocation13], %s121
      %s123 = sshll.u32 [#allocation14], 4
      %s124 = int_to_ptr.vmem [resolvable:$true] %s123
      %129 = dma.hbm_to_vmem [thread:$0]  %s9, 64, %s124, [#allocation13], 32, 32, 2
    $region41: #{tpu_custom_call.1} parent=1 // pred_fallthru
      _
    // Predicated region
    $region42: #{tpu_custom_call.1} parent=1 // pred_check
      _
    $region43: #{tpu_custom_call.1} parent=1 // pred_check_branch
      %131 = sbr.rel (0) target = $region45
    $region44: #{tpu_custom_call.1} parent=1 // pred_region
      _
    $region45: #{tpu_custom_call.1} parent=1 // pred_fallthru
      _
    // Predicated region
    $region46: #{tpu_custom_call.1} parent=1 // pred_check
      _
    $region47: #{tpu_custom_call.1} parent=1 // pred_check_branch
      %133 = sbr.rel (0) target = $region49
    $region48: #{tpu_custom_call.1} parent=1 // pred_region
      %s135 = ssub.s32 32, 32
      %136 = vsyncadd [#allocation16], %s135
      %s137 = sshll.u32 [#allocation15], 4
      %s138 = int_to_ptr.vmem [resolvable:$true] %s137
      %143 = dma.hbm_to_vmem [thread:$0]  %s11, 32, %s138, [#allocation16], 16, 16, 1
    $region49: #{tpu_custom_call.1} parent=1 // pred_fallthru
      _
    // Predicated region
    $region50: #{tpu_custom_call.1} parent=1 // pred_check
      _
    $region51: #{tpu_custom_call.1} parent=1 // pred_check_branch
      %145 = sbr.rel (0) target = $region53
    $region52: #{tpu_custom_call.1} parent=1 // pred_region
      %s147 = ssub.s32 32, 32
      %148 = vsyncadd [#allocation16], %s147
      %s149 = sshll.u32 [#allocation17], 4
      %s150 = int_to_ptr.vmem [resolvable:$true] %s149
      %155 = dma.hbm_to_vmem [thread:$0]  %s12, 32, %s150, [#allocation16], 16, 16, 1
    $region53: #{tpu_custom_call.1} parent=1 // pred_fallthru
      _
    // Predicated region
    $region54: #{tpu_custom_call.1} parent=1 // pred_check
      _
    $region55: #{tpu_custom_call.1} parent=1 // pred_check_branch
      %157 = sbr.rel (0) target = $region57
    $region56: #{tpu_custom_call.1} parent=1 // pred_region
      %s159 = ssub.s32 32, 32
      %160 = vsyncadd [#allocation19], %s159
      %s161 = sshll.u32 [#allocation18], 4
      %s162 = int_to_ptr.vmem [resolvable:$true] %s161
      %167 = dma.hbm_to_vmem [thread:$0]  %s13, 32, %s162, [#allocation19], 16, 16, 1
    $region57: #{tpu_custom_call.1} parent=1 // pred_fallthru
      _
    // Predicated region
    $region58: #{tpu_custom_call.1} parent=1 // pred_check
      _
    $region59: #{tpu_custom_call.1} parent=1 // pred_check_branch
      %169 = sbr.rel (0) target = $region61
    $region60: #{tpu_custom_call.1} parent=1 // pred_region
      _
    $region61: #{tpu_custom_call.1} parent=1 // pred_fallthru
      _
    // Predicated region
    $region62: #{tpu_custom_call.1} parent=1 // pred_check
      _
    $region63: #{tpu_custom_call.1} parent=1 // pred_check_branch
      %171 = sbr.rel (0) target = $region65
    $region64: #{tpu_custom_call.1} parent=1 // pred_region
      %s173 = ssub.s32 32, 32
      %174 = vsyncadd [#allocation19], %s173
      %s175 = sshll.u32 [#allocation20], 4
      %s176 = int_to_ptr.vmem [resolvable:$true] %s175
      %181 = dma.hbm_to_vmem [thread:$0]  %s15, 32, %s176, [#allocation19], 16, 16, 1
    $region65: #{tpu_custom_call.1} parent=1 // pred_fallthru
      _
    // Predicated region
    $region66: #{tpu_custom_call.1} parent=1 // pred_check
      _
    $region67: #{tpu_custom_call.1} parent=1 // pred_check_branch
      %183 = sbr.rel (0) target = $region69
    $region68: #{tpu_custom_call.1} parent=1 // pred_region
      _
    $region69: #{tpu_custom_call.1} parent=1 // pred_fallthru
      _
    // Predicated region
    $region70: #{tpu_custom_call.1} parent=1 // pred_check
      _
    $region71: #{tpu_custom_call.1} parent=1 // pred_check_branch
      %185 = sbr.rel (0) target = $region73
    $region72: #{tpu_custom_call.1} parent=1 // pred_region
      %s187 = ssub.s32 32, 32
      %188 = vsyncadd [#allocation22], %s187
      %s189 = sshll.u32 [#allocation21], 4
      %s190 = int_to_ptr.vmem [resolvable:$true] %s189
      %195 = dma.hbm_to_vmem [thread:$0]  %s17, 32, %s190, [#allocation22], 16, 16, 1
    $region73: #{tpu_custom_call.1} parent=1 // pred_fallthru
      _
    // Predicated region
    $region74: #{tpu_custom_call.1} parent=1 // pred_check
      _
    $region75: #{tpu_custom_call.1} parent=1 // pred_check_branch
      %197 = sbr.rel (0) target = $region77
    $region76: #{tpu_custom_call.1} parent=1 // pred_region
      %s199 = ssub.s32 512, 512
      %200 = vsyncadd [#allocation22], %s199
      %s201 = sshll.u32 [#allocation23], 4
      %s202 = int_to_ptr.vmem [resolvable:$true] %s201
      %207 = dma.hbm_to_vmem [thread:$0]  %s18, 512, %s202, [#allocation22], 64, 64, 4
    $region77: #{tpu_custom_call.1} parent=1 // pred_fallthru
      _
    // Predicated region
    $region78: #{tpu_custom_call.1} parent=1 // pred_check
      _
    $region79: #{tpu_custom_call.1} parent=1 // pred_check_branch
      %209 = sbr.rel (0) target = $region81
    $region80: #{tpu_custom_call.1} parent=1 // pred_region
      %s211 = ssub.s32 16, 16
      %212 = vsyncadd [#allocation25], %s211
      %s214 = sshll.u32 [#allocation24], 4
      %s215 = int_to_ptr.vmem [resolvable:$true] %s214
      %217 = dma.hbm_to_vmem [thread:$0]  %s19, 16, %s215, [#allocation25]
    $region81: #{tpu_custom_call.1} parent=1 // pred_fallthru
      _
    // Predicated region
    $region82: #{tpu_custom_call.1} parent=1 // pred_check
      _
    $region83: #{tpu_custom_call.1} parent=1 // pred_check_branch
      %219 = sbr.rel (0) target = $region85
    $region84: #{tpu_custom_call.1} parent=1 // pred_region
      _
    $region85: #{tpu_custom_call.1} parent=1 // pred_fallthru
      _
    // Predicated region
    $region86: #{tpu_custom_call.1} parent=1 // pred_check
      _
    $region87: #{tpu_custom_call.1} parent=1 // pred_check_branch
      %221 = sbr.rel (0) target = $region89
    $region88: #{tpu_custom_call.1} parent=1 // pred_region
      _
    $region89: #{tpu_custom_call.1} parent=1 // pred_fallthru
      _
    // Predicated region
    $region90: #{tpu_custom_call.1} parent=1 // pred_check
      _
    $region91: #{tpu_custom_call.1} parent=1 // pred_check_branch
      %223 = sbr.rel (0) target = $region93
    $region92: #{tpu_custom_call.1} parent=1 // pred_region
      _
    $region93: #{tpu_custom_call.1} parent=1 // pred_fallthru
      _
    // Predicated region
    $region94: #{tpu_custom_call.1} parent=1 // pred_check
      _
    $region95: #{tpu_custom_call.1} parent=1 // pred_check_branch
      %225 = sbr.rel (0) target = $region97
    $region96: #{tpu_custom_call.1} parent=1 // pred_region
      _
    $region97: #{tpu_custom_call.1} parent=1 // pred_fallthru
      _
    // Predicated region
    $region98: #{tpu_custom_call.1} parent=1 // pred_check
      _
    $region99: #{tpu_custom_call.1} parent=1 // pred_check_branch
      %227 = sbr.rel (0) target = $region101
    $region100: #{tpu_custom_call.1} parent=1 // pred_region
      _
    $region101: #{tpu_custom_call.1} parent=1 // pred_fallthru
      _
    // Predicated region
    $region102: #{tpu_custom_call.1} parent=1 // pred_check
      _
    $region103: #{tpu_custom_call.1} parent=1 // pred_check_branch
      %229 = sbr.rel (0) target = $region105
    $region104: #{tpu_custom_call.1} parent=1 // pred_region
      _
    $region105: #{tpu_custom_call.1} parent=1 // pred_fallthru
      _
    // Predicated region
    $region106: #{tpu_custom_call.1} parent=1 // pred_check
      _
    $region107: #{tpu_custom_call.1} parent=1 // pred_check_branch
      %231 = sbr.rel (0) target = $region109
    $region108: #{tpu_custom_call.1} parent=1 // pred_region
      %232 = dma.done [#allocation4], 256
    $region109: #{tpu_custom_call.1} parent=1 // pred_fallthru
      _
    // Predicated region
    $region110: #{tpu_custom_call.1} parent=1 // pred_check
      _
    $region111: #{tpu_custom_call.1} parent=1 // pred_check_branch
      %234 = sbr.rel (0) target = $region113
    $region112: #{tpu_custom_call.1} parent=1 // pred_region
      %235 = dma.done [#allocation7], 32
    $region113: #{tpu_custom_call.1} parent=1 // pred_fallthru
      _
    // Predicated region
    $region114: #{tpu_custom_call.1} parent=1 // pred_check
      _
    $region115: #{tpu_custom_call.1} parent=1 // pred_check_branch
      %237 = sbr.rel (0) target = $region117
    $region116: #{tpu_custom_call.1} parent=1 // pred_region
      %238 = dma.done [#allocation7], 16
    $region117: #{tpu_custom_call.1} parent=1 // pred_fallthru
      _
    // Predicated region
    $region118: #{tpu_custom_call.1} parent=1 // pred_check
      _
    $region119: #{tpu_custom_call.1} parent=1 // pred_check_branch
      %240 = sbr.rel (0) target = $region121
    $region120: #{tpu_custom_call.1} parent=1 // pred_region
      %241 = dma.done [#allocation10], 16
    $region121: #{tpu_custom_call.1} parent=1 // pred_fallthru
      _
    // Predicated region
    $region122: #{tpu_custom_call.1} parent=1 // pred_check
      _
    $region123: #{tpu_custom_call.1} parent=1 // pred_check_branch
      %243 = sbr.rel (0) target = $region125
    $region124: #{tpu_custom_call.1} parent=1 // pred_region
      %244 = dma.done [#allocation10], 32
    $region125: #{tpu_custom_call.1} parent=1 // pred_fallthru
      _
    // Predicated region
    $region126: #{tpu_custom_call.1} parent=1 // pred_check
      _
    $region127: #{tpu_custom_call.1} parent=1 // pred_check_branch
      %246 = sbr.rel (0) target = $region129
    $region128: #{tpu_custom_call.1} parent=1 // pred_region
      %247 = dma.done [#allocation13], 32
    $region129: #{tpu_custom_call.1} parent=1 // pred_fallthru
      _
    // Predicated region
    $region130: #{tpu_custom_call.1} parent=1 // pred_check
      _
    $region131: #{tpu_custom_call.1} parent=1 // pred_check_branch
      %249 = sbr.rel (0) target = $region133
    $region132: #{tpu_custom_call.1} parent=1 // pred_region
      %250 = dma.done [#allocation13], 64
    $region133: #{tpu_custom_call.1} parent=1 // pred_fallthru
      _
    // Predicated region
    $region134: #{tpu_custom_call.1} parent=1 // pred_check
      _
    $region135: #{tpu_custom_call.1} parent=1 // pred_check_branch
      %252 = sbr.rel (0) target = $region137
    $region136: #{tpu_custom_call.1} parent=1 // pred_region
      %253 = dma.done [#allocation16], 32
    $region137: #{tpu_custom_call.1} parent=1 // pred_fallthru
      _
    // Predicated region
    $region138: #{tpu_custom_call.1} parent=1 // pred_check
      _
    $region139: #{tpu_custom_call.1} parent=1 // pred_check_branch
      %255 = sbr.rel (0) target = $region141
    $region140: #{tpu_custom_call.1} parent=1 // pred_region
      %256 = dma.done [#allocation16], 32
    $region141: #{tpu_custom_call.1} parent=1 // pred_fallthru
      _
    // Predicated region
    $region142: #{tpu_custom_call.1} parent=1 // pred_check
      _
    $region143: #{tpu_custom_call.1} parent=1 // pred_check_branch
      %258 = sbr.rel (0) target = $region145
    $region144: #{tpu_custom_call.1} parent=1 // pred_region
      %259 = dma.done [#allocation19], 32
    $region145: #{tpu_custom_call.1} parent=1 // pred_fallthru
      _
    // Predicated region
    $region146: #{tpu_custom_call.1} parent=1 // pred_check
      _
    $region147: #{tpu_custom_call.1} parent=1 // pred_check_branch
      %261 = sbr.rel (0) target = $region149
    $region148: #{tpu_custom_call.1} parent=1 // pred_region
      %262 = dma.done [#allocation19], 32
    $region149: #{tpu_custom_call.1} parent=1 // pred_fallthru
      _
    // Predicated region
    $region150: #{tpu_custom_call.1} parent=1 // pred_check
      _
    $region151: #{tpu_custom_call.1} parent=1 // pred_check_branch
      %264 = sbr.rel (0) target = $region153
    $region152: #{tpu_custom_call.1} parent=1 // pred_region
      %265 = dma.done [#allocation22], 32
    $region153: #{tpu_custom_call.1} parent=1 // pred_fallthru
      _
    // Predicated region
    $region154: #{tpu_custom_call.1} parent=1 // pred_check
      _
    $region155: #{tpu_custom_call.1} parent=1 // pred_check_branch
      %267 = sbr.rel (0) target = $region157
    $region156: #{tpu_custom_call.1} parent=1 // pred_region
      %268 = dma.done [#allocation22], 512
    $region157: #{tpu_custom_call.1} parent=1 // pred_fallthru
      _
    // Predicated region
    $region158: #{tpu_custom_call.1} parent=1 // pred_check
      _
    $region159: #{tpu_custom_call.1} parent=1 // pred_check_branch
      %270 = sbr.rel (0) target = $region161
    $region160: #{tpu_custom_call.1} parent=1 // pred_region
      %271 = dma.done [#allocation25], 16
    $region161: #{tpu_custom_call.1} parent=1 // pred_fallthru
      _
    %v273 = vld [vmem:[#allocation3] sm:$0xff]
    %v274 = vld [vmem:[#allocation3 + $0x8] sm:$0xff]
    %v275 = vld [vmem:[#allocation8] sm:$0x1]
    %v276 = vld [vmem:[#allocation9] sm:$0x1]
    %vm277 = vcmask 523264
    %v278 = vsel %vm277, %v273, 0.0
    %279 = vadd.xlane.f32.xlu0 %v278
    %v280 = vpop.xlane.xlu0 %279
    %v281 = vsel %vm277, %v274, 0.0
    %282 = vadd.xlane.f32.xlu0 %v281
    %v283 = vpop.xlane.xlu0 %282
    %v284 = vrcp.pop 64.0
    %v285 = vmul.f32 %v280, %v284
    %v286 = vmul.f32 %v283, %v284
    %v287 = vsub.f32 %v273, %v285
    %v288 = vsub.f32 %v274, %v286
    %v289 = vmul.f32 %v287, %v287
    %v290 = vmul.f32 %v288, %v288
    %v291 = vsel %vm277, %v289, 0.0
    %292 = vadd.xlane.f32.xlu0 %v291
    %v293 = vpop.xlane.xlu0 %292
    %v294 = vsel %vm277, %v290, 0.0
    %295 = vadd.xlane.f32.xlu0 %v294
    %v296 = vpop.xlane.xlu0 %295
    %v297 = vmul.f32 %v293, %v284
    %v298 = vmul.f32 %v296, %v284
    %v299 = vadd.f32 %v297, 1e-05
    %v300 = vadd.f32 %v298, 1e-05
    %v301 = vrsqrt.pop %v299
    %v302 = vrsqrt.pop %v300
    %v303 = vmul.f32 %v287, %v301
    %v304 = vmul.f32 %v288, %v302
    %v306 = vlaneseq
    %v307 = vshrl.u32 %v306, 7
    %v308 = vsub.s32 0, %v307
    %v309 = vrot.slane %v275, %v308
    %v311 = vmul.f32 %v303, %v309
    %v312 = vmul.f32 %v304, %v309
    %v314 = vlaneseq
    %v315 = vshrl.u32 %v314, 7
    %v316 = vsub.s32 0, %v315
    %v317 = vrot.slane %v276, %v316
    %v319 = vadd.f32 %v311, %v317
    %v320 = vadd.f32 %v312, %v317
    %v321 = vld [vmem:[#allocation6] sm:$0x3]
    %v322 = vsub.f32 1.0, %v321
    %v323 = vmul.f32 %v322, -1e+09
    %v326 = vunpack.c.l.s4 1966171168
    %v327 = vunpack.c.0.s8 %v326
    %v328 = vlaneseq
    %v329 = vshrl.u32 %v328, 7
    %v330 = vsub.s32 %v327, %v329
    %v331 = vrot.slane %v323, %v330
    %v332 = vcombine.high %v331, %v331
    %v334 = vunpack.c.l.s4 1966171168
    %v335 = vunpack.c.0.s8 %v334
    %v336 = vlaneseq
    %v337 = vshrl.u32 %v336, 7
    %v338 = vsub.s32 %v335, %v337
    %v339 = vrot.slane %v331, %v338
    %v341 = vunpack.c.l.s4 1966171168
    %v342 = vunpack.c.0.s8 %v341
    %v343 = vlaneseq
    %v344 = vshrl.u32 %v343, 7
    %v345 = vsub.s32 %v342, %v344
    %v346 = vrot.slane %v332, %v345
    %v347 = vld [vmem:[#allocation11] sm:$0x1]
    %v348 = vld [vmem:[#allocation12] sm:$0x1]
    %v349 = vsel %vm277, %v319, 0.0
    %350 = vadd.xlane.f32.xlu0 %v349
    %v351 = vpop.xlane.xlu0 %350
    %v352 = vsel %vm277, %v320, 0.0
    %353 = vadd.xlane.f32.xlu0 %v352
    %v354 = vpop.xlane.xlu0 %353
    %v355 = vmul.f32 %v351, %v284
    %v356 = vmul.f32 %v354, %v284
    %v357 = vsub.f32 %v319, %v355
    %v358 = vsub.f32 %v320, %v356
    %v359 = vmul.f32 %v357, %v357
    %v360 = vmul.f32 %v358, %v358
    %v361 = vsel %vm277, %v359, 0.0
    %362 = vadd.xlane.f32.xlu0 %v361
    %v363 = vpop.xlane.xlu0 %362
    %v364 = vsel %vm277, %v360, 0.0
    %365 = vadd.xlane.f32.xlu0 %v364
    %v366 = vpop.xlane.xlu0 %365
    %v367 = vmul.f32 %v363, %v284
    %v368 = vmul.f32 %v366, %v284
    %v369 = vadd.f32 %v367, 1e-05
    %v370 = vadd.f32 %v368, 1e-05
    %v371 = vrsqrt.pop %v369
    %v372 = vrsqrt.pop %v370
    %v373 = vmul.f32 %v357, %v371
    %v374 = vmul.f32 %v358, %v372
    %v376 = vlaneseq
    %v377 = vshrl.u32 %v376, 7
    %v378 = vsub.s32 0, %v377
    %v379 = vrot.slane %v347, %v378
    %v381 = vmul.f32 %v373, %v379
    %v382 = vmul.f32 %v374, %v379
    %v384 = vlaneseq
    %v385 = vshrl.u32 %v384, 7
    %v386 = vsub.s32 0, %v385
    %v387 = vrot.slane %v348, %v386
    %v389 = vadd.f32 %v381, %v387
    %v390 = vadd.f32 %v382, %v387
    %v391 = vpack.c.bf16 %v390, %v389
    %v392 = vld [vmem:[%s8] sm:$0xff]
    %v393 = vld [vmem:[%s8 + $0x8] sm:$0xff]
    %v394 = vld [vmem:[%s8 + $0x10] sm:$0xff]
    %v395 = vld [vmem:[%s8 + $0x18] sm:$0xff]
    %v396 = vld [vmem:[%s8 + $0x20] sm:$0xff]
    %v397 = vld [vmem:[%s8 + $0x28] sm:$0xff]
    %v398 = vld [vmem:[%s8 + $0x30] sm:$0xff]
    %v399 = vld [vmem:[%s8 + $0x38] sm:$0xff]
    %v400 = vld [vmem:[#allocation14] sm:$0x3]
    %v402 = vlaneseq
    %v403 = vshrl.u32 %v402, 7
    %v404 = vsub.s32 0, %v403
    %v405 = vrot.slane %v400, %v404
    %v406 = vlaneseq
    %v407 = vshrl.u32 %v406, 7
    %v408 = vsub.s32 1, %v407
    %v409 = vrot.slane %v400, %v408
    %v420 = vunpack.c.l.b16 %v392
    %v421 = vunpack.c.h.b16 %v392
    %v422 = vunpack.c.l.b16 %v393
    %v423 = vunpack.c.h.b16 %v393
    %v424 = vunpack.c.l.b16 %v394
    %v425 = vunpack.c.h.b16 %v394
    %v426 = vunpack.c.l.b16 %v395
    %v427 = vunpack.c.h.b16 %v395
    %v428 = vunpack.c.l.b16 %v396
    %v429 = vunpack.c.h.b16 %v396
    %v430 = vunpack.c.l.b16 %v397
    %v431 = vunpack.c.h.b16 %v397
    %v432 = vunpack.c.l.b16 %v398
    %v433 = vunpack.c.h.b16 %v398
    %v434 = vunpack.c.l.b16 %v399
    %v435 = vunpack.c.h.b16 %v399
    %v436 = vpack.c.b16 %v422, %v420
    %v437 = vpack.c.b16 %v423, %v421
    %v438 = vpack.c.b16 %v426, %v424
    %v439 = vpack.c.b16 %v427, %v425
    %v440 = vpack.c.b16 %v430, %v428
    %v441 = vpack.c.b16 %v431, %v429
    %v442 = vpack.c.b16 %v434, %v432
    %v443 = vpack.c.b16 %v435, %v433
    %v453 = vsel %vm277, %v391, 0
    %455 = vmatprep.subr.bf16.mxu0 %v437
    %456 = vmatpush1.bf16.msra.mxu0 %v436
    %457 = vmatprep.subr.bf16.mxu0 %v439
    %458 = vmatpush1.bf16.msra.mxu0 %v438
    %459 = vmatprep.subr.bf16.mxu0 %v441
    %460 = vmatpush1.bf16.msra.mxu0 %v440
    %461 = vmatprep.subr.bf16.mxu0 %v443
    %462 = vmatpush1.bf16.msra.mxu0 %v442
    %463 = vmatprep.subr.bf16.mxu0 0
    %464 = vmatpush1.bf16.msra.mxu0 0
    %465 = vmatprep.subr.bf16.mxu0 0
    %466 = vmatpush1.bf16.msra.mxu0 0
    %467 = vmatprep.subr.bf16.mxu0 0
    %468 = vmatpush1.bf16.msra.mxu0 0
    %469 = vmatprep.subr.bf16.mxu0 0
    %470 = vmatpush1.bf16.msra.mxu0 0
    %471 = vmatprep.subr.bf16.mxu0 0
    %472 = vmatpush1.bf16.msra.mxu0 0
    %473 = vmatprep.subr.bf16.mxu0 0
    %474 = vmatpush1.bf16.msra.mxu0 0
    %475 = vmatprep.subr.bf16.mxu0 0
    %476 = vmatpush1.bf16.msra.mxu0 0
    %477 = vmatprep.subr.bf16.mxu0 0
    %478 = vmatpush1.bf16.msra.mxu0 0
    %479 = vmatprep.subr.bf16.mxu0 0
    %480 = vmatpush1.bf16.msra.mxu0 0
    %481 = vmatprep.subr.bf16.mxu0 0
    %482 = vmatpush1.bf16.msra.mxu0 0
    %483 = vmatprep.subr.bf16.mxu0 0
    %484 = vmatpush1.bf16.msra.mxu0 0
    %485 = vmatprep.subr.bf16.mxu0 0
    %486 = vmatpush1.bf16.msra.mxu0 0
    %487 = vmatprep.mubr.bf16.mxu0 0
    %488 = vmatmul.mubr.bf16.gmra.mrb[0].mxu0 %v453
    %v489 = vpop.f32.mrb[0].mxu0
    %v490 = vadd.f32 %v405, %v489
    %v491 = vpop.f32.mrb[0].mxu0
    %v492 = vadd.f32 %v409, %v491
    %v493 = vpop.f32.mrb[0].mxu0
    %v494 = vadd.f32 %v405, %v493
    %v495 = vpop.f32.mrb[0].mxu0
    %v496 = vadd.f32 %v409, %v495
    %497 = vdwg.mxu0
    %v498 = vpack.c.bf16 %v490, %v490
    %v499 = vpack.c.bf16 %v494, %v494
    %501 = vrot.lane.b32.xlu0 %v498, 64
    %v502 = vpop.permute.xlu0 %501
    %vm503 = vcmask 261120
    %v505 = vsel %vm503, %v498, 0
    %v508 = vsel %vm503, %v502, 0
    %510 = vmatprep.subr.bf16.mxu0 0
    %511 = vmatpush1.bf16.xpose.msra.mxu0 %v508
    %512 = vmatprep.subr.bf16.mxu0 0
    %513 = vmatpush1.bf16.xpose.msra.mxu0 0
    %514 = vmatprep.subr.bf16.mxu0 0
    %515 = vmatpush1.bf16.xpose.msra.mxu0 0
    %516 = vmatprep.subr.bf16.mxu0 0
    %517 = vmatpush1.bf16.xpose.msra.mxu0 0
    %518 = vmatprep.subr.bf16.mxu0 0
    %519 = vmatpush1.bf16.xpose.msra.mxu0 0
    %520 = vmatprep.subr.bf16.mxu0 0
    %521 = vmatpush1.bf16.xpose.msra.mxu0 0
    %522 = vmatprep.subr.bf16.mxu0 0
    %523 = vmatpush1.bf16.xpose.msra.mxu0 0
    %524 = vmatprep.subr.bf16.mxu0 0
    %525 = vmatpush1.bf16.xpose.msra.mxu0 0
    %526 = vmatprep.subr.bf16.mxu0 0
    %527 = vmatpush1.bf16.xpose.msra.mxu0 0
    %528 = vmatprep.subr.bf16.mxu0 0
    %529 = vmatpush1.bf16.xpose.msra.mxu0 0
    %530 = vmatprep.subr.bf16.mxu0 0
    %531 = vmatpush1.bf16.xpose.msra.mxu0 0
    %532 = vmatprep.subr.bf16.mxu0 0
    %533 = vmatpush1.bf16.xpose.msra.mxu0 0
    %534 = vmatprep.subr.bf16.mxu0 0
    %535 = vmatpush1.bf16.xpose.msra.mxu0 0
    %536 = vmatprep.subr.bf16.mxu0 0
    %537 = vmatpush1.bf16.xpose.msra.mxu0 0
    %538 = vmatprep.subr.bf16.mxu0 0
    %539 = vmatpush1.bf16.xpose.msra.mxu0 0
    %540 = vmatprep.subr.bf16.mxu0 0
    %541 = vmatpush1.bf16.xpose.msra.mxu0 0
    %542 = vmatprep.mubr.bf16.mxu0 0
    %543 = vmatmul.mubr.bf16.gmra.mrb[0].mxu0 %v505
    %v544 = vpop.f32.mrb[0].mxu0
    %v545 = vadd.f32 0.0, %v544
    %v546 = vpop.f32.mrb[0].mxu0
    %v547 = vpop.f32.mrb[0].mxu0
    %v548 = vpop.f32.mrb[0].mxu0
    %549 = vdwg.mxu0
    %551 = vrot.lane.b32.xlu0 %v499, 64
    %v552 = vpop.permute.xlu0 %551
    %v554 = vsel %vm503, %v499, 0
    %v557 = vsel %vm503, %v552, 0
    %559 = vmatprep.subr.bf16.mxu0 0
    %560 = vmatpush1.bf16.xpose.msra.mxu0 %v557
    %561 = vmatprep.subr.bf16.mxu0 0
    %562 = vmatpush1.bf16.xpose.msra.mxu0 0
    %563 = vmatprep.subr.bf16.mxu0 0
    %564 = vmatpush1.bf16.xpose.msra.mxu0 0
    %565 = vmatprep.subr.bf16.mxu0 0
    %566 = vmatpush1.bf16.xpose.msra.mxu0 0
    %567 = vmatprep.subr.bf16.mxu0 0
    %568 = vmatpush1.bf16.xpose.msra.mxu0 0
    %569 = vmatprep.subr.bf16.mxu0 0
    %570 = vmatpush1.bf16.xpose.msra.mxu0 0
    %571 = vmatprep.subr.bf16.mxu0 0
    %572 = vmatpush1.bf16.xpose.msra.mxu0 0
    %573 = vmatprep.subr.bf16.mxu0 0
    %574 = vmatpush1.bf16.xpose.msra.mxu0 0
    %575 = vmatprep.subr.bf16.mxu0 0
    %576 = vmatpush1.bf16.xpose.msra.mxu0 0
    %577 = vmatprep.subr.bf16.mxu0 0
    %578 = vmatpush1.bf16.xpose.msra.mxu0 0
    %579 = vmatprep.subr.bf16.mxu0 0
    %580 = vmatpush1.bf16.xpose.msra.mxu0 0
    %581 = vmatprep.subr.bf16.mxu0 0
    %582 = vmatpush1.bf16.xpose.msra.mxu0 0
    %583 = vmatprep.subr.bf16.mxu0 0
    %584 = vmatpush1.bf16.xpose.msra.mxu0 0
    %585 = vmatprep.subr.bf16.mxu0 0
    %586 = vmatpush1.bf16.xpose.msra.mxu0 0
    %587 = vmatprep.subr.bf16.mxu0 0
    %588 = vmatpush1.bf16.xpose.msra.mxu0 0
    %589 = vmatprep.subr.bf16.mxu0 0
    %590 = vmatpush1.bf16.xpose.msra.mxu0 0
    %591 = vmatprep.mubr.bf16.mxu0 0
    %592 = vmatmul.mubr.bf16.gmra.mrb[0].mxu0 %v554
    %v593 = vpop.f32.mrb[0].mxu0
    %v594 = vadd.f32 0.0, %v593
    %v595 = vpop.f32.mrb[0].mxu0
    %v596 = vpop.f32.mrb[0].mxu0
    %v597 = vpop.f32.mrb[0].mxu0
    %598 = vdwg.mxu0
    %v599 = vmul.f32 %v545, 0.17677669
    %v600 = vmul.f32 %v594, 0.17677669
    %v601 = vlaneseq
    %v602 = vshrl.u32 %v601, 7
    %v603 = vsub.s32 0, %v602
    %v604 = vrot.slane %v339, %v603
    %v605 = vlaneseq
    %v606 = vshrl.u32 %v605, 7
    %v607 = vsub.s32 0, %v606
    %v608 = vrot.slane %v346, %v607
    %v611 = vadd.f32 %v599, %v604
    %v612 = vadd.f32 %v600, %v608
    %vm613 = vcmask 64512
    %v614 = vsel %vm613, %v611, -inf
    %615 = vmax.xlane.f32.xlu0 %v614
    %v616 = vpop.xlane.xlu0 %615
    %v617 = vsel %vm613, %v612, -inf
    %618 = vmax.xlane.f32.xlu0 %v617
    %v619 = vpop.xlane.xlu0 %618
    %v620 = vsub.f32 %v611, %v616
    %v621 = vsub.f32 %v612, %v619
    %v622 = vmul.f32 %v620, 1.442695
    %v623 = vpow.pop %v622
    %v624 = vmul.f32 %v621, 1.442695
    %v625 = vpow.pop %v624
    %v626 = vsel %vm613, %v623, 0.0
    %627 = vadd.xlane.f32.xlu0 %v626
    %v628 = vpop.xlane.xlu0 %627
    %v629 = vsel %vm613, %v625, 0.0
    %630 = vadd.xlane.f32.xlu0 %v629
    %v631 = vpop.xlane.xlu0 %630
    %v632 = vrcp.pop %v628
    %v633 = vrcp.pop %v631
    %v634 = vmul.f32 %v623, %v632
    %v635 = vmul.f32 %v625, %v633
    %v636 = vpack.c.bf16 %v634, %v634
    %v637 = vpack.c.bf16 %v635, %v635
    %v638 = vpack.c.bf16 %v492, %v492
    %v639 = vpack.c.bf16 %v496, %v496
    %v641 = vsel %vm613, %v636, 0
    %vm643 = vcmask 1043456
    %v645 = vsel %vm643, %v638, 0
    %647 = vmatprep.subr.bf16.mxu0 0
    %648 = vmatpush1.bf16.msra.mxu0 %v645
    %649 = vmatprep.subr.bf16.mxu0 0
    %650 = vmatpush1.bf16.msra.mxu0 0
    %651 = vmatprep.subr.bf16.mxu0 0
    %652 = vmatpush1.bf16.msra.mxu0 0
    %653 = vmatprep.subr.bf16.mxu0 0
    %654 = vmatpush1.bf16.msra.mxu0 0
    %655 = vmatprep.subr.bf16.mxu0 0
    %656 = vmatpush1.bf16.msra.mxu0 0
    %657 = vmatprep.subr.bf16.mxu0 0
    %658 = vmatpush1.bf16.msra.mxu0 0
    %659 = vmatprep.subr.bf16.mxu0 0
    %660 = vmatpush1.bf16.msra.mxu0 0
    %661 = vmatprep.subr.bf16.mxu0 0
    %662 = vmatpush1.bf16.msra.mxu0 0
    %663 = vmatprep.subr.bf16.mxu0 0
    %664 = vmatpush1.bf16.msra.mxu0 0
    %665 = vmatprep.subr.bf16.mxu0 0
    %666 = vmatpush1.bf16.msra.mxu0 0
    %667 = vmatprep.subr.bf16.mxu0 0
    %668 = vmatpush1.bf16.msra.mxu0 0
    %669 = vmatprep.subr.bf16.mxu0 0
    %670 = vmatpush1.bf16.msra.mxu0 0
    %671 = vmatprep.subr.bf16.mxu0 0
    %672 = vmatpush1.bf16.msra.mxu0 0
    %673 = vmatprep.subr.bf16.mxu0 0
    %674 = vmatpush1.bf16.msra.mxu0 0
    %675 = vmatprep.subr.bf16.mxu0 0
    %676 = vmatpush1.bf16.msra.mxu0 0
    %677 = vmatprep.subr.bf16.mxu0 0
    %678 = vmatpush1.bf16.msra.mxu0 0
    %679 = vmatprep.mubr.bf16.mxu0 0
    %680 = vmatmul.mubr.bf16.gmra.mrb[0].mxu0 %v641
    %v681 = vpop.f32.mrb[0].mxu0
    %v682 = vadd.f32 0.0, %v681
    %v683 = vpop.f32.mrb[0].mxu0
    %v684 = vpop.f32.mrb[0].mxu0
    %v685 = vpop.f32.mrb[0].mxu0
    %686 = vdwg.mxu0
    %v688 = vsel %vm613, %v637, 0
    %v691 = vsel %vm643, %v639, 0
    %693 = vmatprep.subr.bf16.mxu0 0
    %694 = vmatpush1.bf16.msra.mxu0 %v691
    %695 = vmatprep.subr.bf16.mxu0 0
    %696 = vmatpush1.bf16.msra.mxu0 0
    %697 = vmatprep.subr.bf16.mxu0 0
    %698 = vmatpush1.bf16.msra.mxu0 0
    %699 = vmatprep.subr.bf16.mxu0 0
    %700 = vmatpush1.bf16.msra.mxu0 0
    %701 = vmatprep.subr.bf16.mxu0 0
    %702 = vmatpush1.bf16.msra.mxu0 0
    %703 = vmatprep.subr.bf16.mxu0 0
    %704 = vmatpush1.bf16.msra.mxu0 0
    %705 = vmatprep.subr.bf16.mxu0 0
    %706 = vmatpush1.bf16.msra.mxu0 0
    %707 = vmatprep.subr.bf16.mxu0 0
    %708 = vmatpush1.bf16.msra.mxu0 0
    %709 = vmatprep.subr.bf16.mxu0 0
    %710 = vmatpush1.bf16.msra.mxu0 0
    %711 = vmatprep.subr.bf16.mxu0 0
    %712 = vmatpush1.bf16.msra.mxu0 0
    %713 = vmatprep.subr.bf16.mxu0 0
    %714 = vmatpush1.bf16.msra.mxu0 0
    %715 = vmatprep.subr.bf16.mxu0 0
    %716 = vmatpush1.bf16.msra.mxu0 0
    %717 = vmatprep.subr.bf16.mxu0 0
    %718 = vmatpush1.bf16.msra.mxu0 0
    %719 = vmatprep.subr.bf16.mxu0 0
    %720 = vmatpush1.bf16.msra.mxu0 0
    %721 = vmatprep.subr.bf16.mxu0 0
    %722 = vmatpush1.bf16.msra.mxu0 0
    %723 = vmatprep.subr.bf16.mxu0 0
    %724 = vmatpush1.bf16.msra.mxu0 0
    %725 = vmatprep.mubr.bf16.mxu0 0
    %726 = vmatmul.mubr.bf16.gmra.mrb[0].mxu0 %v688
    %v727 = vpop.f32.mrb[0].mxu0
    %v728 = vadd.f32 0.0, %v727
    %v729 = vpop.f32.mrb[0].mxu0
    %v730 = vpop.f32.mrb[0].mxu0
    %v731 = vpop.f32.mrb[0].mxu0
    %732 = vdwg.mxu0
    %v733 = vpack.c.bf16 %v728, %v682
    %v734 = vld [vmem:[%s10] sm:$0xf]
    %v735 = vld [vmem:[%s10 + $0x4] sm:$0xf]
    %v736 = vld [vmem:[%s10 + $0x8] sm:$0xf]
    %v737 = vld [vmem:[%s10 + $0xc] sm:$0xf]
    %738 = vrot.lane.b32.xlu0 %v498, 96
    %v739 = vpop.permute.xlu0 %738
    %740 = vrot.lane.b32.xlu0 %v498, 32
    %v741 = vpop.permute.xlu0 %740
    %v743 = vsel %vm503, %v739, 0
    %v746 = vsel %vm503, %v741, 0
    %748 = vmatprep.subr.bf16.mxu0 0
    %749 = vmatpush1.bf16.xpose.msra.mxu0 %v746
    %750 = vmatprep.subr.bf16.mxu0 0
    %751 = vmatpush1.bf16.xpose.msra.mxu0 0
    %752 = vmatprep.subr.bf16.mxu0 0
    %753 = vmatpush1.bf16.xpose.msra.mxu0 0
    %754 = vmatprep.subr.bf16.mxu0 0
    %755 = vmatpush1.bf16.xpose.msra.mxu0 0
    %756 = vmatprep.subr.bf16.mxu0 0
    %757 = vmatpush1.bf16.xpose.msra.mxu0 0
    %758 = vmatprep.subr.bf16.mxu0 0
    %759 = vmatpush1.bf16.xpose.msra.mxu0 0
    %760 = vmatprep.subr.bf16.mxu0 0
    %761 = vmatpush1.bf16.xpose.msra.mxu0 0
    %762 = vmatprep.subr.bf16.mxu0 0
    %763 = vmatpush1.bf16.xpose.msra.mxu0 0
    %764 = vmatprep.subr.bf16.mxu0 0
    %765 = vmatpush1.bf16.xpose.msra.mxu0 0
    %766 = vmatprep.subr.bf16.mxu0 0
    %767 = vmatpush1.bf16.xpose.msra.mxu0 0
    %768 = vmatprep.subr.bf16.mxu0 0
    %769 = vmatpush1.bf16.xpose.msra.mxu0 0
    %770 = vmatprep.subr.bf16.mxu0 0
    %771 = vmatpush1.bf16.xpose.msra.mxu0 0
    %772 = vmatprep.subr.bf16.mxu0 0
    %773 = vmatpush1.bf16.xpose.msra.mxu0 0
    %774 = vmatprep.subr.bf16.mxu0 0
    %775 = vmatpush1.bf16.xpose.msra.mxu0 0
    %776 = vmatprep.subr.bf16.mxu0 0
    %777 = vmatpush1.bf16.xpose.msra.mxu0 0
    %778 = vmatprep.subr.bf16.mxu0 0
    %779 = vmatpush1.bf16.xpose.msra.mxu0 0
    %780 = vmatprep.mubr.bf16.mxu0 0
    %781 = vmatmul.mubr.bf16.gmra.mrb[0].mxu0 %v743
    %v782 = vpop.f32.mrb[0].mxu0
    %v783 = vadd.f32 0.0, %v782
    %v784 = vpop.f32.mrb[0].mxu0
    %v785 = vpop.f32.mrb[0].mxu0
    %v786 = vpop.f32.mrb[0].mxu0
    %787 = vdwg.mxu0
    %788 = vrot.lane.b32.xlu0 %v499, 96
    %v789 = vpop.permute.xlu0 %788
    %790 = vrot.lane.b32.xlu0 %v499, 32
    %v791 = vpop.permute.xlu0 %790
    %v793 = vsel %vm503, %v789, 0
    %v796 = vsel %vm503, %v791, 0
    %798 = vmatprep.subr.bf16.mxu0 0
    %799 = vmatpush1.bf16.xpose.msra.mxu0 %v796
    %800 = vmatprep.subr.bf16.mxu0 0
    %801 = vmatpush1.bf16.xpose.msra.mxu0 0
    %802 = vmatprep.subr.bf16.mxu0 0
    %803 = vmatpush1.bf16.xpose.msra.mxu0 0
    %804 = vmatprep.subr.bf16.mxu0 0
    %805 = vmatpush1.bf16.xpose.msra.mxu0 0
    %806 = vmatprep.subr.bf16.mxu0 0
    %807 = vmatpush1.bf16.xpose.msra.mxu0 0
    %808 = vmatprep.subr.bf16.mxu0 0
    %809 = vmatpush1.bf16.xpose.msra.mxu0 0
    %810 = vmatprep.subr.bf16.mxu0 0
    %811 = vmatpush1.bf16.xpose.msra.mxu0 0
    %812 = vmatprep.subr.bf16.mxu0 0
    %813 = vmatpush1.bf16.xpose.msra.mxu0 0
    %814 = vmatprep.subr.bf16.mxu0 0
    %815 = vmatpush1.bf16.xpose.msra.mxu0 0
    %816 = vmatprep.subr.bf16.mxu0 0
    %817 = vmatpush1.bf16.xpose.msra.mxu0 0
    %818 = vmatprep.subr.bf16.mxu0 0
    %819 = vmatpush1.bf16.xpose.msra.mxu0 0
    %820 = vmatprep.subr.bf16.mxu0 0
    %821 = vmatpush1.bf16.xpose.msra.mxu0 0
    %822 = vmatprep.subr.bf16.mxu0 0
    %823 = vmatpush1.bf16.xpose.msra.mxu0 0
    %824 = vmatprep.subr.bf16.mxu0 0
    %825 = vmatpush1.bf16.xpose.msra.mxu0 0
    %826 = vmatprep.subr.bf16.mxu0 0
    %827 = vmatpush1.bf16.xpose.msra.mxu0 0
    %828 = vmatprep.subr.bf16.mxu0 0
    %829 = vmatpush1.bf16.xpose.msra.mxu0 0
    %830 = vmatprep.mubr.bf16.mxu0 0
    %831 = vmatmul.mubr.bf16.gmra.mrb[0].mxu0 %v793
    %v832 = vpop.f32.mrb[0].mxu0
    %v833 = vadd.f32 0.0, %v832
    %v834 = vpop.f32.mrb[0].mxu0
    %v835 = vpop.f32.mrb[0].mxu0
    %v836 = vpop.f32.mrb[0].mxu0
    %837 = vdwg.mxu0
    %v838 = vmul.f32 %v783, 0.17677669
    %v839 = vmul.f32 %v833, 0.17677669
    %v840 = vadd.f32 %v838, %v604
    %v841 = vadd.f32 %v839, %v608
    %v842 = vsel %vm613, %v840, -inf
    %843 = vmax.xlane.f32.xlu0 %v842
    %v844 = vpop.xlane.xlu0 %843
    %v845 = vsel %vm613, %v841, -inf
    %846 = vmax.xlane.f32.xlu0 %v845
    %v847 = vpop.xlane.xlu0 %846
    %v848 = vsub.f32 %v840, %v844
    %v849 = vsub.f32 %v841, %v847
    %v850 = vmul.f32 %v848, 1.442695
    %v851 = vpow.pop %v850
    %v852 = vmul.f32 %v849, 1.442695
    %v853 = vpow.pop %v852
    %v854 = vsel %vm613, %v851, 0.0
    %855 = vadd.xlane.f32.xlu0 %v854
    %v856 = vpop.xlane.xlu0 %855
    %v857 = vsel %vm613, %v853, 0.0
    %858 = vadd.xlane.f32.xlu0 %v857
    %v859 = vpop.xlane.xlu0 %858
    %v860 = vrcp.pop %v856
    %v861 = vrcp.pop %v859
    %v862 = vmul.f32 %v851, %v860
    %v863 = vmul.f32 %v853, %v861
    %v864 = vpack.c.bf16 %v862, %v862
    %v865 = vpack.c.bf16 %v863, %v863
    %867 = vrot.lane.b32.xlu0 %v638, 96
    %v868 = vpop.permute.xlu0 %867
    %v870 = vsel %vm613, %v864, 0
    %v873 = vsel %vm643, %v868, 0
    %875 = vmatprep.subr.bf16.mxu0 0
    %876 = vmatpush1.bf16.msra.mxu0 %v873
    %877 = vmatprep.subr.bf16.mxu0 0
    %878 = vmatpush1.bf16.msra.mxu0 0
    %879 = vmatprep.subr.bf16.mxu0 0
    %880 = vmatpush1.bf16.msra.mxu0 0
    %881 = vmatprep.subr.bf16.mxu0 0
    %882 = vmatpush1.bf16.msra.mxu0 0
    %883 = vmatprep.subr.bf16.mxu0 0
    %884 = vmatpush1.bf16.msra.mxu0 0
    %885 = vmatprep.subr.bf16.mxu0 0
    %886 = vmatpush1.bf16.msra.mxu0 0
    %887 = vmatprep.subr.bf16.mxu0 0
    %888 = vmatpush1.bf16.msra.mxu0 0
    %889 = vmatprep.subr.bf16.mxu0 0
    %890 = vmatpush1.bf16.msra.mxu0 0
    %891 = vmatprep.subr.bf16.mxu0 0
    %892 = vmatpush1.bf16.msra.mxu0 0
    %893 = vmatprep.subr.bf16.mxu0 0
    %894 = vmatpush1.bf16.msra.mxu0 0
    %895 = vmatprep.subr.bf16.mxu0 0
    %896 = vmatpush1.bf16.msra.mxu0 0
    %897 = vmatprep.subr.bf16.mxu0 0
    %898 = vmatpush1.bf16.msra.mxu0 0
    %899 = vmatprep.subr.bf16.mxu0 0
    %900 = vmatpush1.bf16.msra.mxu0 0
    %901 = vmatprep.subr.bf16.mxu0 0
    %902 = vmatpush1.bf16.msra.mxu0 0
    %903 = vmatprep.subr.bf16.mxu0 0
    %904 = vmatpush1.bf16.msra.mxu0 0
    %905 = vmatprep.subr.bf16.mxu0 0
    %906 = vmatpush1.bf16.msra.mxu0 0
    %907 = vmatprep.mubr.bf16.mxu0 0
    %908 = vmatmul.mubr.bf16.gmra.mrb[0].mxu0 %v870
    %v909 = vpop.f32.mrb[0].mxu0
    %v910 = vadd.f32 0.0, %v909
    %v911 = vpop.f32.mrb[0].mxu0
    %v912 = vpop.f32.mrb[0].mxu0
    %v913 = vpop.f32.mrb[0].mxu0
    %914 = vdwg.mxu0
    %916 = vrot.lane.b32.xlu0 %v639, 96
    %v917 = vpop.permute.xlu0 %916
    %v919 = vsel %vm613, %v865, 0
    %v922 = vsel %vm643, %v917, 0
    %924 = vmatprep.subr.bf16.mxu0 0
    %925 = vmatpush1.bf16.msra.mxu0 %v922
    %926 = vmatprep.subr.bf16.mxu0 0
    %927 = vmatpush1.bf16.msra.mxu0 0
    %928 = vmatprep.subr.bf16.mxu0 0
    %929 = vmatpush1.bf16.msra.mxu0 0
    %930 = vmatprep.subr.bf16.mxu0 0
    %931 = vmatpush1.bf16.msra.mxu0 0
    %932 = vmatprep.subr.bf16.mxu0 0
    %933 = vmatpush1.bf16.msra.mxu0 0
    %934 = vmatprep.subr.bf16.mxu0 0
    %935 = vmatpush1.bf16.msra.mxu0 0
    %936 = vmatprep.subr.bf16.mxu0 0
    %937 = vmatpush1.bf16.msra.mxu0 0
    %938 = vmatprep.subr.bf16.mxu0 0
    %939 = vmatpush1.bf16.msra.mxu0 0
    %940 = vmatprep.subr.bf16.mxu0 0
    %941 = vmatpush1.bf16.msra.mxu0 0
    %942 = vmatprep.subr.bf16.mxu0 0
    %943 = vmatpush1.bf16.msra.mxu0 0
    %944 = vmatprep.subr.bf16.mxu0 0
    %945 = vmatpush1.bf16.msra.mxu0 0
    %946 = vmatprep.subr.bf16.mxu0 0
    %947 = vmatpush1.bf16.msra.mxu0 0
    %948 = vmatprep.subr.bf16.mxu0 0
    %949 = vmatpush1.bf16.msra.mxu0 0
    %950 = vmatprep.subr.bf16.mxu0 0
    %951 = vmatpush1.bf16.msra.mxu0 0
    %952 = vmatprep.subr.bf16.mxu0 0
    %953 = vmatpush1.bf16.msra.mxu0 0
    %954 = vmatprep.subr.bf16.mxu0 0
    %955 = vmatpush1.bf16.msra.mxu0 0
    %956 = vmatprep.mubr.bf16.mxu0 0
    %957 = vmatmul.mubr.bf16.gmra.mrb[0].mxu0 %v919
    %v958 = vpop.f32.mrb[0].mxu0
    %v959 = vadd.f32 0.0, %v958
    %v960 = vpop.f32.mrb[0].mxu0
    %v961 = vpop.f32.mrb[0].mxu0
    %v962 = vpop.f32.mrb[0].mxu0
    %963 = vdwg.mxu0
    %v964 = vpack.c.bf16 %v959, %v910
    %s965 = scalar_lea.vmem %s10, 16
    %v966 = vld [vmem:[%s965] sm:$0xf]
    %v967 = vld [vmem:[%s965 + $0x4] sm:$0xf]
    %v968 = vld [vmem:[%s965 + $0x8] sm:$0xf]
    %v969 = vld [vmem:[%s965 + $0xc] sm:$0xf]
    %v974 = vunpack.c.l.b16 %v966
    %v975 = vunpack.c.l.b16 %v967
    %v976 = vunpack.c.l.b16 %v968
    %v977 = vunpack.c.l.b16 %v969
    %v978 = vpack.c.b16 %v975, %v974
    %v979 = vpack.c.b16 %v977, %v976
    %v983 = vsel %vm503, %v964, 0
    %985 = vmatprep.subr.bf16.mxu0 0
    %986 = vmatpush1.bf16.msra.mxu0 %v978
    %987 = vmatprep.subr.bf16.mxu0 0
    %988 = vmatpush1.bf16.msra.mxu0 %v979
    %989 = vmatprep.subr.bf16.mxu0 0
    %990 = vmatpush1.bf16.msra.mxu0 0
    %991 = vmatprep.subr.bf16.mxu0 0
    %992 = vmatpush1.bf16.msra.mxu0 0
    %993 = vmatprep.subr.bf16.mxu0 0
    %994 = vmatpush1.bf16.msra.mxu0 0
    %995 = vmatprep.subr.bf16.mxu0 0
    %996 = vmatpush1.bf16.msra.mxu0 0
    %997 = vmatprep.subr.bf16.mxu0 0
    %998 = vmatpush1.bf16.msra.mxu0 0
    %999 = vmatprep.subr.bf16.mxu0 0
    %1000 = vmatpush1.bf16.msra.mxu0 0
    %1001 = vmatprep.subr.bf16.mxu0 0
    %1002 = vmatpush1.bf16.msra.mxu0 0
    %1003 = vmatprep.subr.bf16.mxu0 0
    %1004 = vmatpush1.bf16.msra.mxu0 0
    %1005 = vmatprep.subr.bf16.mxu0 0
    %1006 = vmatpush1.bf16.msra.mxu0 0
    %1007 = vmatprep.subr.bf16.mxu0 0
    %1008 = vmatpush1.bf16.msra.mxu0 0
    %1009 = vmatprep.subr.bf16.mxu0 0
    %1010 = vmatpush1.bf16.msra.mxu0 0
    %1011 = vmatprep.subr.bf16.mxu0 0
    %1012 = vmatpush1.bf16.msra.mxu0 0
    %1013 = vmatprep.subr.bf16.mxu0 0
    %1014 = vmatpush1.bf16.msra.mxu0 0
    %1015 = vmatprep.subr.bf16.mxu0 0
    %1016 = vmatpush1.bf16.msra.mxu0 0
    %1017 = vmatprep.mubr.bf16.mxu0 0
    %1018 = vmatmul.mubr.bf16.gmra.mrb[0].mxu0 %v983
    %v1019 = vpop.f32.mrb[0].mxu0
    %v1020 = vadd.f32 0.0, %v1019
    %v1021 = vpop.f32.mrb[0].mxu0
    %v1022 = vpop.f32.mrb[0].mxu0
    %v1023 = vadd.f32 0.0, %v1022
    %v1024 = vpop.f32.mrb[0].mxu0
    %1025 = vdwg.mxu0
    %v1030 = vunpack.c.l.b16 %v734
    %v1031 = vunpack.c.l.b16 %v735
    %v1032 = vunpack.c.l.b16 %v736
    %v1033 = vunpack.c.l.b16 %v737
    %v1034 = vpack.c.b16 %v1031, %v1030
    %v1035 = vpack.c.b16 %v1033, %v1032
    %v1039 = vsel %vm503, %v733, 0
    %1041 = vmatprep.subr.bf16.mxu0 0
    %1042 = vmatpush1.bf16.msra.mxu0 %v1034
    %1043 = vmatprep.subr.bf16.mxu0 0
    %1044 = vmatpush1.bf16.msra.mxu0 %v1035
    %1045 = vmatprep.subr.bf16.mxu0 0
    %1046 = vmatpush1.bf16.msra.mxu0 0
    %1047 = vmatprep.subr.bf16.mxu0 0
    %1048 = vmatpush1.bf16.msra.mxu0 0
    %1049 = vmatprep.subr.bf16.mxu0 0
    %1050 = vmatpush1.bf16.msra.mxu0 0
    %1051 = vmatprep.subr.bf16.mxu0 0
    %1052 = vmatpush1.bf16.msra.mxu0 0
    %1053 = vmatprep.subr.bf16.mxu0 0
    %1054 = vmatpush1.bf16.msra.mxu0 0
    %1055 = vmatprep.subr.bf16.mxu0 0
    %1056 = vmatpush1.bf16.msra.mxu0 0
    %1057 = vmatprep.subr.bf16.mxu0 0
    %1058 = vmatpush1.bf16.msra.mxu0 0
    %1059 = vmatprep.subr.bf16.mxu0 0
    %1060 = vmatpush1.bf16.msra.mxu0 0
    %1061 = vmatprep.subr.bf16.mxu0 0
    %1062 = vmatpush1.bf16.msra.mxu0 0
    %1063 = vmatprep.subr.bf16.mxu0 0
    %1064 = vmatpush1.bf16.msra.mxu0 0
    %1065 = vmatprep.subr.bf16.mxu0 0
    %1066 = vmatpush1.bf16.msra.mxu0 0
    %1067 = vmatprep.subr.bf16.mxu0 0
    %1068 = vmatpush1.bf16.msra.mxu0 0
    %1069 = vmatprep.subr.bf16.mxu0 0
    %1070 = vmatpush1.bf16.msra.mxu0 0
    %1071 = vmatprep.subr.bf16.mxu0 0
    %1072 = vmatpush1.bf16.msra.mxu0 0
    %1073 = vmatprep.mubr.bf16.mxu0 0
    %1074 = vmatmul.mubr.bf16.gmra.mrb[0].mxu0 %v1039
    %v1075 = vpop.f32.mrb[0].mxu0
    %v1076 = vadd.f32 %v1020, %v1075
    %v1077 = vpop.f32.mrb[0].mxu0
    %v1078 = vpop.f32.mrb[0].mxu0
    %v1079 = vadd.f32 %v1023, %v1078
    %v1080 = vpop.f32.mrb[0].mxu0
    %1081 = vdwg.mxu0
    %v1082 = vld [vmem:[#allocation15] sm:$0x1]
    %v1084 = vlaneseq
    %v1085 = vshrl.u32 %v1084, 7
    %v1086 = vsub.s32 0, %v1085
    %v1087 = vrot.slane %v1082, %v1086
    %v1089 = vadd.f32 %v1076, %v1087
    %v1090 = vadd.f32 %v1079, %v1087
    %v1091 = vadd.f32 %v319, %v1089
    %v1092 = vadd.f32 %v320, %v1090
    %v1093 = vld [vmem:[#allocation17] sm:$0x1]
    %v1094 = vld [vmem:[#allocation18] sm:$0x1]
    %v1095 = vsel %vm277, %v1091, 0.0
    %1096 = vadd.xlane.f32.xlu0 %v1095
    %v1097 = vpop.xlane.xlu0 %1096
    %v1098 = vsel %vm277, %v1092, 0.0
    %1099 = vadd.xlane.f32.xlu0 %v1098
    %v1100 = vpop.xlane.xlu0 %1099
    %v1101 = vmul.f32 %v1097, %v284
    %v1102 = vmul.f32 %v1100, %v284
    %v1103 = vsub.f32 %v1091, %v1101
    %v1104 = vsub.f32 %v1092, %v1102
    %v1105 = vmul.f32 %v1103, %v1103
    %v1106 = vmul.f32 %v1104, %v1104
    %v1107 = vsel %vm277, %v1105, 0.0
    %1108 = vadd.xlane.f32.xlu0 %v1107
    %v1109 = vpop.xlane.xlu0 %1108
    %v1110 = vsel %vm277, %v1106, 0.0
    %1111 = vadd.xlane.f32.xlu0 %v1110
    %v1112 = vpop.xlane.xlu0 %1111
    %v1113 = vmul.f32 %v1109, %v284
    %v1114 = vmul.f32 %v1112, %v284
    %v1115 = vadd.f32 %v1113, 1e-05
    %v1116 = vadd.f32 %v1114, 1e-05
    %v1117 = vrsqrt.pop %v1115
    %v1118 = vrsqrt.pop %v1116
    %v1119 = vmul.f32 %v1103, %v1117
    %v1120 = vmul.f32 %v1104, %v1118
    %v1122 = vlaneseq
    %v1123 = vshrl.u32 %v1122, 7
    %v1124 = vsub.s32 0, %v1123
    %v1125 = vrot.slane %v1093, %v1124
    %v1127 = vmul.f32 %v1119, %v1125
    %v1128 = vmul.f32 %v1120, %v1125
    %v1130 = vlaneseq
    %v1131 = vshrl.u32 %v1130, 7
    %v1132 = vsub.s32 0, %v1131
    %v1133 = vrot.slane %v1094, %v1132
    %v1135 = vadd.f32 %v1127, %v1133
    %v1136 = vadd.f32 %v1128, %v1133
    %v1137 = vpack.c.bf16 %v1136, %v1135
    %v1138 = vld [vmem:[%s14] sm:$0xf]
    %v1139 = vld [vmem:[%s14 + $0x4] sm:$0xf]
    %v1140 = vld [vmem:[%s14 + $0x8] sm:$0xf]
    %v1141 = vld [vmem:[%s14 + $0xc] sm:$0xf]
    %v1142 = vld [vmem:[%s14 + $0x10] sm:$0xf]
    %v1143 = vld [vmem:[%s14 + $0x14] sm:$0xf]
    %v1144 = vld [vmem:[%s14 + $0x18] sm:$0xf]
    %v1145 = vld [vmem:[%s14 + $0x1c] sm:$0xf]
    %v1146 = vld [vmem:[#allocation20] sm:$0x1]
    %v1148 = vlaneseq
    %v1149 = vshrl.u32 %v1148, 7
    %v1150 = vsub.s32 0, %v1149
    %v1151 = vrot.slane %v1146, %v1150
    %v1161 = vunpack.c.l.b16 %v1138
    %v1162 = vunpack.c.l.b16 %v1139
    %v1163 = vunpack.c.l.b16 %v1140
    %v1164 = vunpack.c.l.b16 %v1141
    %v1165 = vunpack.c.l.b16 %v1142
    %v1166 = vunpack.c.l.b16 %v1143
    %v1167 = vunpack.c.l.b16 %v1144
    %v1168 = vunpack.c.l.b16 %v1145
    %v1169 = vpack.c.b16 %v1162, %v1161
    %v1170 = vpack.c.b16 %v1164, %v1163
    %v1171 = vpack.c.b16 %v1166, %v1165
    %v1172 = vpack.c.b16 %v1168, %v1167
    %v1178 = vsel %vm277, %v1137, 0
    %1180 = vmatprep.subr.bf16.mxu0 0
    %1181 = vmatpush1.bf16.msra.mxu0 %v1169
    %1182 = vmatprep.subr.bf16.mxu0 0
    %1183 = vmatpush1.bf16.msra.mxu0 %v1170
    %1184 = vmatprep.subr.bf16.mxu0 0
    %1185 = vmatpush1.bf16.msra.mxu0 %v1171
    %1186 = vmatprep.subr.bf16.mxu0 0
    %1187 = vmatpush1.bf16.msra.mxu0 %v1172
    %1188 = vmatprep.subr.bf16.mxu0 0
    %1189 = vmatpush1.bf16.msra.mxu0 0
    %1190 = vmatprep.subr.bf16.mxu0 0
    %1191 = vmatpush1.bf16.msra.mxu0 0
    %1192 = vmatprep.subr.bf16.mxu0 0
    %1193 = vmatpush1.bf16.msra.mxu0 0
    %1194 = vmatprep.subr.bf16.mxu0 0
    %1195 = vmatpush1.bf16.msra.mxu0 0
    %1196 = vmatprep.subr.bf16.mxu0 0
    %1197 = vmatpush1.bf16.msra.mxu0 0
    %1198 = vmatprep.subr.bf16.mxu0 0
    %1199 = vmatpush1.bf16.msra.mxu0 0
    %1200 = vmatprep.subr.bf16.mxu0 0
    %1201 = vmatpush1.bf16.msra.mxu0 0
    %1202 = vmatprep.subr.bf16.mxu0 0
    %1203 = vmatpush1.bf16.msra.mxu0 0
    %1204 = vmatprep.subr.bf16.mxu0 0
    %1205 = vmatpush1.bf16.msra.mxu0 0
    %1206 = vmatprep.subr.bf16.mxu0 0
    %1207 = vmatpush1.bf16.msra.mxu0 0
    %1208 = vmatprep.subr.bf16.mxu0 0
    %1209 = vmatpush1.bf16.msra.mxu0 0
    %1210 = vmatprep.subr.bf16.mxu0 0
    %1211 = vmatpush1.bf16.msra.mxu0 0
    %1212 = vmatprep.mubr.bf16.mxu0 0
    %1213 = vmatmul.mubr.bf16.gmra.mrb[0].mxu0 %v1178
    %v1214 = vpop.f32.mrb[0].mxu0
    %v1215 = vadd.f32 %v1151, %v1214
    %v1216 = vpop.f32.mrb[0].mxu0
    %v1217 = vpop.f32.mrb[0].mxu0
    %v1218 = vadd.f32 %v1151, %v1217
    %v1219 = vpop.f32.mrb[0].mxu0
    %1220 = vdwg.mxu0
    %v1221 = vmul.f32 %v1215, %v1215
    %v1222 = vmul.f32 %v1218, %v1218
    %v1223 = vmul.f32 %v1215, %v1221
    %v1224 = vmul.f32 %v1218, %v1222
    %v1225 = vmul.f32 %v1223, 0.044715
    %v1226 = vmul.f32 %v1224, 0.044715
    %v1227 = vadd.f32 %v1215, %v1225
    %v1228 = vadd.f32 %v1218, %v1226
    %v1229 = vmul.f32 %v1227, 0.7978846
    %v1230 = vmul.f32 %v1228, 0.7978846
    %v1231 = vtanh.pop %v1229
    %v1232 = vtanh.pop %v1230
    %v1233 = vadd.f32 %v1231, 1.0
    %v1234 = vadd.f32 %v1232, 1.0
    %v1235 = vmul.f32 %v1233, 0.5
    %v1236 = vmul.f32 %v1234, 0.5
    %v1237 = vmul.f32 %v1215, %v1235
    %v1238 = vmul.f32 %v1218, %v1236
    %v1239 = vpack.c.bf16 %v1238, %v1237
    %v1240 = vld [vmem:[%s16] sm:$0xf]
    %v1241 = vld [vmem:[%s16 + $0x4] sm:$0xf]
    %v1242 = vld [vmem:[%s16 + $0x8] sm:$0xf]
    %v1243 = vld [vmem:[%s16 + $0xc] sm:$0xf]
    %v1244 = vld [vmem:[%s16 + $0x10] sm:$0xf]
    %v1245 = vld [vmem:[%s16 + $0x14] sm:$0xf]
    %v1246 = vld [vmem:[%s16 + $0x18] sm:$0xf]
    %v1247 = vld [vmem:[%s16 + $0x1c] sm:$0xf]
    %v1248 = vld [vmem:[%s16 + $0x20] sm:$0xf]
    %v1249 = vld [vmem:[%s16 + $0x24] sm:$0xf]
    %v1250 = vld [vmem:[%s16 + $0x28] sm:$0xf]
    %v1251 = vld [vmem:[%s16 + $0x2c] sm:$0xf]
    %v1252 = vld [vmem:[%s16 + $0x30] sm:$0xf]
    %v1253 = vld [vmem:[%s16 + $0x34] sm:$0xf]
    %v1254 = vld [vmem:[%s16 + $0x38] sm:$0xf]
    %v1255 = vld [vmem:[%s16 + $0x3c] sm:$0xf]
    %v1256 = vld [vmem:[#allocation21] sm:$0x1]
    %v1258 = vlaneseq
    %v1259 = vshrl.u32 %v1258, 7
    %v1260 = vsub.s32 0, %v1259
    %v1261 = vrot.slane %v1256, %v1260
    %v1279 = vunpack.c.l.b16 %v1240
    %v1280 = vunpack.c.l.b16 %v1241
    %v1281 = vunpack.c.l.b16 %v1242
    %v1282 = vunpack.c.l.b16 %v1243
    %v1283 = vunpack.c.l.b16 %v1244
    %v1284 = vunpack.c.l.b16 %v1245
    %v1285 = vunpack.c.l.b16 %v1246
    %v1286 = vunpack.c.l.b16 %v1247
    %v1287 = vunpack.c.l.b16 %v1248
    %v1288 = vunpack.c.l.b16 %v1249
    %v1289 = vunpack.c.l.b16 %v1250
    %v1290 = vunpack.c.l.b16 %v1251
    %v1291 = vunpack.c.l.b16 %v1252
    %v1292 = vunpack.c.l.b16 %v1253
    %v1293 = vunpack.c.l.b16 %v1254
    %v1294 = vunpack.c.l.b16 %v1255
    %v1295 = vpack.c.b16 %v1280, %v1279
    %v1296 = vpack.c.b16 %v1282, %v1281
    %v1297 = vpack.c.b16 %v1284, %v1283
    %v1298 = vpack.c.b16 %v1286, %v1285
    %v1299 = vpack.c.b16 %v1288, %v1287
    %v1300 = vpack.c.b16 %v1290, %v1289
    %v1301 = vpack.c.b16 %v1292, %v1291
    %v1302 = vpack.c.b16 %v1294, %v1293
    %1311 = vmatprep.subr.bf16.mxu0 0
    %1312 = vmatpush1.bf16.msra.mxu0 %v1295
    %1313 = vmatprep.subr.bf16.mxu0 0
    %1314 = vmatpush1.bf16.msra.mxu0 %v1296
    %1315 = vmatprep.subr.bf16.mxu0 0
    %1316 = vmatpush1.bf16.msra.mxu0 %v1297
    %1317 = vmatprep.subr.bf16.mxu0 0
    %1318 = vmatpush1.bf16.msra.mxu0 %v1298
    %1319 = vmatprep.subr.bf16.mxu0 0
    %1320 = vmatpush1.bf16.msra.mxu0 %v1299
    %1321 = vmatprep.subr.bf16.mxu0 0
    %1322 = vmatpush1.bf16.msra.mxu0 %v1300
    %1323 = vmatprep.subr.bf16.mxu0 0
    %1324 = vmatpush1.bf16.msra.mxu0 %v1301
    %1325 = vmatprep.subr.bf16.mxu0 0
    %1326 = vmatpush1.bf16.msra.mxu0 %v1302
    %1327 = vmatprep.subr.bf16.mxu0 0
    %1328 = vmatpush1.bf16.msra.mxu0 0
    %1329 = vmatprep.subr.bf16.mxu0 0
    %1330 = vmatpush1.bf16.msra.mxu0 0
    %1331 = vmatprep.subr.bf16.mxu0 0
    %1332 = vmatpush1.bf16.msra.mxu0 0
    %1333 = vmatprep.subr.bf16.mxu0 0
    %1334 = vmatpush1.bf16.msra.mxu0 0
    %1335 = vmatprep.subr.bf16.mxu0 0
    %1336 = vmatpush1.bf16.msra.mxu0 0
    %1337 = vmatprep.subr.bf16.mxu0 0
    %1338 = vmatpush1.bf16.msra.mxu0 0
    %1339 = vmatprep.subr.bf16.mxu0 0
    %1340 = vmatpush1.bf16.msra.mxu0 0
    %1341 = vmatprep.subr.bf16.mxu0 0
    %1342 = vmatpush1.bf16.msra.mxu0 0
    %1343 = vmatprep.mubr.bf16.mxu0 0
    %1344 = vmatmul.mubr.bf16.gmra.mrb[0].mxu0 %v1239
    %v1345 = vpop.f32.mrb[0].mxu0
    %v1346 = vadd.f32 %v1261, %v1345
    %v1347 = vpop.f32.mrb[0].mxu0
    %v1348 = vpop.f32.mrb[0].mxu0
    %v1349 = vadd.f32 %v1261, %v1348
    %v1350 = vpop.f32.mrb[0].mxu0
    %1351 = vdwg.mxu0
    %v1352 = vadd.f32 %v1091, %v1346
    %v1353 = vadd.f32 %v1092, %v1349
    %s1354 = scalar_lea.vmem [#allocation11], 1
    %v1355 = vld [vmem:[%s1354] sm:$0x1]
    %s1356 = scalar_lea.vmem [#allocation12], 1
    %v1357 = vld [vmem:[%s1356] sm:$0x1]
    %v1358 = vsel %vm277, %v1352, 0.0
    %1359 = vadd.xlane.f32.xlu0 %v1358
    %v1360 = vpop.xlane.xlu0 %1359
    %v1361 = vsel %vm277, %v1353, 0.0
    %1362 = vadd.xlane.f32.xlu0 %v1361
    %v1363 = vpop.xlane.xlu0 %1362
    %v1364 = vmul.f32 %v1360, %v284
    %v1365 = vmul.f32 %v1363, %v284
    %v1366 = vsub.f32 %v1352, %v1364
    %v1367 = vsub.f32 %v1353, %v1365
    %v1368 = vmul.f32 %v1366, %v1366
    %v1369 = vmul.f32 %v1367, %v1367
    %v1370 = vsel %vm277, %v1368, 0.0
    %1371 = vadd.xlane.f32.xlu0 %v1370
    %v1372 = vpop.xlane.xlu0 %1371
    %v1373 = vsel %vm277, %v1369, 0.0
    %1374 = vadd.xlane.f32.xlu0 %v1373
    %v1375 = vpop.xlane.xlu0 %1374
    %v1376 = vmul.f32 %v1372, %v284
    %v1377 = vmul.f32 %v1375, %v284
    %v1378 = vadd.f32 %v1376, 1e-05
    %v1379 = vadd.f32 %v1377, 1e-05
    %v1380 = vrsqrt.pop %v1378
    %v1381 = vrsqrt.pop %v1379
    %v1382 = vmul.f32 %v1366, %v1380
    %v1383 = vmul.f32 %v1367, %v1381
    %v1385 = vlaneseq
    %v1386 = vshrl.u32 %v1385, 7
    %v1387 = vsub.s32 0, %v1386
    %v1388 = vrot.slane %v1355, %v1387
    %v1390 = vmul.f32 %v1382, %v1388
    %v1391 = vmul.f32 %v1383, %v1388
    %v1393 = vlaneseq
    %v1394 = vshrl.u32 %v1393, 7
    %v1395 = vsub.s32 0, %v1394
    %v1396 = vrot.slane %v1357, %v1395
    %v1398 = vadd.f32 %v1390, %v1396
    %v1399 = vadd.f32 %v1391, %v1396
    %v1400 = vpack.c.bf16 %v1399, %v1398
    %s1401 = scalar_lea.vmem %s8, 64
    %v1402 = vld [vmem:[%s1401] sm:$0xff]
    %v1403 = vld [vmem:[%s1401 + $0x8] sm:$0xff]
    %v1404 = vld [vmem:[%s1401 + $0x10] sm:$0xff]
    %v1405 = vld [vmem:[%s1401 + $0x18] sm:$0xff]
    %v1406 = vld [vmem:[%s1401 + $0x20] sm:$0xff]
    %v1407 = vld [vmem:[%s1401 + $0x28] sm:$0xff]
    %v1408 = vld [vmem:[%s1401 + $0x30] sm:$0xff]
    %v1409 = vld [vmem:[%s1401 + $0x38] sm:$0xff]
    %s1410 = scalar_lea.vmem [#allocation14], 2
    %v1411 = vld [vmem:[%s1410] sm:$0x3]
    %v1413 = vlaneseq
    %v1414 = vshrl.u32 %v1413, 7
    %v1415 = vsub.s32 0, %v1414
    %v1416 = vrot.slane %v1411, %v1415
    %v1417 = vlaneseq
    %v1418 = vshrl.u32 %v1417, 7
    %v1419 = vsub.s32 1, %v1418
    %v1420 = vrot.slane %v1411, %v1419
    %v1431 = vunpack.c.l.b16 %v1402
    %v1432 = vunpack.c.h.b16 %v1402
    %v1433 = vunpack.c.l.b16 %v1403
    %v1434 = vunpack.c.h.b16 %v1403
    %v1435 = vunpack.c.l.b16 %v1404
    %v1436 = vunpack.c.h.b16 %v1404
    %v1437 = vunpack.c.l.b16 %v1405
    %v1438 = vunpack.c.h.b16 %v1405
    %v1439 = vunpack.c.l.b16 %v1406
    %v1440 = vunpack.c.h.b16 %v1406
    %v1441 = vunpack.c.l.b16 %v1407
    %v1442 = vunpack.c.h.b16 %v1407
    %v1443 = vunpack.c.l.b16 %v1408
    %v1444 = vunpack.c.h.b16 %v1408
    %v1445 = vunpack.c.l.b16 %v1409
    %v1446 = vunpack.c.h.b16 %v1409
    %v1447 = vpack.c.b16 %v1433, %v1431
    %v1448 = vpack.c.b16 %v1434, %v1432
    %v1449 = vpack.c.b16 %v1437, %v1435
    %v1450 = vpack.c.b16 %v1438, %v1436
    %v1451 = vpack.c.b16 %v1441, %v1439
    %v1452 = vpack.c.b16 %v1442, %v1440
    %v1453 = vpack.c.b16 %v1445, %v1443
    %v1454 = vpack.c.b16 %v1446, %v1444
    %v1464 = vsel %vm277, %v1400, 0
    %1466 = vmatprep.subr.bf16.mxu0 %v1448
    %1467 = vmatpush1.bf16.msra.mxu0 %v1447
    %1468 = vmatprep.subr.bf16.mxu0 %v1450
    %1469 = vmatpush1.bf16.msra.mxu0 %v1449
    %1470 = vmatprep.subr.bf16.mxu0 %v1452
    %1471 = vmatpush1.bf16.msra.mxu0 %v1451
    %1472 = vmatprep.subr.bf16.mxu0 %v1454
    %1473 = vmatpush1.bf16.msra.mxu0 %v1453
    %1474 = vmatprep.subr.bf16.mxu0 0
    %1475 = vmatpush1.bf16.msra.mxu0 0
    %1476 = vmatprep.subr.bf16.mxu0 0
    %1477 = vmatpush1.bf16.msra.mxu0 0
    %1478 = vmatprep.subr.bf16.mxu0 0
    %1479 = vmatpush1.bf16.msra.mxu0 0
    %1480 = vmatprep.subr.bf16.mxu0 0
    %1481 = vmatpush1.bf16.msra.mxu0 0
    %1482 = vmatprep.subr.bf16.mxu0 0
    %1483 = vmatpush1.bf16.msra.mxu0 0
    %1484 = vmatprep.subr.bf16.mxu0 0
    %1485 = vmatpush1.bf16.msra.mxu0 0
    %1486 = vmatprep.subr.bf16.mxu0 0
    %1487 = vmatpush1.bf16.msra.mxu0 0
    %1488 = vmatprep.subr.bf16.mxu0 0
    %1489 = vmatpush1.bf16.msra.mxu0 0
    %1490 = vmatprep.subr.bf16.mxu0 0
    %1491 = vmatpush1.bf16.msra.mxu0 0
    %1492 = vmatprep.subr.bf16.mxu0 0
    %1493 = vmatpush1.bf16.msra.mxu0 0
    %1494 = vmatprep.subr.bf16.mxu0 0
    %1495 = vmatpush1.bf16.msra.mxu0 0
    %1496 = vmatprep.subr.bf16.mxu0 0
    %1497 = vmatpush1.bf16.msra.mxu0 0
    %1498 = vmatprep.mubr.bf16.mxu0 0
    %1499 = vmatmul.mubr.bf16.gmra.mrb[0].mxu0 %v1464
    %v1500 = vpop.f32.mrb[0].mxu0
    %v1501 = vadd.f32 %v1416, %v1500
    %v1502 = vpop.f32.mrb[0].mxu0
    %v1503 = vadd.f32 %v1420, %v1502
    %v1504 = vpop.f32.mrb[0].mxu0
    %v1505 = vadd.f32 %v1416, %v1504
    %v1506 = vpop.f32.mrb[0].mxu0
    %v1507 = vadd.f32 %v1420, %v1506
    %1508 = vdwg.mxu0
    %v1509 = vpack.c.bf16 %v1501, %v1501
    %v1510 = vpack.c.bf16 %v1505, %v1505
    %1512 = vrot.lane.b32.xlu0 %v1509, 64
    %v1513 = vpop.permute.xlu0 %1512
    %v1515 = vsel %vm503, %v1509, 0
    %v1518 = vsel %vm503, %v1513, 0
    %1520 = vmatprep.subr.bf16.mxu0 0
    %1521 = vmatpush1.bf16.xpose.msra.mxu0 %v1518
    %1522 = vmatprep.subr.bf16.mxu0 0
    %1523 = vmatpush1.bf16.xpose.msra.mxu0 0
    %1524 = vmatprep.subr.bf16.mxu0 0
    %1525 = vmatpush1.bf16.xpose.msra.mxu0 0
    %1526 = vmatprep.subr.bf16.mxu0 0
    %1527 = vmatpush1.bf16.xpose.msra.mxu0 0
    %1528 = vmatprep.subr.bf16.mxu0 0
    %1529 = vmatpush1.bf16.xpose.msra.mxu0 0
    %1530 = vmatprep.subr.bf16.mxu0 0
    %1531 = vmatpush1.bf16.xpose.msra.mxu0 0
    %1532 = vmatprep.subr.bf16.mxu0 0
    %1533 = vmatpush1.bf16.xpose.msra.mxu0 0
    %1534 = vmatprep.subr.bf16.mxu0 0
    %1535 = vmatpush1.bf16.xpose.msra.mxu0 0
    %1536 = vmatprep.subr.bf16.mxu0 0
    %1537 = vmatpush1.bf16.xpose.msra.mxu0 0
    %1538 = vmatprep.subr.bf16.mxu0 0
    %1539 = vmatpush1.bf16.xpose.msra.mxu0 0
    %1540 = vmatprep.subr.bf16.mxu0 0
    %1541 = vmatpush1.bf16.xpose.msra.mxu0 0
    %1542 = vmatprep.subr.bf16.mxu0 0
    %1543 = vmatpush1.bf16.xpose.msra.mxu0 0
    %1544 = vmatprep.subr.bf16.mxu0 0
    %1545 = vmatpush1.bf16.xpose.msra.mxu0 0
    %1546 = vmatprep.subr.bf16.mxu0 0
    %1547 = vmatpush1.bf16.xpose.msra.mxu0 0
    %1548 = vmatprep.subr.bf16.mxu0 0
    %1549 = vmatpush1.bf16.xpose.msra.mxu0 0
    %1550 = vmatprep.subr.bf16.mxu0 0
    %1551 = vmatpush1.bf16.xpose.msra.mxu0 0
    %1552 = vmatprep.mubr.bf16.mxu0 0
    %1553 = vmatmul.mubr.bf16.gmra.mrb[0].mxu0 %v1515
    %v1554 = vpop.f32.mrb[0].mxu0
    %v1555 = vadd.f32 0.0, %v1554
    %v1556 = vpop.f32.mrb[0].mxu0
    %v1557 = vpop.f32.mrb[0].mxu0
    %v1558 = vpop.f32.mrb[0].mxu0
    %1559 = vdwg.mxu0
    %1561 = vrot.lane.b32.xlu0 %v1510, 64
    %v1562 = vpop.permute.xlu0 %1561
    %v1564 = vsel %vm503, %v1510, 0
    %v1567 = vsel %vm503, %v1562, 0
    %1569 = vmatprep.subr.bf16.mxu0 0
    %1570 = vmatpush1.bf16.xpose.msra.mxu0 %v1567
    %1571 = vmatprep.subr.bf16.mxu0 0
    %1572 = vmatpush1.bf16.xpose.msra.mxu0 0
    %1573 = vmatprep.subr.bf16.mxu0 0
    %1574 = vmatpush1.bf16.xpose.msra.mxu0 0
    %1575 = vmatprep.subr.bf16.mxu0 0
    %1576 = vmatpush1.bf16.xpose.msra.mxu0 0
    %1577 = vmatprep.subr.bf16.mxu0 0
    %1578 = vmatpush1.bf16.xpose.msra.mxu0 0
    %1579 = vmatprep.subr.bf16.mxu0 0
    %1580 = vmatpush1.bf16.xpose.msra.mxu0 0
    %1581 = vmatprep.subr.bf16.mxu0 0
    %1582 = vmatpush1.bf16.xpose.msra.mxu0 0
    %1583 = vmatprep.subr.bf16.mxu0 0
    %1584 = vmatpush1.bf16.xpose.msra.mxu0 0
    %1585 = vmatprep.subr.bf16.mxu0 0
    %1586 = vmatpush1.bf16.xpose.msra.mxu0 0
    %1587 = vmatprep.subr.bf16.mxu0 0
    %1588 = vmatpush1.bf16.xpose.msra.mxu0 0
    %1589 = vmatprep.subr.bf16.mxu0 0
    %1590 = vmatpush1.bf16.xpose.msra.mxu0 0
    %1591 = vmatprep.subr.bf16.mxu0 0
    %1592 = vmatpush1.bf16.xpose.msra.mxu0 0
    %1593 = vmatprep.subr.bf16.mxu0 0
    %1594 = vmatpush1.bf16.xpose.msra.mxu0 0
    %1595 = vmatprep.subr.bf16.mxu0 0
    %1596 = vmatpush1.bf16.xpose.msra.mxu0 0
    %1597 = vmatprep.subr.bf16.mxu0 0
    %1598 = vmatpush1.bf16.xpose.msra.mxu0 0
    %1599 = vmatprep.subr.bf16.mxu0 0
    %1600 = vmatpush1.bf16.xpose.msra.mxu0 0
    %1601 = vmatprep.mubr.bf16.mxu0 0
    %1602 = vmatmul.mubr.bf16.gmra.mrb[0].mxu0 %v1564
    %v1603 = vpop.f32.mrb[0].mxu0
    %v1604 = vadd.f32 0.0, %v1603
    %v1605 = vpop.f32.mrb[0].mxu0
    %v1606 = vpop.f32.mrb[0].mxu0
    %v1607 = vpop.f32.mrb[0].mxu0
    %1608 = vdwg.mxu0
    %v1609 = vmul.f32 %v1555, 0.17677669
    %v1610 = vmul.f32 %v1604, 0.17677669
    %v1611 = vadd.f32 %v1609, %v604
    %v1612 = vadd.f32 %v1610, %v608
    %v1613 = vsel %vm613, %v1611, -inf
    %1614 = vmax.xlane.f32.xlu0 %v1613
    %v1615 = vpop.xlane.xlu0 %1614
    %v1616 = vsel %vm613, %v1612, -inf
    %1617 = vmax.xlane.f32.xlu0 %v1616
    %v1618 = vpop.xlane.xlu0 %1617
    %v1619 = vsub.f32 %v1611, %v1615
    %v1620 = vsub.f32 %v1612, %v1618
    %v1621 = vmul.f32 %v1619, 1.442695
    %v1622 = vpow.pop %v1621
    %v1623 = vmul.f32 %v1620, 1.442695
    %v1624 = vpow.pop %v1623
    %v1625 = vsel %vm613, %v1622, 0.0
    %1626 = vadd.xlane.f32.xlu0 %v1625
    %v1627 = vpop.xlane.xlu0 %1626
    %v1628 = vsel %vm613, %v1624, 0.0
    %1629 = vadd.xlane.f32.xlu0 %v1628
    %v1630 = vpop.xlane.xlu0 %1629
    %v1631 = vrcp.pop %v1627
    %v1632 = vrcp.pop %v1630
    %v1633 = vmul.f32 %v1622, %v1631
    %v1634 = vmul.f32 %v1624, %v1632
    %v1635 = vpack.c.bf16 %v1633, %v1633
    %v1636 = vpack.c.bf16 %v1634, %v1634
    %v1637 = vpack.c.bf16 %v1503, %v1503
    %v1638 = vpack.c.bf16 %v1507, %v1507
    %v1640 = vsel %vm613, %v1635, 0
    %v1643 = vsel %vm643, %v1637, 0
    %1645 = vmatprep.subr.bf16.mxu0 0
    %1646 = vmatpush1.bf16.msra.mxu0 %v1643
    %1647 = vmatprep.subr.bf16.mxu0 0
    %1648 = vmatpush1.bf16.msra.mxu0 0
    %1649 = vmatprep.subr.bf16.mxu0 0
    %1650 = vmatpush1.bf16.msra.mxu0 0
    %1651 = vmatprep.subr.bf16.mxu0 0
    %1652 = vmatpush1.bf16.msra.mxu0 0
    %1653 = vmatprep.subr.bf16.mxu0 0
    %1654 = vmatpush1.bf16.msra.mxu0 0
    %1655 = vmatprep.subr.bf16.mxu0 0
    %1656 = vmatpush1.bf16.msra.mxu0 0
    %1657 = vmatprep.subr.bf16.mxu0 0
    %1658 = vmatpush1.bf16.msra.mxu0 0
    %1659 = vmatprep.subr.bf16.mxu0 0
    %1660 = vmatpush1.bf16.msra.mxu0 0
    %1661 = vmatprep.subr.bf16.mxu0 0
    %1662 = vmatpush1.bf16.msra.mxu0 0
    %1663 = vmatprep.subr.bf16.mxu0 0
    %1664 = vmatpush1.bf16.msra.mxu0 0
    %1665 = vmatprep.subr.bf16.mxu0 0
    %1666 = vmatpush1.bf16.msra.mxu0 0
    %1667 = vmatprep.subr.bf16.mxu0 0
    %1668 = vmatpush1.bf16.msra.mxu0 0
    %1669 = vmatprep.subr.bf16.mxu0 0
    %1670 = vmatpush1.bf16.msra.mxu0 0
    %1671 = vmatprep.subr.bf16.mxu0 0
    %1672 = vmatpush1.bf16.msra.mxu0 0
    %1673 = vmatprep.subr.bf16.mxu0 0
    %1674 = vmatpush1.bf16.msra.mxu0 0
    %1675 = vmatprep.subr.bf16.mxu0 0
    %1676 = vmatpush1.bf16.msra.mxu0 0
    %1677 = vmatprep.mubr.bf16.mxu0 0
    %1678 = vmatmul.mubr.bf16.gmra.mrb[0].mxu0 %v1640
    %v1679 = vpop.f32.mrb[0].mxu0
    %v1680 = vadd.f32 0.0, %v1679
    %v1681 = vpop.f32.mrb[0].mxu0
    %v1682 = vpop.f32.mrb[0].mxu0
    %v1683 = vpop.f32.mrb[0].mxu0
    %1684 = vdwg.mxu0
    %v1686 = vsel %vm613, %v1636, 0
    %v1689 = vsel %vm643, %v1638, 0
    %1691 = vmatprep.subr.bf16.mxu0 0
    %1692 = vmatpush1.bf16.msra.mxu0 %v1689
    %1693 = vmatprep.subr.bf16.mxu0 0
    %1694 = vmatpush1.bf16.msra.mxu0 0
    %1695 = vmatprep.subr.bf16.mxu0 0
    %1696 = vmatpush1.bf16.msra.mxu0 0
    %1697 = vmatprep.subr.bf16.mxu0 0
    %1698 = vmatpush1.bf16.msra.mxu0 0
    %1699 = vmatprep.subr.bf16.mxu0 0
    %1700 = vmatpush1.bf16.msra.mxu0 0
    %1701 = vmatprep.subr.bf16.mxu0 0
    %1702 = vmatpush1.bf16.msra.mxu0 0
    %1703 = vmatprep.subr.bf16.mxu0 0
    %1704 = vmatpush1.bf16.msra.mxu0 0
    %1705 = vmatprep.subr.bf16.mxu0 0
    %1706 = vmatpush1.bf16.msra.mxu0 0
    %1707 = vmatprep.subr.bf16.mxu0 0
    %1708 = vmatpush1.bf16.msra.mxu0 0
    %1709 = vmatprep.subr.bf16.mxu0 0
    %1710 = vmatpush1.bf16.msra.mxu0 0
    %1711 = vmatprep.subr.bf16.mxu0 0
    %1712 = vmatpush1.bf16.msra.mxu0 0
    %1713 = vmatprep.subr.bf16.mxu0 0
    %1714 = vmatpush1.bf16.msra.mxu0 0
    %1715 = vmatprep.subr.bf16.mxu0 0
    %1716 = vmatpush1.bf16.msra.mxu0 0
    %1717 = vmatprep.subr.bf16.mxu0 0
    %1718 = vmatpush1.bf16.msra.mxu0 0
    %1719 = vmatprep.subr.bf16.mxu0 0
    %1720 = vmatpush1.bf16.msra.mxu0 0
    %1721 = vmatprep.subr.bf16.mxu0 0
    %1722 = vmatpush1.bf16.msra.mxu0 0
    %1723 = vmatprep.mubr.bf16.mxu0 0
    %1724 = vmatmul.mubr.bf16.gmra.mrb[0].mxu0 %v1686
    %v1725 = vpop.f32.mrb[0].mxu0
    %v1726 = vadd.f32 0.0, %v1725
    %v1727 = vpop.f32.mrb[0].mxu0
    %v1728 = vpop.f32.mrb[0].mxu0
    %v1729 = vpop.f32.mrb[0].mxu0
    %1730 = vdwg.mxu0
    %v1731 = vpack.c.bf16 %v1726, %v1680
    %s1732 = scalar_lea.vmem %s10, 32
    %v1733 = vld [vmem:[%s1732] sm:$0xf]
    %v1734 = vld [vmem:[%s1732 + $0x4] sm:$0xf]
    %v1735 = vld [vmem:[%s1732 + $0x8] sm:$0xf]
    %v1736 = vld [vmem:[%s1732 + $0xc] sm:$0xf]
    %1737 = vrot.lane.b32.xlu0 %v1509, 96
    %v1738 = vpop.permute.xlu0 %1737
    %1739 = vrot.lane.b32.xlu0 %v1509, 32
    %v1740 = vpop.permute.xlu0 %1739
    %v1742 = vsel %vm503, %v1738, 0
    %v1745 = vsel %vm503, %v1740, 0
    %1747 = vmatprep.subr.bf16.mxu0 0
    %1748 = vmatpush1.bf16.xpose.msra.mxu0 %v1745
    %1749 = vmatprep.subr.bf16.mxu0 0
    %1750 = vmatpush1.bf16.xpose.msra.mxu0 0
    %1751 = vmatprep.subr.bf16.mxu0 0
    %1752 = vmatpush1.bf16.xpose.msra.mxu0 0
    %1753 = vmatprep.subr.bf16.mxu0 0
    %1754 = vmatpush1.bf16.xpose.msra.mxu0 0
    %1755 = vmatprep.subr.bf16.mxu0 0
    %1756 = vmatpush1.bf16.xpose.msra.mxu0 0
    %1757 = vmatprep.subr.bf16.mxu0 0
    %1758 = vmatpush1.bf16.xpose.msra.mxu0 0
    %1759 = vmatprep.subr.bf16.mxu0 0
    %1760 = vmatpush1.bf16.xpose.msra.mxu0 0
    %1761 = vmatprep.subr.bf16.mxu0 0
    %1762 = vmatpush1.bf16.xpose.msra.mxu0 0
    %1763 = vmatprep.subr.bf16.mxu0 0
    %1764 = vmatpush1.bf16.xpose.msra.mxu0 0
    %1765 = vmatprep.subr.bf16.mxu0 0
    %1766 = vmatpush1.bf16.xpose.msra.mxu0 0
    %1767 = vmatprep.subr.bf16.mxu0 0
    %1768 = vmatpush1.bf16.xpose.msra.mxu0 0
    %1769 = vmatprep.subr.bf16.mxu0 0
    %1770 = vmatpush1.bf16.xpose.msra.mxu0 0
    %1771 = vmatprep.subr.bf16.mxu0 0
    %1772 = vmatpush1.bf16.xpose.msra.mxu0 0
    %1773 = vmatprep.subr.bf16.mxu0 0
    %1774 = vmatpush1.bf16.xpose.msra.mxu0 0
    %1775 = vmatprep.subr.bf16.mxu0 0
    %1776 = vmatpush1.bf16.xpose.msra.mxu0 0
    %1777 = vmatprep.subr.bf16.mxu0 0
    %1778 = vmatpush1.bf16.xpose.msra.mxu0 0
    %1779 = vmatprep.mubr.bf16.mxu0 0
    %1780 = vmatmul.mubr.bf16.gmra.mrb[0].mxu0 %v1742
    %v1781 = vpop.f32.mrb[0].mxu0
    %v1782 = vadd.f32 0.0, %v1781
    %v1783 = vpop.f32.mrb[0].mxu0
    %v1784 = vpop.f32.mrb[0].mxu0
    %v1785 = vpop.f32.mrb[0].mxu0
    %1786 = vdwg.mxu0
    %1787 = vrot.lane.b32.xlu0 %v1510, 96
    %v1788 = vpop.permute.xlu0 %1787
    %1789 = vrot.lane.b32.xlu0 %v1510, 32
    %v1790 = vpop.permute.xlu0 %1789
    %v1792 = vsel %vm503, %v1788, 0
    %v1795 = vsel %vm503, %v1790, 0
    %1797 = vmatprep.subr.bf16.mxu0 0
    %1798 = vmatpush1.bf16.xpose.msra.mxu0 %v1795
    %1799 = vmatprep.subr.bf16.mxu0 0
    %1800 = vmatpush1.bf16.xpose.msra.mxu0 0
    %1801 = vmatprep.subr.bf16.mxu0 0
    %1802 = vmatpush1.bf16.xpose.msra.mxu0 0
    %1803 = vmatprep.subr.bf16.mxu0 0
    %1804 = vmatpush1.bf16.xpose.msra.mxu0 0
    %1805 = vmatprep.subr.bf16.mxu0 0
    %1806 = vmatpush1.bf16.xpose.msra.mxu0 0
    %1807 = vmatprep.subr.bf16.mxu0 0
    %1808 = vmatpush1.bf16.xpose.msra.mxu0 0
    %1809 = vmatprep.subr.bf16.mxu0 0
    %1810 = vmatpush1.bf16.xpose.msra.mxu0 0
    %1811 = vmatprep.subr.bf16.mxu0 0
    %1812 = vmatpush1.bf16.xpose.msra.mxu0 0
    %1813 = vmatprep.subr.bf16.mxu0 0
    %1814 = vmatpush1.bf16.xpose.msra.mxu0 0
    %1815 = vmatprep.subr.bf16.mxu0 0
    %1816 = vmatpush1.bf16.xpose.msra.mxu0 0
    %1817 = vmatprep.subr.bf16.mxu0 0
    %1818 = vmatpush1.bf16.xpose.msra.mxu0 0
    %1819 = vmatprep.subr.bf16.mxu0 0
    %1820 = vmatpush1.bf16.xpose.msra.mxu0 0
    %1821 = vmatprep.subr.bf16.mxu0 0
    %1822 = vmatpush1.bf16.xpose.msra.mxu0 0
    %1823 = vmatprep.subr.bf16.mxu0 0
    %1824 = vmatpush1.bf16.xpose.msra.mxu0 0
    %1825 = vmatprep.subr.bf16.mxu0 0
    %1826 = vmatpush1.bf16.xpose.msra.mxu0 0
    %1827 = vmatprep.subr.bf16.mxu0 0
    %1828 = vmatpush1.bf16.xpose.msra.mxu0 0
    %1829 = vmatprep.mubr.bf16.mxu0 0
    %1830 = vmatmul.mubr.bf16.gmra.mrb[0].mxu0 %v1792
    %v1831 = vpop.f32.mrb[0].mxu0
    %v1832 = vadd.f32 0.0, %v1831
    %v1833 = vpop.f32.mrb[0].mxu0
    %v1834 = vpop.f32.mrb[0].mxu0
    %v1835 = vpop.f32.mrb[0].mxu0
    %1836 = vdwg.mxu0
    %v1837 = vmul.f32 %v1782, 0.17677669
    %v1838 = vmul.f32 %v1832, 0.17677669
    %v1839 = vadd.f32 %v1837, %v604
    %v1840 = vadd.f32 %v1838, %v608
    %v1841 = vsel %vm613, %v1839, -inf
    %1842 = vmax.xlane.f32.xlu0 %v1841
    %v1843 = vpop.xlane.xlu0 %1842
    %v1844 = vsel %vm613, %v1840, -inf
    %1845 = vmax.xlane.f32.xlu0 %v1844
    %v1846 = vpop.xlane.xlu0 %1845
    %v1847 = vsub.f32 %v1839, %v1843
    %v1848 = vsub.f32 %v1840, %v1846
    %v1849 = vmul.f32 %v1847, 1.442695
    %v1850 = vpow.pop %v1849
    %v1851 = vmul.f32 %v1848, 1.442695
    %v1852 = vpow.pop %v1851
    %v1853 = vsel %vm613, %v1850, 0.0
    %1854 = vadd.xlane.f32.xlu0 %v1853
    %v1855 = vpop.xlane.xlu0 %1854
    %v1856 = vsel %vm613, %v1852, 0.0
    %1857 = vadd.xlane.f32.xlu0 %v1856
    %v1858 = vpop.xlane.xlu0 %1857
    %v1859 = vrcp.pop %v1855
    %v1860 = vrcp.pop %v1858
    %v1861 = vmul.f32 %v1850, %v1859
    %v1862 = vmul.f32 %v1852, %v1860
    %v1863 = vpack.c.bf16 %v1861, %v1861
    %v1864 = vpack.c.bf16 %v1862, %v1862
    %1866 = vrot.lane.b32.xlu0 %v1637, 96
    %v1867 = vpop.permute.xlu0 %1866
    %v1869 = vsel %vm613, %v1863, 0
    %v1872 = vsel %vm643, %v1867, 0
    %1874 = vmatprep.subr.bf16.mxu0 0
    %1875 = vmatpush1.bf16.msra.mxu0 %v1872
    %1876 = vmatprep.subr.bf16.mxu0 0
    %1877 = vmatpush1.bf16.msra.mxu0 0
    %1878 = vmatprep.subr.bf16.mxu0 0
    %1879 = vmatpush1.bf16.msra.mxu0 0
    %1880 = vmatprep.subr.bf16.mxu0 0
    %1881 = vmatpush1.bf16.msra.mxu0 0
    %1882 = vmatprep.subr.bf16.mxu0 0
    %1883 = vmatpush1.bf16.msra.mxu0 0
    %1884 = vmatprep.subr.bf16.mxu0 0
    %1885 = vmatpush1.bf16.msra.mxu0 0
    %1886 = vmatprep.subr.bf16.mxu0 0
    %1887 = vmatpush1.bf16.msra.mxu0 0
    %1888 = vmatprep.subr.bf16.mxu0 0
    %1889 = vmatpush1.bf16.msra.mxu0 0
    %1890 = vmatprep.subr.bf16.mxu0 0
    %1891 = vmatpush1.bf16.msra.mxu0 0
    %1892 = vmatprep.subr.bf16.mxu0 0
    %1893 = vmatpush1.bf16.msra.mxu0 0
    %1894 = vmatprep.subr.bf16.mxu0 0
    %1895 = vmatpush1.bf16.msra.mxu0 0
    %1896 = vmatprep.subr.bf16.mxu0 0
    %1897 = vmatpush1.bf16.msra.mxu0 0
    %1898 = vmatprep.subr.bf16.mxu0 0
    %1899 = vmatpush1.bf16.msra.mxu0 0
    %1900 = vmatprep.subr.bf16.mxu0 0
    %1901 = vmatpush1.bf16.msra.mxu0 0
    %1902 = vmatprep.subr.bf16.mxu0 0
    %1903 = vmatpush1.bf16.msra.mxu0 0
    %1904 = vmatprep.subr.bf16.mxu0 0
    %1905 = vmatpush1.bf16.msra.mxu0 0
    %1906 = vmatprep.mubr.bf16.mxu0 0
    %1907 = vmatmul.mubr.bf16.gmra.mrb[0].mxu0 %v1869
    %v1908 = vpop.f32.mrb[0].mxu0
    %v1909 = vadd.f32 0.0, %v1908
    %v1910 = vpop.f32.mrb[0].mxu0
    %v1911 = vpop.f32.mrb[0].mxu0
    %v1912 = vpop.f32.mrb[0].mxu0
    %1913 = vdwg.mxu0
    %1915 = vrot.lane.b32.xlu0 %v1638, 96
    %v1916 = vpop.permute.xlu0 %1915
    %v1918 = vsel %vm613, %v1864, 0
    %v1921 = vsel %vm643, %v1916, 0
    %1923 = vmatprep.subr.bf16.mxu0 0
    %1924 = vmatpush1.bf16.msra.mxu0 %v1921
    %1925 = vmatprep.subr.bf16.mxu0 0
    %1926 = vmatpush1.bf16.msra.mxu0 0
    %1927 = vmatprep.subr.bf16.mxu0 0
    %1928 = vmatpush1.bf16.msra.mxu0 0
    %1929 = vmatprep.subr.bf16.mxu0 0
    %1930 = vmatpush1.bf16.msra.mxu0 0
    %1931 = vmatprep.subr.bf16.mxu0 0
    %1932 = vmatpush1.bf16.msra.mxu0 0
    %1933 = vmatprep.subr.bf16.mxu0 0
    %1934 = vmatpush1.bf16.msra.mxu0 0
    %1935 = vmatprep.subr.bf16.mxu0 0
    %1936 = vmatpush1.bf16.msra.mxu0 0
    %1937 = vmatprep.subr.bf16.mxu0 0
    %1938 = vmatpush1.bf16.msra.mxu0 0
    %1939 = vmatprep.subr.bf16.mxu0 0
    %1940 = vmatpush1.bf16.msra.mxu0 0
    %1941 = vmatprep.subr.bf16.mxu0 0
    %1942 = vmatpush1.bf16.msra.mxu0 0
    %1943 = vmatprep.subr.bf16.mxu0 0
    %1944 = vmatpush1.bf16.msra.mxu0 0
    %1945 = vmatprep.subr.bf16.mxu0 0
    %1946 = vmatpush1.bf16.msra.mxu0 0
    %1947 = vmatprep.subr.bf16.mxu0 0
    %1948 = vmatpush1.bf16.msra.mxu0 0
    %1949 = vmatprep.subr.bf16.mxu0 0
    %1950 = vmatpush1.bf16.msra.mxu0 0
    %1951 = vmatprep.subr.bf16.mxu0 0
    %1952 = vmatpush1.bf16.msra.mxu0 0
    %1953 = vmatprep.subr.bf16.mxu0 0
    %1954 = vmatpush1.bf16.msra.mxu0 0
    %1955 = vmatprep.mubr.bf16.mxu0 0
    %1956 = vmatmul.mubr.bf16.gmra.mrb[0].mxu0 %v1918
    %v1957 = vpop.f32.mrb[0].mxu0
    %v1958 = vadd.f32 0.0, %v1957
    %v1959 = vpop.f32.mrb[0].mxu0
    %v1960 = vpop.f32.mrb[0].mxu0
    %v1961 = vpop.f32.mrb[0].mxu0
    %1962 = vdwg.mxu0
    %v1963 = vpack.c.bf16 %v1958, %v1909
    %s1964 = scalar_lea.vmem %s10, 48
    %v1965 = vld [vmem:[%s1964] sm:$0xf]
    %v1966 = vld [vmem:[%s1964 + $0x4] sm:$0xf]
    %v1967 = vld [vmem:[%s1964 + $0x8] sm:$0xf]
    %v1968 = vld [vmem:[%s1964 + $0xc] sm:$0xf]
    %v1973 = vunpack.c.l.b16 %v1965
    %v1974 = vunpack.c.l.b16 %v1966
    %v1975 = vunpack.c.l.b16 %v1967
    %v1976 = vunpack.c.l.b16 %v1968
    %v1977 = vpack.c.b16 %v1974, %v1973
    %v1978 = vpack.c.b16 %v1976, %v1975
    %v1982 = vsel %vm503, %v1963, 0
    %1984 = vmatprep.subr.bf16.mxu0 0
    %1985 = vmatpush1.bf16.msra.mxu0 %v1977
    %1986 = vmatprep.subr.bf16.mxu0 0
    %1987 = vmatpush1.bf16.msra.mxu0 %v1978
    %1988 = vmatprep.subr.bf16.mxu0 0
    %1989 = vmatpush1.bf16.msra.mxu0 0
    %1990 = vmatprep.subr.bf16.mxu0 0
    %1991 = vmatpush1.bf16.msra.mxu0 0
    %1992 = vmatprep.subr.bf16.mxu0 0
    %1993 = vmatpush1.bf16.msra.mxu0 0
    %1994 = vmatprep.subr.bf16.mxu0 0
    %1995 = vmatpush1.bf16.msra.mxu0 0
    %1996 = vmatprep.subr.bf16.mxu0 0
    %1997 = vmatpush1.bf16.msra.mxu0 0
    %1998 = vmatprep.subr.bf16.mxu0 0
    %1999 = vmatpush1.bf16.msra.mxu0 0
    %2000 = vmatprep.subr.bf16.mxu0 0
    %2001 = vmatpush1.bf16.msra.mxu0 0
    %2002 = vmatprep.subr.bf16.mxu0 0
    %2003 = vmatpush1.bf16.msra.mxu0 0
    %2004 = vmatprep.subr.bf16.mxu0 0
    %2005 = vmatpush1.bf16.msra.mxu0 0
    %2006 = vmatprep.subr.bf16.mxu0 0
    %2007 = vmatpush1.bf16.msra.mxu0 0
    %2008 = vmatprep.subr.bf16.mxu0 0
    %2009 = vmatpush1.bf16.msra.mxu0 0
    %2010 = vmatprep.subr.bf16.mxu0 0
    %2011 = vmatpush1.bf16.msra.mxu0 0
    %2012 = vmatprep.subr.bf16.mxu0 0
    %2013 = vmatpush1.bf16.msra.mxu0 0
    %2014 = vmatprep.subr.bf16.mxu0 0
    %2015 = vmatpush1.bf16.msra.mxu0 0
    %2016 = vmatprep.mubr.bf16.mxu0 0
    %2017 = vmatmul.mubr.bf16.gmra.mrb[0].mxu0 %v1982
    %v2018 = vpop.f32.mrb[0].mxu0
    %v2019 = vadd.f32 0.0, %v2018
    %v2020 = vpop.f32.mrb[0].mxu0
    %v2021 = vpop.f32.mrb[0].mxu0
    %v2022 = vadd.f32 0.0, %v2021
    %v2023 = vpop.f32.mrb[0].mxu0
    %2024 = vdwg.mxu0
    %v2029 = vunpack.c.l.b16 %v1733
    %v2030 = vunpack.c.l.b16 %v1734
    %v2031 = vunpack.c.l.b16 %v1735
    %v2032 = vunpack.c.l.b16 %v1736
    %v2033 = vpack.c.b16 %v2030, %v2029
    %v2034 = vpack.c.b16 %v2032, %v2031
    %v2038 = vsel %vm503, %v1731, 0
    %2040 = vmatprep.subr.bf16.mxu0 0
    %2041 = vmatpush1.bf16.msra.mxu0 %v2033
    %2042 = vmatprep.subr.bf16.mxu0 0
    %2043 = vmatpush1.bf16.msra.mxu0 %v2034
    %2044 = vmatprep.subr.bf16.mxu0 0
    %2045 = vmatpush1.bf16.msra.mxu0 0
    %2046 = vmatprep.subr.bf16.mxu0 0
    %2047 = vmatpush1.bf16.msra.mxu0 0
    %2048 = vmatprep.subr.bf16.mxu0 0
    %2049 = vmatpush1.bf16.msra.mxu0 0
    %2050 = vmatprep.subr.bf16.mxu0 0
    %2051 = vmatpush1.bf16.msra.mxu0 0
    %2052 = vmatprep.subr.bf16.mxu0 0
    %2053 = vmatpush1.bf16.msra.mxu0 0
    %2054 = vmatprep.subr.bf16.mxu0 0
    %2055 = vmatpush1.bf16.msra.mxu0 0
    %2056 = vmatprep.subr.bf16.mxu0 0
    %2057 = vmatpush1.bf16.msra.mxu0 0
    %2058 = vmatprep.subr.bf16.mxu0 0
    %2059 = vmatpush1.bf16.msra.mxu0 0
    %2060 = vmatprep.subr.bf16.mxu0 0
    %2061 = vmatpush1.bf16.msra.mxu0 0
    %2062 = vmatprep.subr.bf16.mxu0 0
    %2063 = vmatpush1.bf16.msra.mxu0 0
    %2064 = vmatprep.subr.bf16.mxu0 0
    %2065 = vmatpush1.bf16.msra.mxu0 0
    %2066 = vmatprep.subr.bf16.mxu0 0
    %2067 = vmatpush1.bf16.msra.mxu0 0
    %2068 = vmatprep.subr.bf16.mxu0 0
    %2069 = vmatpush1.bf16.msra.mxu0 0
    %2070 = vmatprep.subr.bf16.mxu0 0
    %2071 = vmatpush1.bf16.msra.mxu0 0
    %2072 = vmatprep.mubr.bf16.mxu0 0
    %2073 = vmatmul.mubr.bf16.gmra.mrb[0].mxu0 %v2038
    %v2074 = vpop.f32.mrb[0].mxu0
    %v2075 = vadd.f32 %v2019, %v2074
    %v2076 = vpop.f32.mrb[0].mxu0
    %v2077 = vpop.f32.mrb[0].mxu0
    %v2078 = vadd.f32 %v2022, %v2077
    %v2079 = vpop.f32.mrb[0].mxu0
    %2080 = vdwg.mxu0
    %s2081 = scalar_lea.vmem [#allocation15], 1
    %v2082 = vld [vmem:[%s2081] sm:$0x1]
    %v2084 = vlaneseq
    %v2085 = vshrl.u32 %v2084, 7
    %v2086 = vsub.s32 0, %v2085
    %v2087 = vrot.slane %v2082, %v2086
    %v2089 = vadd.f32 %v2075, %v2087
    %v2090 = vadd.f32 %v2078, %v2087
    %v2091 = vadd.f32 %v1352, %v2089
    %v2092 = vadd.f32 %v1353, %v2090
    %s2093 = scalar_lea.vmem [#allocation17], 1
    %v2094 = vld [vmem:[%s2093] sm:$0x1]
    %s2095 = scalar_lea.vmem [#allocation18], 1
    %v2096 = vld [vmem:[%s2095] sm:$0x1]
    %v2097 = vsel %vm277, %v2091, 0.0
    %2098 = vadd.xlane.f32.xlu0 %v2097
    %v2099 = vpop.xlane.xlu0 %2098
    %v2100 = vsel %vm277, %v2092, 0.0
    %2101 = vadd.xlane.f32.xlu0 %v2100
    %v2102 = vpop.xlane.xlu0 %2101
    %v2103 = vmul.f32 %v2099, %v284
    %v2104 = vmul.f32 %v2102, %v284
    %v2105 = vsub.f32 %v2091, %v2103
    %v2106 = vsub.f32 %v2092, %v2104
    %v2107 = vmul.f32 %v2105, %v2105
    %v2108 = vmul.f32 %v2106, %v2106
    %v2109 = vsel %vm277, %v2107, 0.0
    %2110 = vadd.xlane.f32.xlu0 %v2109
    %v2111 = vpop.xlane.xlu0 %2110
    %v2112 = vsel %vm277, %v2108, 0.0
    %2113 = vadd.xlane.f32.xlu0 %v2112
    %v2114 = vpop.xlane.xlu0 %2113
    %v2115 = vmul.f32 %v2111, %v284
    %v2116 = vmul.f32 %v2114, %v284
    %v2117 = vadd.f32 %v2115, 1e-05
    %v2118 = vadd.f32 %v2116, 1e-05
    %v2119 = vrsqrt.pop %v2117
    %v2120 = vrsqrt.pop %v2118
    %v2121 = vmul.f32 %v2105, %v2119
    %v2122 = vmul.f32 %v2106, %v2120
    %v2124 = vlaneseq
    %v2125 = vshrl.u32 %v2124, 7
    %v2126 = vsub.s32 0, %v2125
    %v2127 = vrot.slane %v2094, %v2126
    %v2129 = vmul.f32 %v2121, %v2127
    %v2130 = vmul.f32 %v2122, %v2127
    %v2132 = vlaneseq
    %v2133 = vshrl.u32 %v2132, 7
    %v2134 = vsub.s32 0, %v2133
    %v2135 = vrot.slane %v2096, %v2134
    %v2137 = vadd.f32 %v2129, %v2135
    %v2138 = vadd.f32 %v2130, %v2135
    %v2139 = vpack.c.bf16 %v2138, %v2137
    %s2140 = scalar_lea.vmem %s14, 32
    %v2141 = vld [vmem:[%s2140] sm:$0xf]
    %v2142 = vld [vmem:[%s2140 + $0x4] sm:$0xf]
    %v2143 = vld [vmem:[%s2140 + $0x8] sm:$0xf]
    %v2144 = vld [vmem:[%s2140 + $0xc] sm:$0xf]
    %v2145 = vld [vmem:[%s2140 + $0x10] sm:$0xf]
    %v2146 = vld [vmem:[%s2140 + $0x14] sm:$0xf]
    %v2147 = vld [vmem:[%s2140 + $0x18] sm:$0xf]
    %v2148 = vld [vmem:[%s2140 + $0x1c] sm:$0xf]
    %s2149 = scalar_lea.vmem [#allocation20], 1
    %v2150 = vld [vmem:[%s2149] sm:$0x1]
    %v2152 = vlaneseq
    %v2153 = vshrl.u32 %v2152, 7
    %v2154 = vsub.s32 0, %v2153
    %v2155 = vrot.slane %v2150, %v2154
    %v2165 = vunpack.c.l.b16 %v2141
    %v2166 = vunpack.c.l.b16 %v2142
    %v2167 = vunpack.c.l.b16 %v2143
    %v2168 = vunpack.c.l.b16 %v2144
    %v2169 = vunpack.c.l.b16 %v2145
    %v2170 = vunpack.c.l.b16 %v2146
    %v2171 = vunpack.c.l.b16 %v2147
    %v2172 = vunpack.c.l.b16 %v2148
    %v2173 = vpack.c.b16 %v2166, %v2165
    %v2174 = vpack.c.b16 %v2168, %v2167
    %v2175 = vpack.c.b16 %v2170, %v2169
    %v2176 = vpack.c.b16 %v2172, %v2171
    %v2182 = vsel %vm277, %v2139, 0
    %2184 = vmatprep.subr.bf16.mxu0 0
    %2185 = vmatpush1.bf16.msra.mxu0 %v2173
    %2186 = vmatprep.subr.bf16.mxu0 0
    %2187 = vmatpush1.bf16.msra.mxu0 %v2174
    %2188 = vmatprep.subr.bf16.mxu0 0
    %2189 = vmatpush1.bf16.msra.mxu0 %v2175
    %2190 = vmatprep.subr.bf16.mxu0 0
    %2191 = vmatpush1.bf16.msra.mxu0 %v2176
    %2192 = vmatprep.subr.bf16.mxu0 0
    %2193 = vmatpush1.bf16.msra.mxu0 0
    %2194 = vmatprep.subr.bf16.mxu0 0
    %2195 = vmatpush1.bf16.msra.mxu0 0
    %2196 = vmatprep.subr.bf16.mxu0 0
    %2197 = vmatpush1.bf16.msra.mxu0 0
    %2198 = vmatprep.subr.bf16.mxu0 0
    %2199 = vmatpush1.bf16.msra.mxu0 0
    %2200 = vmatprep.subr.bf16.mxu0 0
    %2201 = vmatpush1.bf16.msra.mxu0 0
    %2202 = vmatprep.subr.bf16.mxu0 0
    %2203 = vmatpush1.bf16.msra.mxu0 0
    %2204 = vmatprep.subr.bf16.mxu0 0
    %2205 = vmatpush1.bf16.msra.mxu0 0
    %2206 = vmatprep.subr.bf16.mxu0 0
    %2207 = vmatpush1.bf16.msra.mxu0 0
    %2208 = vmatprep.subr.bf16.mxu0 0
    %2209 = vmatpush1.bf16.msra.mxu0 0
    %2210 = vmatprep.subr.bf16.mxu0 0
    %2211 = vmatpush1.bf16.msra.mxu0 0
    %2212 = vmatprep.subr.bf16.mxu0 0
    %2213 = vmatpush1.bf16.msra.mxu0 0
    %2214 = vmatprep.subr.bf16.mxu0 0
    %2215 = vmatpush1.bf16.msra.mxu0 0
    %2216 = vmatprep.mubr.bf16.mxu0 0
    %2217 = vmatmul.mubr.bf16.gmra.mrb[0].mxu0 %v2182
    %v2218 = vpop.f32.mrb[0].mxu0
    %v2219 = vadd.f32 %v2155, %v2218
    %v2220 = vpop.f32.mrb[0].mxu0
    %v2221 = vpop.f32.mrb[0].mxu0
    %v2222 = vadd.f32 %v2155, %v2221
    %v2223 = vpop.f32.mrb[0].mxu0
    %2224 = vdwg.mxu0
    %v2225 = vmul.f32 %v2219, %v2219
    %v2226 = vmul.f32 %v2222, %v2222
    %v2227 = vmul.f32 %v2219, %v2225
    %v2228 = vmul.f32 %v2222, %v2226
    %v2229 = vmul.f32 %v2227, 0.044715
    %v2230 = vmul.f32 %v2228, 0.044715
    %v2231 = vadd.f32 %v2219, %v2229
    %v2232 = vadd.f32 %v2222, %v2230
    %v2233 = vmul.f32 %v2231, 0.7978846
    %v2234 = vmul.f32 %v2232, 0.7978846
    %v2235 = vtanh.pop %v2233
    %v2236 = vtanh.pop %v2234
    %v2237 = vadd.f32 %v2235, 1.0
    %v2238 = vadd.f32 %v2236, 1.0
    %v2239 = vmul.f32 %v2237, 0.5
    %v2240 = vmul.f32 %v2238, 0.5
    %v2241 = vmul.f32 %v2219, %v2239
    %v2242 = vmul.f32 %v2222, %v2240
    %v2243 = vpack.c.bf16 %v2242, %v2241
    %s2244 = scalar_lea.vmem %s16, 64
    %v2245 = vld [vmem:[%s2244] sm:$0xf]
    %v2246 = vld [vmem:[%s2244 + $0x4] sm:$0xf]
    %v2247 = vld [vmem:[%s2244 + $0x8] sm:$0xf]
    %v2248 = vld [vmem:[%s2244 + $0xc] sm:$0xf]
    %v2249 = vld [vmem:[%s2244 + $0x10] sm:$0xf]
    %v2250 = vld [vmem:[%s2244 + $0x14] sm:$0xf]
    %v2251 = vld [vmem:[%s2244 + $0x18] sm:$0xf]
    %v2252 = vld [vmem:[%s2244 + $0x1c] sm:$0xf]
    %v2253 = vld [vmem:[%s2244 + $0x20] sm:$0xf]
    %v2254 = vld [vmem:[%s2244 + $0x24] sm:$0xf]
    %v2255 = vld [vmem:[%s2244 + $0x28] sm:$0xf]
    %v2256 = vld [vmem:[%s2244 + $0x2c] sm:$0xf]
    %v2257 = vld [vmem:[%s2244 + $0x30] sm:$0xf]
    %v2258 = vld [vmem:[%s2244 + $0x34] sm:$0xf]
    %v2259 = vld [vmem:[%s2244 + $0x38] sm:$0xf]
    %v2260 = vld [vmem:[%s2244 + $0x3c] sm:$0xf]
    %s2261 = scalar_lea.vmem [#allocation21], 1
    %v2262 = vld [vmem:[%s2261] sm:$0x1]
    %v2264 = vlaneseq
    %v2265 = vshrl.u32 %v2264, 7
    %v2266 = vsub.s32 0, %v2265
    %v2267 = vrot.slane %v2262, %v2266
    %v2285 = vunpack.c.l.b16 %v2245
    %v2286 = vunpack.c.l.b16 %v2246
    %v2287 = vunpack.c.l.b16 %v2247
    %v2288 = vunpack.c.l.b16 %v2248
    %v2289 = vunpack.c.l.b16 %v2249
    %v2290 = vunpack.c.l.b16 %v2250
    %v2291 = vunpack.c.l.b16 %v2251
    %v2292 = vunpack.c.l.b16 %v2252
    %v2293 = vunpack.c.l.b16 %v2253
    %v2294 = vunpack.c.l.b16 %v2254
    %v2295 = vunpack.c.l.b16 %v2255
    %v2296 = vunpack.c.l.b16 %v2256
    %v2297 = vunpack.c.l.b16 %v2257
    %v2298 = vunpack.c.l.b16 %v2258
    %v2299 = vunpack.c.l.b16 %v2259
    %v2300 = vunpack.c.l.b16 %v2260
    %v2301 = vpack.c.b16 %v2286, %v2285
    %v2302 = vpack.c.b16 %v2288, %v2287
    %v2303 = vpack.c.b16 %v2290, %v2289
    %v2304 = vpack.c.b16 %v2292, %v2291
    %v2305 = vpack.c.b16 %v2294, %v2293
    %v2306 = vpack.c.b16 %v2296, %v2295
    %v2307 = vpack.c.b16 %v2298, %v2297
    %v2308 = vpack.c.b16 %v2300, %v2299
    %2317 = vmatprep.subr.bf16.mxu0 0
    %2318 = vmatpush1.bf16.msra.mxu0 %v2301
    %2319 = vmatprep.subr.bf16.mxu0 0
    %2320 = vmatpush1.bf16.msra.mxu0 %v2302
    %2321 = vmatprep.subr.bf16.mxu0 0
    %2322 = vmatpush1.bf16.msra.mxu0 %v2303
    %2323 = vmatprep.subr.bf16.mxu0 0
    %2324 = vmatpush1.bf16.msra.mxu0 %v2304
    %2325 = vmatprep.subr.bf16.mxu0 0
    %2326 = vmatpush1.bf16.msra.mxu0 %v2305
    %2327 = vmatprep.subr.bf16.mxu0 0
    %2328 = vmatpush1.bf16.msra.mxu0 %v2306
    %2329 = vmatprep.subr.bf16.mxu0 0
    %2330 = vmatpush1.bf16.msra.mxu0 %v2307
    %2331 = vmatprep.subr.bf16.mxu0 0
    %2332 = vmatpush1.bf16.msra.mxu0 %v2308
    %2333 = vmatprep.subr.bf16.mxu0 0
    %2334 = vmatpush1.bf16.msra.mxu0 0
    %2335 = vmatprep.subr.bf16.mxu0 0
    %2336 = vmatpush1.bf16.msra.mxu0 0
    %2337 = vmatprep.subr.bf16.mxu0 0
    %2338 = vmatpush1.bf16.msra.mxu0 0
    %2339 = vmatprep.subr.bf16.mxu0 0
    %2340 = vmatpush1.bf16.msra.mxu0 0
    %2341 = vmatprep.subr.bf16.mxu0 0
    %2342 = vmatpush1.bf16.msra.mxu0 0
    %2343 = vmatprep.subr.bf16.mxu0 0
    %2344 = vmatpush1.bf16.msra.mxu0 0
    %2345 = vmatprep.subr.bf16.mxu0 0
    %2346 = vmatpush1.bf16.msra.mxu0 0
    %2347 = vmatprep.subr.bf16.mxu0 0
    %2348 = vmatpush1.bf16.msra.mxu0 0
    %2349 = vmatprep.mubr.bf16.mxu0 0
    %2350 = vmatmul.mubr.bf16.gmra.mrb[0].mxu0 %v2243
    %v2351 = vpop.f32.mrb[0].mxu0
    %v2352 = vadd.f32 %v2267, %v2351
    %v2353 = vpop.f32.mrb[0].mxu0
    %v2354 = vpop.f32.mrb[0].mxu0
    %v2355 = vadd.f32 %v2267, %v2354
    %v2356 = vpop.f32.mrb[0].mxu0
    %2357 = vdwg.mxu0
    %v2358 = vadd.f32 %v2091, %v2352
    %v2359 = vadd.f32 %v2092, %v2355
    %v2360 = vpack.c.bf16 %v2358, %v2358
    %v2361 = vpack.c.bf16 %v2359, %v2359
    %v2362 = vld [vmem:[#allocation23] sm:$0xf]
    %v2363 = vld [vmem:[#allocation23 + $0x4] sm:$0xf]
    %v2364 = vld [vmem:[#allocation23 + $0x8] sm:$0xf]
    %v2365 = vld [vmem:[#allocation23 + $0xc] sm:$0xf]
    %v2366 = vld [vmem:[#allocation23 + $0x10] sm:$0xf]
    %v2367 = vld [vmem:[#allocation23 + $0x14] sm:$0xf]
    %v2368 = vld [vmem:[#allocation23 + $0x18] sm:$0xf]
    %v2369 = vld [vmem:[#allocation23 + $0x1c] sm:$0xf]
    %v2370 = vld [vmem:[#allocation24] sm:$0x1]
    %v2372 = vlaneseq
    %v2373 = vshrl.u32 %v2372, 7
    %v2374 = vsub.s32 0, %v2373
    %v2375 = vrot.slane %v2370, %v2374
    %v2379 = vunpack.c.l.b16 %v2360
    %v2380 = vunpack.c.l.b16 %v2361
    %v2381 = vrot.slane %v2380, 7
    %vm2382 = vcmask 1041409
    %v2383 = vsel %vm2382, %v2381, %v2379
    %v2384 = vpack.c.b16 %v2383, %v2383
    %v2393 = vunpack.c.l.b16 %v2362
    %v2394 = vunpack.c.l.b16 %v2363
    %v2395 = vunpack.c.l.b16 %v2364
    %v2396 = vunpack.c.l.b16 %v2365
    %v2397 = vunpack.c.l.b16 %v2366
    %v2398 = vunpack.c.l.b16 %v2367
    %v2399 = vunpack.c.l.b16 %v2368
    %v2400 = vunpack.c.l.b16 %v2369
    %v2401 = vpack.c.b16 %v2394, %v2393
    %v2402 = vpack.c.b16 %v2396, %v2395
    %v2403 = vpack.c.b16 %v2398, %v2397
    %v2404 = vpack.c.b16 %v2400, %v2399
    %v2410 = vsel %vm277, %v2384, 0
    %2412 = vmatprep.subr.bf16.mxu0 0
    %2413 = vmatpush1.bf16.msra.mxu0 %v2401
    %2414 = vmatprep.subr.bf16.mxu0 0
    %2415 = vmatpush1.bf16.msra.mxu0 %v2402
    %2416 = vmatprep.subr.bf16.mxu0 0
    %2417 = vmatpush1.bf16.msra.mxu0 %v2403
    %2418 = vmatprep.subr.bf16.mxu0 0
    %2419 = vmatpush1.bf16.msra.mxu0 %v2404
    %2420 = vmatprep.subr.bf16.mxu0 0
    %2421 = vmatpush1.bf16.msra.mxu0 0
    %2422 = vmatprep.subr.bf16.mxu0 0
    %2423 = vmatpush1.bf16.msra.mxu0 0
    %2424 = vmatprep.subr.bf16.mxu0 0
    %2425 = vmatpush1.bf16.msra.mxu0 0
    %2426 = vmatprep.subr.bf16.mxu0 0
    %2427 = vmatpush1.bf16.msra.mxu0 0
    %2428 = vmatprep.subr.bf16.mxu0 0
    %2429 = vmatpush1.bf16.msra.mxu0 0
    %2430 = vmatprep.subr.bf16.mxu0 0
    %2431 = vmatpush1.bf16.msra.mxu0 0
    %2432 = vmatprep.subr.bf16.mxu0 0
    %2433 = vmatpush1.bf16.msra.mxu0 0
    %2434 = vmatprep.subr.bf16.mxu0 0
    %2435 = vmatpush1.bf16.msra.mxu0 0
    %2436 = vmatprep.subr.bf16.mxu0 0
    %2437 = vmatpush1.bf16.msra.mxu0 0
    %2438 = vmatprep.subr.bf16.mxu0 0
    %2439 = vmatpush1.bf16.msra.mxu0 0
    %2440 = vmatprep.subr.bf16.mxu0 0
    %2441 = vmatpush1.bf16.msra.mxu0 0
    %2442 = vmatprep.subr.bf16.mxu0 0
    %2443 = vmatpush1.bf16.msra.mxu0 0
    %2444 = vmatprep.mubr.bf16.mxu0 0
    %2445 = vmatmul.mubr.bf16.gmra.mrb[0].mxu0 %v2410
    %v2446 = vpop.f32.mrb[0].mxu0
    %v2447 = vadd.f32 %v2375, %v2446
    %v2448 = vpop.f32.mrb[0].mxu0
    %v2449 = vpop.f32.mrb[0].mxu0
    %v2450 = vpop.f32.mrb[0].mxu0
    %2451 = vdwg.mxu0
    %v2452 = vmul.f32 %v2447, %v2447
    %v2453 = vmul.f32 %v2447, %v2452
    %v2454 = vmul.f32 %v2453, 0.044715
    %v2455 = vadd.f32 %v2447, %v2454
    %v2456 = vmul.f32 %v2455, 0.7978846
    %v2457 = vtanh.pop %v2456
    %v2458 = vadd.f32 %v2457, 1.0
    %v2459 = vmul.f32 %v2458, 0.5
    %v2460 = vmul.f32 %v2447, %v2459
    %v2461 = vld [vmem:[%s20] sm:$0x1]
    %v2462 = vld [vmem:[%s21] sm:$0x1]
    %vm2463 = vcmask 517120
    %v2464 = vsel %vm2463, %v2460, 0.0
    %2465 = vadd.xlane.f32.xlu0 %v2464
    %v2466 = vpop.xlane.xlu0 %2465
    %v2467 = vmul.f32 %v2466, %v284
    %v2468 = vsub.f32 %v2460, %v2467
    %v2469 = vmul.f32 %v2468, %v2468
    %v2470 = vsel %vm2463, %v2469, 0.0
    %2471 = vadd.xlane.f32.xlu0 %v2470
    %v2472 = vpop.xlane.xlu0 %2471
    %v2473 = vmul.f32 %v2472, %v284
    %v2474 = vadd.f32 %v2473, 1e-05
    %v2475 = vrsqrt.pop %v2474
    %v2476 = vmul.f32 %v2468, %v2475
    %v2478 = vlaneseq
    %v2479 = vshrl.u32 %v2478, 7
    %v2480 = vsub.s32 0, %v2479
    %v2481 = vrot.slane %v2461, %v2480
    %v2483 = vmul.f32 %v2476, %v2481
    %v2485 = vlaneseq
    %v2486 = vshrl.u32 %v2485, 7
    %v2487 = vsub.s32 0, %v2486
    %v2488 = vrot.slane %v2462, %v2487
    %v2490 = vadd.f32 %v2483, %v2488
    %v2491 = vpack.c.bf16 %v2490, %v2490
    %v2492 = vld [vmem:[%s22] sm:$0xf]
    %v2493 = vld [vmem:[%s22 + $0x4] sm:$0xf]
    %v2494 = vld [vmem:[%s22 + $0x8] sm:$0xf]
    %v2495 = vld [vmem:[%s22 + $0xc] sm:$0xf]
    %v2496 = vld [vmem:[%s22 + $0x10] sm:$0xf]
    %v2497 = vld [vmem:[%s22 + $0x14] sm:$0xf]
    %v2498 = vld [vmem:[%s22 + $0x18] sm:$0xf]
    %v2499 = vld [vmem:[%s22 + $0x1c] sm:$0xf]
    %v2500 = vld [vmem:[%s23] sm:$0x1]
    %v2502 = vlaneseq
    %v2503 = vshrl.u32 %v2502, 7
    %v2504 = vsub.s32 0, %v2503
    %v2505 = vrot.slane %v2500, %v2504
    %v2515 = vunpack.c.l.b16 %v2492
    %v2516 = vunpack.c.l.b16 %v2493
    %v2517 = vunpack.c.l.b16 %v2494
    %v2518 = vunpack.c.l.b16 %v2495
    %v2519 = vunpack.c.l.b16 %v2496
    %v2520 = vunpack.c.l.b16 %v2497
    %v2521 = vunpack.c.l.b16 %v2498
    %v2522 = vunpack.c.l.b16 %v2499
    %v2523 = vpack.c.b16 %v2516, %v2515
    %v2524 = vpack.c.b16 %v2518, %v2517
    %v2525 = vpack.c.b16 %v2520, %v2519
    %v2526 = vpack.c.b16 %v2522, %v2521
    %v2532 = vsel %vm277, %v2491, 0
    %2534 = vmatprep.subr.bf16.mxu0 0
    %2535 = vmatpush1.bf16.msra.mxu0 %v2523
    %2536 = vmatprep.subr.bf16.mxu0 0
    %2537 = vmatpush1.bf16.msra.mxu0 %v2524
    %2538 = vmatprep.subr.bf16.mxu0 0
    %2539 = vmatpush1.bf16.msra.mxu0 %v2525
    %2540 = vmatprep.subr.bf16.mxu0 0
    %2541 = vmatpush1.bf16.msra.mxu0 %v2526
    %2542 = vmatprep.subr.bf16.mxu0 0
    %2543 = vmatpush1.bf16.msra.mxu0 0
    %2544 = vmatprep.subr.bf16.mxu0 0
    %2545 = vmatpush1.bf16.msra.mxu0 0
    %2546 = vmatprep.subr.bf16.mxu0 0
    %2547 = vmatpush1.bf16.msra.mxu0 0
    %2548 = vmatprep.subr.bf16.mxu0 0
    %2549 = vmatpush1.bf16.msra.mxu0 0
    %2550 = vmatprep.subr.bf16.mxu0 0
    %2551 = vmatpush1.bf16.msra.mxu0 0
    %2552 = vmatprep.subr.bf16.mxu0 0
    %2553 = vmatpush1.bf16.msra.mxu0 0
    %2554 = vmatprep.subr.bf16.mxu0 0
    %2555 = vmatpush1.bf16.msra.mxu0 0
    %2556 = vmatprep.subr.bf16.mxu0 0
    %2557 = vmatpush1.bf16.msra.mxu0 0
    %2558 = vmatprep.subr.bf16.mxu0 0
    %2559 = vmatpush1.bf16.msra.mxu0 0
    %2560 = vmatprep.subr.bf16.mxu0 0
    %2561 = vmatpush1.bf16.msra.mxu0 0
    %2562 = vmatprep.subr.bf16.mxu0 0
    %2563 = vmatpush1.bf16.msra.mxu0 0
    %2564 = vmatprep.subr.bf16.mxu0 0
    %2565 = vmatpush1.bf16.msra.mxu0 0
    %2566 = vmatprep.mubr.bf16.mxu0 0
    %2567 = vmatmul.mubr.bf16.gmra.mrb[0].mxu0 %v2532
    %v2568 = vpop.f32.mrb[0].mxu0
    %v2569 = vadd.f32 %v2505, %v2568
    %v2570 = vpop.f32.mrb[0].mxu0
    %v2571 = vpop.f32.mrb[0].mxu0
    %v2572 = vpop.f32.mrb[0].mxu0
    %2573 = vdwg.mxu0
    %v2574 = vpack.c.bf16 %v2569, %v2569
    %v2575 = vld [vmem:[%s24] sm:$0xf]
    %v2576 = vld [vmem:[%s24 + $0x4] sm:$0xf]
    %v2577 = vld [vmem:[%s24 + $0x8] sm:$0x1]
    %v2578 = vld [vmem:[#allocation2] sm:$0x1]
    %v2580 = vlaneseq
    %v2581 = vshrl.u32 %v2580, 7
    %v2582 = vsub.s32 0, %v2581
    %v2583 = vrot.slane %v2578, %v2582
    %v2588 = vunpack.c.l.b16 %v2575
    %v2589 = vunpack.c.l.b16 %v2576
    %v2590 = vunpack.c.l.b16 %v2577
    %v2591 = vpack.c.b16 %v2589, %v2588
    %v2592 = vpack.c.b16 %v2590, %v2590
    %vm2594 = vcmask 146432
    %v2596 = vsel %vm2594, %v2574, 0
    %vm2598 = vcmask 1040384
    %v2600 = vsel %vm2598, %v2592, 0
    %2602 = vmatprep.subr.bf16.mxu0 0
    %2603 = vmatpush1.bf16.msra.mxu0 %v2591
    %2604 = vmatprep.subr.bf16.mxu0 0
    %2605 = vmatpush1.bf16.msra.mxu0 %v2600
    %2606 = vmatprep.subr.bf16.mxu0 0
    %2607 = vmatpush1.bf16.msra.mxu0 0
    %2608 = vmatprep.subr.bf16.mxu0 0
    %2609 = vmatpush1.bf16.msra.mxu0 0
    %2610 = vmatprep.subr.bf16.mxu0 0
    %2611 = vmatpush1.bf16.msra.mxu0 0
    %2612 = vmatprep.subr.bf16.mxu0 0
    %2613 = vmatpush1.bf16.msra.mxu0 0
    %2614 = vmatprep.subr.bf16.mxu0 0
    %2615 = vmatpush1.bf16.msra.mxu0 0
    %2616 = vmatprep.subr.bf16.mxu0 0
    %2617 = vmatpush1.bf16.msra.mxu0 0
    %2618 = vmatprep.subr.bf16.mxu0 0
    %2619 = vmatpush1.bf16.msra.mxu0 0
    %2620 = vmatprep.subr.bf16.mxu0 0
    %2621 = vmatpush1.bf16.msra.mxu0 0
    %2622 = vmatprep.subr.bf16.mxu0 0
    %2623 = vmatpush1.bf16.msra.mxu0 0
    %2624 = vmatprep.subr.bf16.mxu0 0
    %2625 = vmatpush1.bf16.msra.mxu0 0
    %2626 = vmatprep.subr.bf16.mxu0 0
    %2627 = vmatpush1.bf16.msra.mxu0 0
    %2628 = vmatprep.subr.bf16.mxu0 0
    %2629 = vmatpush1.bf16.msra.mxu0 0
    %2630 = vmatprep.subr.bf16.mxu0 0
    %2631 = vmatpush1.bf16.msra.mxu0 0
    %2632 = vmatprep.subr.bf16.mxu0 0
    %2633 = vmatpush1.bf16.msra.mxu0 0
    %2634 = vmatprep.mubr.bf16.mxu0 0
    %2635 = vmatmul.mubr.bf16.gmra.mrb[0].mxu0 %v2596
    %v2636 = vpop.f32.mrb[0].mxu0
    %v2637 = vadd.f32 %v2583, %v2636
    %v2638 = vpop.f32.mrb[0].mxu0
    %v2639 = vpop.f32.mrb[0].mxu0
    %v2640 = vpop.f32.mrb[0].mxu0
    %2641 = vdwg.mxu0
    %vm2642 = vcmask 140288
    %2643 = vst.msk [vmem:[#allocation27] sm:$0x3] %vm2642, %v2569
    %vm2644 = vcmask 1024
    %2645 = vst.msk [vmem:[%s28] sm:$0x3] %vm2644, %v2637
    %v2646 = vsel %vm2642, %v2569, -inf
    %2647 = vmax.xlane.f32.xlu0 %v2646
    %v2648 = vpop.xlane.xlu0 %2647
    %v2649 = vsub.f32 %v2569, %v2648
    %v2650 = vmul.f32 %v2649, 1.442695
    %v2651 = vpow.pop %v2650
    %v2652 = vsel %vm2642, %v2651, 0.0
    %2653 = vadd.xlane.f32.xlu0 %v2652
    %v2654 = vpop.xlane.xlu0 %2653
    %v2655 = vlog2.pop %v2654
    %v2656 = vmul.f32 %v2655, 0.6931472
    %v2657 = vsub.f32 %v2649, %v2656
    %v2658 = vlaneseq
    %v2659 = vand.u32 %v2658, 127
    %v2660 = vld [vmem:[%s2] sm:$0x3]
    %2661 = vset.pattern.permute.xlu0 0
    %2662 = vperm.xlu0 %2661, %v2660
    %v2663 = vpop.permute.xlu0 %2662
    %vm2664 = vcmp.eq.s32.totalorder %v2659, %v2663
    %v2665 = vsel %vm2664, 1, 0
    %v2666 = vcvt.s32.f32 %v2665
    %v2667 = vmul.f32 %v2666, %v2657
    %v2668 = vsel %vm2642, %v2667, 0.0
    %2669 = vadd.xlane.f32.xlu0 %v2668
    %v2670 = vpop.xlane.xlu0 %2669
    %v2671 = vrot.slane %v2670, 4
    %v2672 = vadd.f32 %v2670, %v2671
    %v2673 = vrot.slane %v2672, 2
    %v2674 = vadd.f32 %v2672, %v2673
    %v2675 = vrot.slane %v2674, 1
    %v2676 = vadd.f32 %v2674, %v2675
    %s2677 = vtos %v2676
    %s2678 = ssub.f32 0.0, %s2677
    %s2679 = smul.f32 %s2678, 0.5
    %v2680 = vld [vmem:[%s3] sm:$0x3]
    %v2681 = vsub.f32 %v2637, %v2680
    %v2682 = vmul.f32 %v2681, %v2681
    %v2683 = vsel %vm2644, %v2682, 0.0
    %2684 = vadd.xlane.f32.xlu0 %v2683
    %v2685 = vpop.xlane.xlu0 %2684
    %v2686 = vrot.slane %v2685, 4
    %v2687 = vadd.f32 %v2685, %v2686
    %v2688 = vrot.slane %v2687, 2
    %v2689 = vadd.f32 %v2687, %v2688
    %v2690 = vrot.slane %v2689, 1
    %v2691 = vadd.f32 %v2689, %v2690
    %s2692 = vtos %v2691
    %s2693 = smul.f32 %s2692, 0.5
    %s2694 = smul.f32 %s2679, 0.5
    %s2695 = smul.f32 %s2693, 0.5
    %s2696 = sadd.f32 %s2694, %s2695
    %v2697 = vstv %s2696
    %vm2698 = vcmask 0
    %2699 = vst.msk [vmem:[#allocation26] sm:$0x1] %vm2698, %v2697
    // Predicated region
    $region162: #{tpu_custom_call.1} parent=1 // pred_check
      _
    $region163: #{tpu_custom_call.1} parent=1 // pred_check_branch
      %2701 = sbr.rel (0) target = $region165
    $region164: #{tpu_custom_call.1} parent=1 // pred_region
      %s2703 = ssub.s32 16, 16
      %2704 = vsyncadd [#allocation5], %s2703
      %s2706 = sshll.u32 [#allocation26], 4
      %s2707 = int_to_ptr.vmem [resolvable:$true] %s2706
      %2709 = dma.vmem_to_hbm [thread:$0]  %s2707, 16, %s26, [#allocation5]
    $region165: #{tpu_custom_call.1} parent=1 // pred_fallthru
      _
    // Predicated region
    $region166: #{tpu_custom_call.1} parent=1 // pred_check
      _
    $region167: #{tpu_custom_call.1} parent=1 // pred_check_branch
      %2711 = sbr.rel (0) target = $region169
    $region168: #{tpu_custom_call.1} parent=1 // pred_region
      %s2713 = ssub.s32 32, 32
      %2714 = vsyncadd [#allocation28], %s2713
      %s2716 = sshll.u32 [#allocation27], 4
      %s2717 = int_to_ptr.vmem [resolvable:$true] %s2716
      %2719 = dma.vmem_to_hbm [thread:$0]  %s2717, 32, %s27, [#allocation28]
    $region169: #{tpu_custom_call.1} parent=1 // pred_fallthru
      _
    // Predicated region
    $region170: #{tpu_custom_call.1} parent=1 // pred_check
      _
    $region171: #{tpu_custom_call.1} parent=1 // pred_check_branch
      %2721 = sbr.rel (0) target = $region173
    $region172: #{tpu_custom_call.1} parent=1 // pred_region
      _
    $region173: #{tpu_custom_call.1} parent=1 // pred_fallthru
      _
    // Predicated region
    $region174: #{tpu_custom_call.1} parent=1 // pred_check
      _
    $region175: #{tpu_custom_call.1} parent=1 // pred_check_branch
      %2723 = sbr.rel (0) target = $region177
    $region176: #{tpu_custom_call.1} parent=1 // pred_region
      %2724 = dma.done [#allocation5], 16
    $region177: #{tpu_custom_call.1} parent=1 // pred_fallthru
      _
    // Predicated region
    $region178: #{tpu_custom_call.1} parent=1 // pred_check
      _
    $region179: #{tpu_custom_call.1} parent=1 // pred_check_branch
      %2726 = sbr.rel (0) target = $region181
    $region180: #{tpu_custom_call.1} parent=1 // pred_region
      %2727 = dma.done [#allocation28], 32
    $region181: #{tpu_custom_call.1} parent=1 // pred_fallthru
      _
    // Predicated region
    $region182: #{tpu_custom_call.1} parent=1 // pred_check
      _
    $region183: #{tpu_custom_call.1} parent=1 // pred_check_branch
      %2729 = sbr.rel (0) target = $region185
    $region184: #{tpu_custom_call.1} parent=1 // pred_region
      _
    $region185: #{tpu_custom_call.1} parent=1 // pred_fallthru
      _
    %2730 = vsyncpa [#allocation4], 1
    %2731 = vsyncpa [#allocation7], 1
    %2732 = vsyncpa [#allocation10], 1
    %2733 = vsyncpa [#allocation13], 1
    %2734 = vsyncpa [#allocation16], 1
    %2735 = vsyncpa [#allocation19], 1
    %2736 = vsyncpa [#allocation22], 1
    %2737 = vsyncpa [#allocation25], 1
    %2738 = vsyncpa [#allocation5], 1
    %2739 = vsyncpa [#allocation28], 1

</llo_original>
